<compile_context>
chip_gen: v7x
topology: tpu7x:2x2x1
jax: 0.10.0
libtpu: 0.0.40
codegen_flags: <defaults>
</compile_context>

<pallas_src>
import functools
import math

import jax
import jax.numpy as jnp
from jax.experimental import pallas as pl
from jax.experimental.pallas import tpu as pltpu

# ----------------------------- configuration -------------------------------
B = 2               # batch
SEQ_Q = 8           # query sequence length
SEQ_KV = 16         # key/value sequence length
EMBED = 64          # embed_size
NUM_HEADS = 4       # embed_size % num_heads == 0
HEAD_DIM = EMBED // NUM_HEADS
NUM_EXPERTS = 4     # MoE experts
K_TOP = 4           # MoE default k
HIDDEN = 4 * EMBED  # FeedForward hidden dim
LN_EPS = 1e-5
MOE_LOSS_COEF = 0.01

# TODO(synk): general top-k gating for k < num_experts is not implemented in the
# fused kernel; with k == num_experts the reference topk+softmax+scatter reduces
# exactly to a softmax over all experts (used below).
assert K_TOP == NUM_EXPERTS


def _gelu_tanh(x):
    # TODO(synk): PyTorch nn.GELU() default is exact erf-GELU; tanh approximation
    # is used for guaranteed Mosaic lowering (max rel. diff ~1e-3).
    return 0.5 * x * (1.0 + jnp.tanh(0.7978845608028654 * (x + 0.044715 * x * x * x)))


def _layer_norm(x, g, b):
    m = jnp.mean(x, axis=-1, keepdims=True)
    v = jnp.mean((x - m) * (x - m), axis=-1, keepdims=True)
    return (x - m) * jax.lax.rsqrt(v + LN_EPS) * g + b


def cv_squared(x):
    # torch.var() default is unbiased (ddof=1); reference returns 0 when
    # x.shape[0]==1 (num_experts > 1 here so that branch never triggers).
    x = x.astype(jnp.float32)
    return jnp.var(x, ddof=1) / (jnp.mean(x) ** 2 + 1e-10)


# -------------------------- fused block kernel ------------------------------
def _cross_attention_block_kernel(
    q_in_ref, kv_in_ref,                        # activations (one batch element)
    wq_ref, wkv_ref, bkv_ref,                   # folded+scaled Q / concatenated K,V
    woa_ref,                                    # folded out_proj ∘ adapt
    w1g_ref, b1g_ref,                           # [expert W1 | w_gate] fused matmul
    w2_ref, b2_ref,                             # stacked expert layer-2 weights / biases
    vecs_ref,                                   # packed [bq, boa, g1, be1, g2, be2]
    out_ref, gates_ref,
    *, num_heads, head_dim, num_experts, hidden):
    query = q_in_ref[0]                          # [Sq, D] f32
    key_value = kv_in_ref[0]                     # [Sk, D] f32
    D = num_heads * head_dim

    vecs = vecs_ref[...]                         # [6, D] single VMEM tile
    bq, boa, g1, be1, g2, be2 = (vecs[i:i + 1, :] for i in range(6))

    # --- fused projections (scale already folded into wq/bq) -----------------
    q = jnp.dot(query, wq_ref[...], preferred_element_type=jnp.float32) + bq
    kv = jnp.dot(key_value, wkv_ref[...], preferred_element_type=jnp.float32) + bkv_ref[...]
    k = kv[:, :D]
    v = kv[:, D:]

    # --- multi-head attention; out_proj∘adapt folded into per-head row blocks
    # of woa so no head concatenation is needed.
    woa = woa_ref[...]
    adapted = jnp.zeros_like(query)
    for h in range(num_heads):                   # num_heads is a small constant
        sl = slice(h * head_dim, (h + 1) * head_dim)
        s = jax.lax.dot_general(q[:, sl], k[:, sl], (((1,), (1,)), ((), ())),
                                preferred_element_type=jnp.float32)        # [Sq, Sk]
        p = jnp.exp(s - jnp.max(s, axis=-1, keepdims=True))
        p = p * pl.reciprocal(jnp.sum(p, axis=-1, keepdims=True), approx=True)
        o_h = jnp.dot(p, v[:, sl], preferred_element_type=jnp.float32)     # [Sq, Dh]
        adapted = adapted + jnp.dot(o_h, woa[sl, :],
                                    preferred_element_type=jnp.float32)    # [Sq, D]
    adapted = adapted + boa

    # --- residual + first LayerNorm ------------------------------------------
    x1 = _layer_norm(adapted + query, g1, be1)                             # [Sq, D]

    # --- one wide lane-dense matmul: all expert first layers + gate logits ----
    big = jnp.dot(x1, w1g_ref[...], preferred_element_type=jnp.float32) + b1g_ref[...]
    hcat = _gelu_tanh(big[:, :num_experts * hidden])                       # [Sq, E*4D]
    logits = big[:, num_experts * hidden:]                                 # [Sq, E]

    # MoE gating (eval: no noise; k == num_experts -> plain softmax, identical
    # to the reference topk(k)+softmax+scatter path).
    ge = jnp.exp(logits - jnp.max(logits, axis=-1, keepdims=True))
    gates = ge / jnp.sum(ge, axis=-1, keepdims=True)                       # [Sq, E]

    # --- expert layer 2 + gate-weighted dense combine (== SparseDispatcher.combine)
    y = jnp.dot(gates, b2_ref[...], preferred_element_type=jnp.float32)    # gated biases
    for e in range(num_experts):
        he = hcat[:, e * hidden:(e + 1) * hidden]
        y = y + gates[:, e:e + 1] * jnp.dot(he, w2_ref[e],
                                            preferred_element_type=jnp.float32)

    out_ref[0] = _layer_norm(y + x1, g2, be2).astype(out_ref.dtype)
    gates_ref[0] = gates.astype(gates_ref.dtype)


# ------------------------------ wrapper (glue) ------------------------------
def cross_attention_block(params, query, key_value):
    """Eval-mode CrossAttentionBlock.forward -> (out [B,Sq,D], aux_loss scalar)."""
    Bn, Sq, D = query.shape
    Sk = key_value.shape[1]
    p = params

    # --- fold back-to-back DxD linears (eval-mode algebra, precomputed in glue)
    def fold(a, b):  # (x@Wa+ba)@Wb+bb == x@(Wa@Wb) + (ba@Wb + bb)
        return a['w'] @ b['w'], a['b'] @ b['w'] + b['b']

    scale = 1.0 / math.sqrt(D // NUM_HEADS)
    wq, bq = fold(p['query_linear'], p['mha']['q'])
    wq, bq = wq * scale, bq * scale                   # fold attention scale
    wk, bk = fold(p['key_linear'], p['mha']['k'])
    wv, bv = fold(p['value_linear'], p['mha']['v'])
    wkv = jnp.concatenate([wk, wv], axis=1)           # [D, 2D]
    bkv = jnp.concatenate([bk, bv], axis=0)           # [2D]
    woa, boa = fold(p['mha']['o'], p['adapt'])        # out_proj ∘ adapt

    # --- stack MoE expert weights; append gate columns last (lane-aligned slices)
    ex = p['project']['experts']
    E = NUM_EXPERTS
    w1g = jnp.concatenate([e['lin1']['w'] for e in ex] + [p['project']['w_gate']],
                          axis=1)                                            # [D, E*4D + E]
    b1g = jnp.concatenate([e['lin1']['b'] for e in ex]
                          + [jnp.zeros((E,), jnp.float32)], axis=0)          # [E*4D + E]
    w2 = jnp.stack([e['lin2']['w'] for e in ex], axis=0)                     # [E, 4D, D]
    b2 = jnp.stack([e['lin2']['b'] for e in ex], axis=0)                     # [E, D]

    # --- pack the six D-wide vectors into a single (8,128)-tile input
    vecs = jnp.stack([bq, boa,
                      p['first_norm']['g'], p['first_norm']['b'],
                      p['norm']['g'], p['norm']['b']], axis=0)               # [6, D]

    kernel = functools.partial(
        _cross_attention_block_kernel,
        num_heads=NUM_HEADS, head_dim=D // NUM_HEADS,
        num_experts=E, hidden=HIDDEN)

    const2 = lambda b: (0, 0)
    const3 = lambda b: (0, 0, 0)

    out, gates = pl.pallas_call(
        kernel,
        grid=(Bn,),
        out_shape=(jax.ShapeDtypeStruct((Bn, Sq, D), query.dtype),
                   jax.ShapeDtypeStruct((Bn, Sq, E), jnp.float32)),
        in_specs=[
            pl.BlockSpec((1, Sq, D), lambda b: (b, 0, 0)),    # query
            pl.BlockSpec((1, Sk, D), lambda b: (b, 0, 0)),    # key_value
            pl.BlockSpec(wq.shape, const2),                   # folded+scaled Wq
            pl.BlockSpec(wkv.shape, const2),                  # folded [Wk|Wv]
            pl.BlockSpec((1, 2 * D), const2),                 # folded [bk|bv]
            pl.BlockSpec(woa.shape, const2),                  # folded Wo@Wadapt
            pl.BlockSpec(w1g.shape, const2),                  # [expert W1 | w_gate]
            pl.BlockSpec((1, w1g.shape[1]), const2),          # [expert b1 | 0]
            pl.BlockSpec(w2.shape, const3),                   # expert W2 (stacked)
            pl.BlockSpec(b2.shape, const2),                   # expert b2 (stacked)
            pl.BlockSpec(vecs.shape, const2),                 # packed bias/LN vectors
        ],
        out_specs=(pl.BlockSpec((1, Sq, D), lambda b: (b, 0, 0)),
                   pl.BlockSpec((1, Sq, E), lambda b: (b, 0, 0))),
        compiler_params=pltpu.CompilerParams(
            dimension_semantics=("parallel",)),               # 2-TC sharding on v7x
    )(query, key_value,
      wq, wkv, bkv.reshape(1, -1), woa,
      w1g, b1g.reshape(1, -1), w2, b2, vecs)

    # --- MoE aux loss (reference flattens [B,S,D] -> [B*S,D] for the MoE) ------
    g2 = gates.reshape(Bn * Sq, E)
    importance = g2.sum(0)
    load = (g2 > 0).sum(0).astype(jnp.float32)                # _gates_to_load (eval)
    aux = (cv_squared(importance) + cv_squared(load)) * MOE_LOSS_COEF
    return out, aux


# ------------------------- pure-JAX reference (check) ------------------------
def reference_forward(p, query, key_value):
    Bn, Sq, D = query.shape
    Sk = key_value.shape[1]
    Dh = D // NUM_HEADS
    lin = lambda x, q: x @ q['w'] + q['b']
    Q = lin(query, p['query_linear'])
    K = lin(key_value, p['key_linear'])
    V = lin(key_value, p['value_linear'])
    q = lin(Q, p['mha']['q']); k = lin(K, p['mha']['k']); v = lin(V, p['mha']['v'])
    split = lambda x, S: x.reshape(Bn, S, NUM_HEADS, Dh).transpose(0, 2, 1, 3)
    qh, kh, vh = split(q, Sq), split(k, Sk), split(v, Sk)
    s = jnp.einsum('bhqd,bhkd->bhqk', qh, kh) / math.sqrt(Dh)
    attn = jnp.einsum('bhqk,bhkd->bhqd', jax.nn.softmax(s, -1), vh)
    attn = attn.transpose(0, 2, 1, 3).reshape(Bn, Sq, D)
    attn = lin(lin(attn, p['mha']['o']), p['adapt'])
    x1 = _layer_norm(attn + query, p['first_norm']['g'], p['first_norm']['b'])
    x2 = x1.reshape(-1, D)
    gates = jax.nn.softmax(x2 @ p['project']['w_gate'], axis=-1)   # k == num_experts
    y = jnp.zeros_like(x2)
    for e in range(NUM_EXPERTS):
        exp = p['project']['experts'][e]
        h = _gelu_tanh(x2 @ exp['lin1']['w'] + exp['lin1']['b'])
        y = y + gates[:, e:e + 1] * (h @ exp['lin2']['w'] + exp['lin2']['b'])
    importance = gates.sum(0)
    load = (gates > 0).sum(0).astype(jnp.float32)
    aux = (cv_squared(importance) + cv_squared(load)) * MOE_LOSS_COEF
    out = _layer_norm(y.reshape(Bn, Sq, D) + x1, p['norm']['g'], p['norm']['b'])
    return out, aux


# ------------------------------ parameter init ------------------------------
class _KeyGen:
    def __init__(self, key):
        self.key = key
        self.i = 0

    def __call__(self):
        self.i += 1
        return jax.random.fold_in(self.key, self.i)


def init_params(key):
    kg = _KeyGen(key)

    def lin(din, dout, scale=0.02):
        return {'w': scale * jax.random.normal(kg(), (din, dout), jnp.float32),
                'b': scale * jax.random.normal(kg(), (dout,), jnp.float32)}

    def ln(d):
        return {'g': jnp.ones((d,), jnp.float32), 'b': jnp.zeros((d,), jnp.float32)}

    D = EMBED
    return {
        'query_linear': lin(D, D),
        'key_linear': lin(D, D),
        'value_linear': lin(D, D),
        'mha': {'q': lin(D, D), 'k': lin(D, D), 'v': lin(D, D), 'o': lin(D, D)},
        'adapt': lin(D, D),
        'project': {
            # w_gate / w_noise zero-initialised exactly as in the module
            'w_gate': jnp.zeros((D, NUM_EXPERTS), jnp.float32),
            'w_noise': jnp.zeros((D, NUM_EXPERTS), jnp.float32),
            'experts': [{'lin1': lin(D, HIDDEN), 'lin2': lin(HIDDEN, D)}
                        for _ in range(NUM_EXPERTS)],
        },
        'first_norm': ln(D),
        'norm': ln(D),
    }


# ----------------------------------- main -----------------------------------
if __name__ == "__main__":
    root = jax.random.PRNGKey(0)
    k_param, k_q, k_kv = jax.random.split(root, 3)

    params = init_params(k_param)
    query = jax.random.normal(k_q, (B, SEQ_Q, EMBED), jnp.float32)
    key_value = jax.random.normal(k_kv, (B, SEQ_KV, EMBED), jnp.float32)

    fwd = jax.jit(cross_attention_block)
    out, aux = fwd(params, query, key_value)
    jax.block_until_ready(out)
    jax.block_until_ready(aux)

    assert out.shape == (B, SEQ_Q, EMBED)
    assert bool(jnp.all(jnp.isfinite(out)))

    ref_out, ref_aux = reference_forward(params, query, key_value)
    assert bool(jnp.allclose(out, ref_out, atol=1e-2, rtol=1e-2)), \
        float(jnp.max(jnp.abs(out - ref_out)))
    assert bool(jnp.allclose(aux, ref_aux, atol=1e-5, rtol=1e-4))

    print("KERNEL_OK")
</pallas_src>

<mosaic_0001>
module attributes {stable_mosaic.version = 11 : i64} {
  func.func @_cross_attention_block_kernel(%arg0: i32, %arg1: memref<1x8x64xf32, #tpu.memory_space<vmem>>, %arg2: memref<1x16x64xf32, #tpu.memory_space<vmem>>, %arg3: memref<64x64xf32, #tpu.memory_space<vmem>>, %arg4: memref<64x128xf32, #tpu.memory_space<vmem>>, %arg5: memref<1x128xf32, #tpu.memory_space<vmem>>, %arg6: memref<64x64xf32, #tpu.memory_space<vmem>>, %arg7: memref<64x1028xf32, #tpu.memory_space<vmem>>, %arg8: memref<1x1028xf32, #tpu.memory_space<vmem>>, %arg9: memref<4x256x64xf32, #tpu.memory_space<vmem>>, %arg10: memref<4x64xf32, #tpu.memory_space<vmem>>, %arg11: memref<6x64xf32, #tpu.memory_space<vmem>>, %arg12: memref<1x8x64xf32, #tpu.memory_space<vmem>>, %arg13: memref<1x8x4xf32, #tpu.memory_space<vmem>>) attributes {dimension_semantics = [#tpu.dimension_semantics<parallel>], iteration_bounds = array<i64: 2>, scalar_prefetch = 0 : i64, scratch_operands = 0 : i64, tpu.core_type = #tpu.core_type<tc>, window_params = [{transform_indices = @transform_0, window_bounds = array<i64: 1, 8, 64>}, {transform_indices = @transform_1, window_bounds = array<i64: 1, 16, 64>}, {pipeline_mode = #tpu.pipeline_mode<synchronous>, transform_indices = @transform_2, window_bounds = array<i64: 64, 64>}, {pipeline_mode = #tpu.pipeline_mode<synchronous>, transform_indices = @transform_3, window_bounds = array<i64: 64, 128>}, {pipeline_mode = #tpu.pipeline_mode<synchronous>, transform_indices = @transform_4, window_bounds = array<i64: 1, 128>}, {pipeline_mode = #tpu.pipeline_mode<synchronous>, transform_indices = @transform_5, window_bounds = array<i64: 64, 64>}, {pipeline_mode = #tpu.pipeline_mode<synchronous>, transform_indices = @transform_6, window_bounds = array<i64: 64, 1028>}, {pipeline_mode = #tpu.pipeline_mode<synchronous>, transform_indices = @transform_7, window_bounds = array<i64: 1, 1028>}, {pipeline_mode = #tpu.pipeline_mode<synchronous>, transform_indices = @transform_8, window_bounds = array<i64: 4, 256, 64>}, {pipeline_mode = #tpu.pipeline_mode<synchronous>, transform_indices = @transform_9, window_bounds = array<i64: 4, 64>}, {pipeline_mode = #tpu.pipeline_mode<synchronous>, transform_indices = @transform_10, window_bounds = array<i64: 6, 64>}, {transform_indices = @transform_11, window_bounds = array<i64: 1, 8, 64>}, {transform_indices = @transform_12, window_bounds = array<i64: 1, 8, 4>}]} {
    %c0 = arith.constant 0 : index
    %c0_0 = arith.constant 0 : index
    %c0_1 = arith.constant 0 : index
    %0 = vector.load %arg1[%c0, %c0_0, %c0_1] : memref<1x8x64xf32, #tpu.memory_space<vmem>>, vector<1x8x64xf32>
    %1 = vector.shape_cast %0 : vector<1x8x64xf32> to vector<8x64xf32>
    %c0_2 = arith.constant 0 : index
    %c0_3 = arith.constant 0 : index
    %c0_4 = arith.constant 0 : index
    %2 = vector.load %arg2[%c0_2, %c0_3, %c0_4] : memref<1x16x64xf32, #tpu.memory_space<vmem>>, vector<1x16x64xf32>
    %3 = vector.shape_cast %2 : vector<1x16x64xf32> to vector<16x64xf32>
    %c0_5 = arith.constant 0 : index
    %c0_6 = arith.constant 0 : index
    %4 = vector.load %arg11[%c0_5, %c0_6] : memref<6x64xf32, #tpu.memory_space<vmem>>, vector<6x64xf32>
    %5 = vector.extract_strided_slice %4 {offsets = [0, 0], sizes = [1, 64], strides = [1, 1]} : vector<6x64xf32> to vector<1x64xf32>
    %6 = vector.extract_strided_slice %4 {offsets = [1, 0], sizes = [1, 64], strides = [1, 1]} : vector<6x64xf32> to vector<1x64xf32>
    %7 = vector.extract_strided_slice %4 {offsets = [2, 0], sizes = [1, 64], strides = [1, 1]} : vector<6x64xf32> to vector<1x64xf32>
    %8 = vector.extract_strided_slice %4 {offsets = [3, 0], sizes = [1, 64], strides = [1, 1]} : vector<6x64xf32> to vector<1x64xf32>
    %9 = vector.extract_strided_slice %4 {offsets = [4, 0], sizes = [1, 64], strides = [1, 1]} : vector<6x64xf32> to vector<1x64xf32>
    %10 = vector.extract_strided_slice %4 {offsets = [5, 0], sizes = [1, 64], strides = [1, 1]} : vector<6x64xf32> to vector<1x64xf32>
    %c0_7 = arith.constant 0 : index
    %c0_8 = arith.constant 0 : index
    %11 = vector.load %arg3[%c0_7, %c0_8] : memref<64x64xf32, #tpu.memory_space<vmem>>, vector<64x64xf32>
    %cst = arith.constant dense<0.000000e+00> : vector<8x64xf32>
    %12 = tpu.matmul %1, %11, %cst {dimension_numbers = #tpu.dot_dimension_numbers<[1], [0], [0], [1], [0, 0, 1, 1], [], []>} : vector<8x64xf32>, vector<64x64xf32>, vector<8x64xf32> -> vector<8x64xf32>
    %13 = vector.broadcast %5 : vector<1x64xf32> to vector<8x64xf32>
    %14 = arith.addf %12, %13 : vector<8x64xf32>
    %c0_9 = arith.constant 0 : index
    %c0_10 = arith.constant 0 : index
    %15 = vector.load %arg4[%c0_9, %c0_10] : memref<64x128xf32, #tpu.memory_space<vmem>>, vector<64x128xf32>
    %cst_11 = arith.constant dense<0.000000e+00> : vector<16x128xf32>
    %16 = tpu.matmul %3, %15, %cst_11 {dimension_numbers = #tpu.dot_dimension_numbers<[1], [0], [0], [1], [0, 0, 1, 1], [], []>} : vector<16x64xf32>, vector<64x128xf32>, vector<16x128xf32> -> vector<16x128xf32>
    %c0_12 = arith.constant 0 : index
    %c0_13 = arith.constant 0 : index
    %17 = vector.load %arg5[%c0_12, %c0_13] : memref<1x128xf32, #tpu.memory_space<vmem>>, vector<1x128xf32>
    %18 = vector.broadcast %17 : vector<1x128xf32> to vector<16x128xf32>
    %19 = arith.addf %16, %18 : vector<16x128xf32>
    %20 = vector.extract_strided_slice %19 {offsets = [0, 0], sizes = [16, 64], strides = [1, 1]} : vector<16x128xf32> to vector<16x64xf32>
    %21 = vector.extract_strided_slice %19 {offsets = [0, 64], sizes = [16, 64], strides = [1, 1]} : vector<16x128xf32> to vector<16x64xf32>
    %c0_14 = arith.constant 0 : index
    %c0_15 = arith.constant 0 : index
    %22 = vector.load %arg6[%c0_14, %c0_15] : memref<64x64xf32, #tpu.memory_space<vmem>>, vector<64x64xf32>
    %cst_16 = arith.constant 0.000000e+00 : f32
    %23 = vector.broadcast %cst_16 : f32 to vector<8x64xf32>
    %24 = vector.extract_strided_slice %14 {offsets = [0, 0], sizes = [8, 16], strides = [1, 1]} : vector<8x64xf32> to vector<8x16xf32>
    %25 = vector.extract_strided_slice %20 {offsets = [0, 0], sizes = [16, 16], strides = [1, 1]} : vector<16x64xf32> to vector<16x16xf32>
    %cst_17 = arith.constant dense<0.000000e+00> : vector<8x16xf32>
    %26 = tpu.matmul %24, %25, %cst_17 {dimension_numbers = #tpu.dot_dimension_numbers<[1], [1], [0], [0], [0, 0, 1, 0], [], []>} : vector<8x16xf32>, vector<16x16xf32>, vector<8x16xf32> -> vector<8x16xf32>
    %cst_18 = arith.constant dense<0xFF800000> : vector<8xf32>
    %27 = vector.multi_reduction <maximumf>, %26, %cst_18 [1] : vector<8x16xf32> to vector<8xf32>
    %28 = vector.shape_cast %27 : vector<8xf32> to vector<8x1xf32>
    %29 = vector.broadcast %28 : vector<8x1xf32> to vector<8x16xf32>
    %30 = arith.subf %26, %29 : vector<8x16xf32>
    %31 = math.exp %30 : vector<8x16xf32>
    %cst_19 = arith.constant dense<0.000000e+00> : vector<8xf32>
    %32 = vector.multi_reduction <add>, %31, %cst_19 [1] : vector<8x16xf32> to vector<8xf32>
    %33 = vector.shape_cast %32 : vector<8xf32> to vector<8x1xf32>
    %34 = tpu.reciprocal %33 {approx = true} : vector<8x1xf32> -> vector<8x1xf32>
    %35 = vector.broadcast %34 : vector<8x1xf32> to vector<8x16xf32>
    %36 = arith.mulf %31, %35 : vector<8x16xf32>
    %37 = vector.extract_strided_slice %21 {offsets = [0, 0], sizes = [16, 16], strides = [1, 1]} : vector<16x64xf32> to vector<16x16xf32>
    %cst_20 = arith.constant dense<0.000000e+00> : vector<8x16xf32>
    %38 = tpu.matmul %36, %37, %cst_20 {dimension_numbers = #tpu.dot_dimension_numbers<[1], [0], [0], [1], [0, 0, 1, 1], [], []>} : vector<8x16xf32>, vector<16x16xf32>, vector<8x16xf32> -> vector<8x16xf32>
    %39 = vector.extract_strided_slice %22 {offsets = [0, 0], sizes = [16, 64], strides = [1, 1]} : vector<64x64xf32> to vector<16x64xf32>
    %cst_21 = arith.constant dense<0.000000e+00> : vector<8x64xf32>
    %40 = tpu.matmul %38, %39, %cst_21 {dimension_numbers = #tpu.dot_dimension_numbers<[1], [0], [0], [1], [0, 0, 1, 1], [], []>} : vector<8x16xf32>, vector<16x64xf32>, vector<8x64xf32> -> vector<8x64xf32>
    %41 = arith.addf %23, %40 : vector<8x64xf32>
    %42 = vector.extract_strided_slice %14 {offsets = [0, 16], sizes = [8, 16], strides = [1, 1]} : vector<8x64xf32> to vector<8x16xf32>
    %43 = vector.extract_strided_slice %20 {offsets = [0, 16], sizes = [16, 16], strides = [1, 1]} : vector<16x64xf32> to vector<16x16xf32>
    %cst_22 = arith.constant dense<0.000000e+00> : vector<8x16xf32>
    %44 = tpu.matmul %42, %43, %cst_22 {dimension_numbers = #tpu.dot_dimension_numbers<[1], [1], [0], [0], [0, 0, 1, 0], [], []>} : vector<8x16xf32>, vector<16x16xf32>, vector<8x16xf32> -> vector<8x16xf32>
    %cst_23 = arith.constant dense<0xFF800000> : vector<8xf32>
    %45 = vector.multi_reduction <maximumf>, %44, %cst_23 [1] : vector<8x16xf32> to vector<8xf32>
    %46 = vector.shape_cast %45 : vector<8xf32> to vector<8x1xf32>
    %47 = vector.broadcast %46 : vector<8x1xf32> to vector<8x16xf32>
    %48 = arith.subf %44, %47 : vector<8x16xf32>
    %49 = math.exp %48 : vector<8x16xf32>
    %cst_24 = arith.constant dense<0.000000e+00> : vector<8xf32>
    %50 = vector.multi_reduction <add>, %49, %cst_24 [1] : vector<8x16xf32> to vector<8xf32>
    %51 = vector.shape_cast %50 : vector<8xf32> to vector<8x1xf32>
    %52 = tpu.reciprocal %51 {approx = true} : vector<8x1xf32> -> vector<8x1xf32>
    %53 = vector.broadcast %52 : vector<8x1xf32> to vector<8x16xf32>
    %54 = arith.mulf %49, %53 : vector<8x16xf32>
    %55 = vector.extract_strided_slice %21 {offsets = [0, 16], sizes = [16, 16], strides = [1, 1]} : vector<16x64xf32> to vector<16x16xf32>
    %cst_25 = arith.constant dense<0.000000e+00> : vector<8x16xf32>
    %56 = tpu.matmul %54, %55, %cst_25 {dimension_numbers = #tpu.dot_dimension_numbers<[1], [0], [0], [1], [0, 0, 1, 1], [], []>} : vector<8x16xf32>, vector<16x16xf32>, vector<8x16xf32> -> vector<8x16xf32>
    %57 = vector.extract_strided_slice %22 {offsets = [16, 0], sizes = [16, 64], strides = [1, 1]} : vector<64x64xf32> to vector<16x64xf32>
    %cst_26 = arith.constant dense<0.000000e+00> : vector<8x64xf32>
    %58 = tpu.matmul %56, %57, %cst_26 {dimension_numbers = #tpu.dot_dimension_numbers<[1], [0], [0], [1], [0, 0, 1, 1], [], []>} : vector<8x16xf32>, vector<16x64xf32>, vector<8x64xf32> -> vector<8x64xf32>
    %59 = arith.addf %41, %58 : vector<8x64xf32>
    %60 = vector.extract_strided_slice %14 {offsets = [0, 32], sizes = [8, 16], strides = [1, 1]} : vector<8x64xf32> to vector<8x16xf32>
    %61 = vector.extract_strided_slice %20 {offsets = [0, 32], sizes = [16, 16], strides = [1, 1]} : vector<16x64xf32> to vector<16x16xf32>
    %cst_27 = arith.constant dense<0.000000e+00> : vector<8x16xf32>
    %62 = tpu.matmul %60, %61, %cst_27 {dimension_numbers = #tpu.dot_dimension_numbers<[1], [1], [0], [0], [0, 0, 1, 0], [], []>} : vector<8x16xf32>, vector<16x16xf32>, vector<8x16xf32> -> vector<8x16xf32>
    %cst_28 = arith.constant dense<0xFF800000> : vector<8xf32>
    %63 = vector.multi_reduction <maximumf>, %62, %cst_28 [1] : vector<8x16xf32> to vector<8xf32>
    %64 = vector.shape_cast %63 : vector<8xf32> to vector<8x1xf32>
    %65 = vector.broadcast %64 : vector<8x1xf32> to vector<8x16xf32>
    %66 = arith.subf %62, %65 : vector<8x16xf32>
    %67 = math.exp %66 : vector<8x16xf32>
    %cst_29 = arith.constant dense<0.000000e+00> : vector<8xf32>
    %68 = vector.multi_reduction <add>, %67, %cst_29 [1] : vector<8x16xf32> to vector<8xf32>
    %69 = vector.shape_cast %68 : vector<8xf32> to vector<8x1xf32>
    %70 = tpu.reciprocal %69 {approx = true} : vector<8x1xf32> -> vector<8x1xf32>
    %71 = vector.broadcast %70 : vector<8x1xf32> to vector<8x16xf32>
    %72 = arith.mulf %67, %71 : vector<8x16xf32>
    %73 = vector.extract_strided_slice %21 {offsets = [0, 32], sizes = [16, 16], strides = [1, 1]} : vector<16x64xf32> to vector<16x16xf32>
    %cst_30 = arith.constant dense<0.000000e+00> : vector<8x16xf32>
    %74 = tpu.matmul %72, %73, %cst_30 {dimension_numbers = #tpu.dot_dimension_numbers<[1], [0], [0], [1], [0, 0, 1, 1], [], []>} : vector<8x16xf32>, vector<16x16xf32>, vector<8x16xf32> -> vector<8x16xf32>
    %75 = vector.extract_strided_slice %22 {offsets = [32, 0], sizes = [16, 64], strides = [1, 1]} : vector<64x64xf32> to vector<16x64xf32>
    %cst_31 = arith.constant dense<0.000000e+00> : vector<8x64xf32>
    %76 = tpu.matmul %74, %75, %cst_31 {dimension_numbers = #tpu.dot_dimension_numbers<[1], [0], [0], [1], [0, 0, 1, 1], [], []>} : vector<8x16xf32>, vector<16x64xf32>, vector<8x64xf32> -> vector<8x64xf32>
    %77 = arith.addf %59, %76 : vector<8x64xf32>
    %78 = vector.extract_strided_slice %14 {offsets = [0, 48], sizes = [8, 16], strides = [1, 1]} : vector<8x64xf32> to vector<8x16xf32>
    %79 = vector.extract_strided_slice %20 {offsets = [0, 48], sizes = [16, 16], strides = [1, 1]} : vector<16x64xf32> to vector<16x16xf32>
    %cst_32 = arith.constant dense<0.000000e+00> : vector<8x16xf32>
    %80 = tpu.matmul %78, %79, %cst_32 {dimension_numbers = #tpu.dot_dimension_numbers<[1], [1], [0], [0], [0, 0, 1, 0], [], []>} : vector<8x16xf32>, vector<16x16xf32>, vector<8x16xf32> -> vector<8x16xf32>
    %cst_33 = arith.constant dense<0xFF800000> : vector<8xf32>
    %81 = vector.multi_reduction <maximumf>, %80, %cst_33 [1] : vector<8x16xf32> to vector<8xf32>
    %82 = vector.shape_cast %81 : vector<8xf32> to vector<8x1xf32>
    %83 = vector.broadcast %82 : vector<8x1xf32> to vector<8x16xf32>
    %84 = arith.subf %80, %83 : vector<8x16xf32>
    %85 = math.exp %84 : vector<8x16xf32>
    %cst_34 = arith.constant dense<0.000000e+00> : vector<8xf32>
    %86 = vector.multi_reduction <add>, %85, %cst_34 [1] : vector<8x16xf32> to vector<8xf32>
    %87 = vector.shape_cast %86 : vector<8xf32> to vector<8x1xf32>
    %88 = tpu.reciprocal %87 {approx = true} : vector<8x1xf32> -> vector<8x1xf32>
    %89 = vector.broadcast %88 : vector<8x1xf32> to vector<8x16xf32>
    %90 = arith.mulf %85, %89 : vector<8x16xf32>
    %91 = vector.extract_strided_slice %21 {offsets = [0, 48], sizes = [16, 16], strides = [1, 1]} : vector<16x64xf32> to vector<16x16xf32>
    %cst_35 = arith.constant dense<0.000000e+00> : vector<8x16xf32>
    %92 = tpu.matmul %90, %91, %cst_35 {dimension_numbers = #tpu.dot_dimension_numbers<[1], [0], [0], [1], [0, 0, 1, 1], [], []>} : vector<8x16xf32>, vector<16x16xf32>, vector<8x16xf32> -> vector<8x16xf32>
    %93 = vector.extract_strided_slice %22 {offsets = [48, 0], sizes = [16, 64], strides = [1, 1]} : vector<64x64xf32> to vector<16x64xf32>
    %cst_36 = arith.constant dense<0.000000e+00> : vector<8x64xf32>
    %94 = tpu.matmul %92, %93, %cst_36 {dimension_numbers = #tpu.dot_dimension_numbers<[1], [0], [0], [1], [0, 0, 1, 1], [], []>} : vector<8x16xf32>, vector<16x64xf32>, vector<8x64xf32> -> vector<8x64xf32>
    %95 = arith.addf %77, %94 : vector<8x64xf32>
    %96 = vector.broadcast %6 : vector<1x64xf32> to vector<8x64xf32>
    %97 = arith.addf %95, %96 : vector<8x64xf32>
    %98 = arith.addf %97, %1 : vector<8x64xf32>
    %cst_37 = arith.constant dense<0.000000e+00> : vector<8xf32>
    %99 = vector.multi_reduction <add>, %98, %cst_37 [1] : vector<8x64xf32> to vector<8xf32>
    %100 = vector.shape_cast %99 : vector<8xf32> to vector<8x1xf32>
    %cst_38 = arith.constant 6.400000e+01 : f32
    %101 = vector.broadcast %cst_38 : f32 to vector<8x1xf32>
    %102 = arith.divf %100, %101 : vector<8x1xf32>
    %103 = vector.broadcast %102 : vector<8x1xf32> to vector<8x64xf32>
    %104 = arith.subf %98, %103 : vector<8x64xf32>
    %105 = vector.broadcast %102 : vector<8x1xf32> to vector<8x64xf32>
    %106 = arith.subf %98, %105 : vector<8x64xf32>
    %107 = arith.mulf %104, %106 : vector<8x64xf32>
    %cst_39 = arith.constant dense<0.000000e+00> : vector<8xf32>
    %108 = vector.multi_reduction <add>, %107, %cst_39 [1] : vector<8x64xf32> to vector<8xf32>
    %109 = vector.shape_cast %108 : vector<8xf32> to vector<8x1xf32>
    %cst_40 = arith.constant 6.400000e+01 : f32
    %110 = vector.broadcast %cst_40 : f32 to vector<8x1xf32>
    %111 = arith.divf %109, %110 : vector<8x1xf32>
    %112 = vector.broadcast %102 : vector<8x1xf32> to vector<8x64xf32>
    %113 = arith.subf %98, %112 : vector<8x64xf32>
    %cst_41 = arith.constant 9.99999974E-6 : f32
    %114 = vector.broadcast %cst_41 : f32 to vector<8x1xf32>
    %115 = arith.addf %111, %114 : vector<8x1xf32>
    %116 = math.rsqrt %115 : vector<8x1xf32>
    %117 = vector.broadcast %116 : vector<8x1xf32> to vector<8x64xf32>
    %118 = arith.mulf %113, %117 : vector<8x64xf32>
    %119 = vector.broadcast %7 : vector<1x64xf32> to vector<8x64xf32>
    %120 = arith.mulf %118, %119 : vector<8x64xf32>
    %121 = vector.broadcast %8 : vector<1x64xf32> to vector<8x64xf32>
    %122 = arith.addf %120, %121 : vector<8x64xf32>
    %c0_42 = arith.constant 0 : index
    %c0_43 = arith.constant 0 : index
    %123 = vector.load %arg7[%c0_42, %c0_43] : memref<64x1028xf32, #tpu.memory_space<vmem>>, vector<64x1028xf32>
    %cst_44 = arith.constant dense<0.000000e+00> : vector<8x1028xf32>
    %124 = tpu.matmul %122, %123, %cst_44 {dimension_numbers = #tpu.dot_dimension_numbers<[1], [0], [0], [1], [0, 0, 1, 1], [], []>} : vector<8x64xf32>, vector<64x1028xf32>, vector<8x1028xf32> -> vector<8x1028xf32>
    %c0_45 = arith.constant 0 : index
    %c0_46 = arith.constant 0 : index
    %125 = vector.load %arg8[%c0_45, %c0_46] : memref<1x1028xf32, #tpu.memory_space<vmem>>, vector<1x1028xf32>
    %126 = vector.broadcast %125 : vector<1x1028xf32> to vector<8x1028xf32>
    %127 = arith.addf %124, %126 : vector<8x1028xf32>
    %128 = vector.extract_strided_slice %127 {offsets = [0, 0], sizes = [8, 1024], strides = [1, 1]} : vector<8x1028xf32> to vector<8x1024xf32>
    %cst_47 = arith.constant 5.000000e-01 : f32
    %129 = vector.broadcast %cst_47 : f32 to vector<8x1024xf32>
    %130 = arith.mulf %129, %128 : vector<8x1024xf32>
    %cst_48 = arith.constant 4.471500e-02 : f32
    %131 = vector.broadcast %cst_48 : f32 to vector<8x1024xf32>
    %132 = arith.mulf %131, %128 : vector<8x1024xf32>
    %133 = arith.mulf %132, %128 : vector<8x1024xf32>
    %134 = arith.mulf %133, %128 : vector<8x1024xf32>
    %135 = arith.addf %128, %134 : vector<8x1024xf32>
    %cst_49 = arith.constant 0.797884583 : f32
    %136 = vector.broadcast %cst_49 : f32 to vector<8x1024xf32>
    %137 = arith.mulf %136, %135 : vector<8x1024xf32>
    %138 = math.tanh %137 : vector<8x1024xf32>
    %cst_50 = arith.constant 1.000000e+00 : f32
    %139 = vector.broadcast %cst_50 : f32 to vector<8x1024xf32>
    %140 = arith.addf %139, %138 : vector<8x1024xf32>
    %141 = arith.mulf %130, %140 : vector<8x1024xf32>
    %142 = vector.extract_strided_slice %127 {offsets = [0, 1024], sizes = [8, 4], strides = [1, 1]} : vector<8x1028xf32> to vector<8x4xf32>
    %cst_51 = arith.constant dense<0xFF800000> : vector<8xf32>
    %143 = vector.multi_reduction <maximumf>, %142, %cst_51 [1] : vector<8x4xf32> to vector<8xf32>
    %144 = vector.shape_cast %143 : vector<8xf32> to vector<8x1xf32>
    %145 = vector.broadcast %144 : vector<8x1xf32> to vector<8x4xf32>
    %146 = arith.subf %142, %145 : vector<8x4xf32>
    %147 = math.exp %146 : vector<8x4xf32>
    %cst_52 = arith.constant dense<0.000000e+00> : vector<8xf32>
    %148 = vector.multi_reduction <add>, %147, %cst_52 [1] : vector<8x4xf32> to vector<8xf32>
    %149 = vector.shape_cast %148 : vector<8xf32> to vector<8x1xf32>
    %150 = vector.broadcast %149 : vector<8x1xf32> to vector<8x4xf32>
    %151 = arith.divf %147, %150 : vector<8x4xf32>
    %c0_53 = arith.constant 0 : index
    %c0_54 = arith.constant 0 : index
    %152 = vector.load %arg10[%c0_53, %c0_54] : memref<4x64xf32, #tpu.memory_space<vmem>>, vector<4x64xf32>
    %cst_55 = arith.constant dense<0.000000e+00> : vector<8x64xf32>
    %153 = tpu.matmul %151, %152, %cst_55 {dimension_numbers = #tpu.dot_dimension_numbers<[1], [0], [0], [1], [0, 0, 1, 1], [], []>} : vector<8x4xf32>, vector<4x64xf32>, vector<8x64xf32> -> vector<8x64xf32>
    %154 = vector.extract_strided_slice %141 {offsets = [0, 0], sizes = [8, 256], strides = [1, 1]} : vector<8x1024xf32> to vector<8x256xf32>
    %155 = vector.extract_strided_slice %151 {offsets = [0, 0], sizes = [8, 1], strides = [1, 1]} : vector<8x4xf32> to vector<8x1xf32>
    %c0_56 = arith.constant 0 : index
    %c0_57 = arith.constant 0 : index
    %c0_58 = arith.constant 0 : index
    %156 = vector.load %arg9[%c0_56, %c0_57, %c0_58] : memref<4x256x64xf32, #tpu.memory_space<vmem>>, vector<1x256x64xf32>
    %157 = vector.shape_cast %156 : vector<1x256x64xf32> to vector<256x64xf32>
    %cst_59 = arith.constant dense<0.000000e+00> : vector<8x64xf32>
    %158 = tpu.matmul %154, %157, %cst_59 {dimension_numbers = #tpu.dot_dimension_numbers<[1], [0], [0], [1], [0, 0, 1, 1], [], []>} : vector<8x256xf32>, vector<256x64xf32>, vector<8x64xf32> -> vector<8x64xf32>
    %159 = vector.broadcast %155 : vector<8x1xf32> to vector<8x64xf32>
    %160 = arith.mulf %159, %158 : vector<8x64xf32>
    %161 = arith.addf %153, %160 : vector<8x64xf32>
    %162 = vector.extract_strided_slice %141 {offsets = [0, 256], sizes = [8, 256], strides = [1, 1]} : vector<8x1024xf32> to vector<8x256xf32>
    %163 = vector.extract_strided_slice %151 {offsets = [0, 1], sizes = [8, 1], strides = [1, 1]} : vector<8x4xf32> to vector<8x1xf32>
    %c1 = arith.constant 1 : index
    %c0_60 = arith.constant 0 : index
    %c0_61 = arith.constant 0 : index
    %164 = vector.load %arg9[%c1, %c0_60, %c0_61] : memref<4x256x64xf32, #tpu.memory_space<vmem>>, vector<1x256x64xf32>
    %165 = vector.shape_cast %164 : vector<1x256x64xf32> to vector<256x64xf32>
    %cst_62 = arith.constant dense<0.000000e+00> : vector<8x64xf32>
    %166 = tpu.matmul %162, %165, %cst_62 {dimension_numbers = #tpu.dot_dimension_numbers<[1], [0], [0], [1], [0, 0, 1, 1], [], []>} : vector<8x256xf32>, vector<256x64xf32>, vector<8x64xf32> -> vector<8x64xf32>
    %167 = vector.broadcast %163 : vector<8x1xf32> to vector<8x64xf32>
    %168 = arith.mulf %167, %166 : vector<8x64xf32>
    %169 = arith.addf %161, %168 : vector<8x64xf32>
    %170 = vector.extract_strided_slice %141 {offsets = [0, 512], sizes = [8, 256], strides = [1, 1]} : vector<8x1024xf32> to vector<8x256xf32>
    %171 = vector.extract_strided_slice %151 {offsets = [0, 2], sizes = [8, 1], strides = [1, 1]} : vector<8x4xf32> to vector<8x1xf32>
    %c2 = arith.constant 2 : index
    %c0_63 = arith.constant 0 : index
    %c0_64 = arith.constant 0 : index
    %172 = vector.load %arg9[%c2, %c0_63, %c0_64] : memref<4x256x64xf32, #tpu.memory_space<vmem>>, vector<1x256x64xf32>
    %173 = vector.shape_cast %172 : vector<1x256x64xf32> to vector<256x64xf32>
    %cst_65 = arith.constant dense<0.000000e+00> : vector<8x64xf32>
    %174 = tpu.matmul %170, %173, %cst_65 {dimension_numbers = #tpu.dot_dimension_numbers<[1], [0], [0], [1], [0, 0, 1, 1], [], []>} : vector<8x256xf32>, vector<256x64xf32>, vector<8x64xf32> -> vector<8x64xf32>
    %175 = vector.broadcast %171 : vector<8x1xf32> to vector<8x64xf32>
    %176 = arith.mulf %175, %174 : vector<8x64xf32>
    %177 = arith.addf %169, %176 : vector<8x64xf32>
    %178 = vector.extract_strided_slice %141 {offsets = [0, 768], sizes = [8, 256], strides = [1, 1]} : vector<8x1024xf32> to vector<8x256xf32>
    %179 = vector.extract_strided_slice %151 {offsets = [0, 3], sizes = [8, 1], strides = [1, 1]} : vector<8x4xf32> to vector<8x1xf32>
    %c3 = arith.constant 3 : index
    %c0_66 = arith.constant 0 : index
    %c0_67 = arith.constant 0 : index
    %180 = vector.load %arg9[%c3, %c0_66, %c0_67] : memref<4x256x64xf32, #tpu.memory_space<vmem>>, vector<1x256x64xf32>
    %181 = vector.shape_cast %180 : vector<1x256x64xf32> to vector<256x64xf32>
    %cst_68 = arith.constant dense<0.000000e+00> : vector<8x64xf32>
    %182 = tpu.matmul %178, %181, %cst_68 {dimension_numbers = #tpu.dot_dimension_numbers<[1], [0], [0], [1], [0, 0, 1, 1], [], []>} : vector<8x256xf32>, vector<256x64xf32>, vector<8x64xf32> -> vector<8x64xf32>
    %183 = vector.broadcast %179 : vector<8x1xf32> to vector<8x64xf32>
    %184 = arith.mulf %183, %182 : vector<8x64xf32>
    %185 = arith.addf %177, %184 : vector<8x64xf32>
    %186 = arith.addf %185, %122 : vector<8x64xf32>
    %cst_69 = arith.constant dense<0.000000e+00> : vector<8xf32>
    %187 = vector.multi_reduction <add>, %186, %cst_69 [1] : vector<8x64xf32> to vector<8xf32>
    %188 = vector.shape_cast %187 : vector<8xf32> to vector<8x1xf32>
    %cst_70 = arith.constant 6.400000e+01 : f32
    %189 = vector.broadcast %cst_70 : f32 to vector<8x1xf32>
    %190 = arith.divf %188, %189 : vector<8x1xf32>
    %191 = vector.broadcast %190 : vector<8x1xf32> to vector<8x64xf32>
    %192 = arith.subf %186, %191 : vector<8x64xf32>
    %193 = vector.broadcast %190 : vector<8x1xf32> to vector<8x64xf32>
    %194 = arith.subf %186, %193 : vector<8x64xf32>
    %195 = arith.mulf %192, %194 : vector<8x64xf32>
    %cst_71 = arith.constant dense<0.000000e+00> : vector<8xf32>
    %196 = vector.multi_reduction <add>, %195, %cst_71 [1] : vector<8x64xf32> to vector<8xf32>
    %197 = vector.shape_cast %196 : vector<8xf32> to vector<8x1xf32>
    %cst_72 = arith.constant 6.400000e+01 : f32
    %198 = vector.broadcast %cst_72 : f32 to vector<8x1xf32>
    %199 = arith.divf %197, %198 : vector<8x1xf32>
    %200 = vector.broadcast %190 : vector<8x1xf32> to vector<8x64xf32>
    %201 = arith.subf %186, %200 : vector<8x64xf32>
    %cst_73 = arith.constant 9.99999974E-6 : f32
    %202 = vector.broadcast %cst_73 : f32 to vector<8x1xf32>
    %203 = arith.addf %199, %202 : vector<8x1xf32>
    %204 = math.rsqrt %203 : vector<8x1xf32>
    %205 = vector.broadcast %204 : vector<8x1xf32> to vector<8x64xf32>
    %206 = arith.mulf %201, %205 : vector<8x64xf32>
    %207 = vector.broadcast %9 : vector<1x64xf32> to vector<8x64xf32>
    %208 = arith.mulf %206, %207 : vector<8x64xf32>
    %209 = vector.broadcast %10 : vector<1x64xf32> to vector<8x64xf32>
    %210 = arith.addf %208, %209 : vector<8x64xf32>
    %c0_74 = arith.constant 0 : index
    %c0_75 = arith.constant 0 : index
    %c0_76 = arith.constant 0 : index
    %211 = vector.load %arg12[%c0_74, %c0_75, %c0_76] : memref<1x8x64xf32, #tpu.memory_space<vmem>>, vector<1x8x64xf32>
    %212 = vector.shape_cast %211 : vector<1x8x64xf32> to vector<8x64xf32>
    %213 = vector.shape_cast %210 : vector<8x64xf32> to vector<1x8x64xf32>
    tpu.vector_store %arg12[%c0_74, %c0_75, %c0_76], %213 {strides = array<i32>} : memref<1x8x64xf32, #tpu.memory_space<vmem>>, vector<1x8x64xf32>,
    %c0_77 = arith.constant 0 : index
    %c0_78 = arith.constant 0 : index
    %c0_79 = arith.constant 0 : index
    %214 = vector.load %arg13[%c0_77, %c0_78, %c0_79] : memref<1x8x4xf32, #tpu.memory_space<vmem>>, vector<1x8x4xf32>
    %215 = vector.shape_cast %214 : vector<1x8x4xf32> to vector<8x4xf32>
    %216 = vector.shape_cast %151 : vector<8x4xf32> to vector<1x8x4xf32>
    tpu.vector_store %arg13[%c0_77, %c0_78, %c0_79], %216 {strides = array<i32>} : memref<1x8x4xf32, #tpu.memory_space<vmem>>, vector<1x8x4xf32>,
    return
  }
  func.func @transform_0(%arg0: i32) -> (i32, i32, i32) {
    %c0_i32 = arith.constant 0 : i32
    %c0_i32_0 = arith.constant 0 : i32
    %c0_i32_1 = arith.constant 0 : i32
    return %arg0, %c0_i32, %c0_i32_0 : i32, i32, i32
  }
  func.func @transform_1(%arg0: i32) -> (i32, i32, i32) {
    %c0_i32 = arith.constant 0 : i32
    %c0_i32_0 = arith.constant 0 : i32
    %c0_i32_1 = arith.constant 0 : i32
    return %arg0, %c0_i32, %c0_i32_0 : i32, i32, i32
  }
  func.func @transform_2(%arg0: i32) -> (i32, i32) {
    %c0_i32 = arith.constant 0 : i32
    %c0_i32_0 = arith.constant 0 : i32
    %c0_i32_1 = arith.constant 0 : i32
    return %c0_i32, %c0_i32_0 : i32, i32
  }
  func.func @transform_3(%arg0: i32) -> (i32, i32) {
    %c0_i32 = arith.constant 0 : i32
    %c0_i32_0 = arith.constant 0 : i32
    %c0_i32_1 = arith.constant 0 : i32
    return %c0_i32, %c0_i32_0 : i32, i32
  }
  func.func @transform_4(%arg0: i32) -> (i32, i32) {
    %c0_i32 = arith.constant 0 : i32
    %c0_i32_0 = arith.constant 0 : i32
    %c0_i32_1 = arith.constant 0 : i32
    return %c0_i32, %c0_i32_0 : i32, i32
  }
  func.func @transform_5(%arg0: i32) -> (i32, i32) {
    %c0_i32 = arith.constant 0 : i32
    %c0_i32_0 = arith.constant 0 : i32
    %c0_i32_1 = arith.constant 0 : i32
    return %c0_i32, %c0_i32_0 : i32, i32
  }
  func.func @transform_6(%arg0: i32) -> (i32, i32) {
    %c0_i32 = arith.constant 0 : i32
    %c0_i32_0 = arith.constant 0 : i32
    %c0_i32_1 = arith.constant 0 : i32
    return %c0_i32, %c0_i32_0 : i32, i32
  }
  func.func @transform_7(%arg0: i32) -> (i32, i32) {
    %c0_i32 = arith.constant 0 : i32
    %c0_i32_0 = arith.constant 0 : i32
    %c0_i32_1 = arith.constant 0 : i32
    return %c0_i32, %c0_i32_0 : i32, i32
  }
  func.func @transform_8(%arg0: i32) -> (i32, i32, i32) {
    %c0_i32 = arith.constant 0 : i32
    %c0_i32_0 = arith.constant 0 : i32
    %c0_i32_1 = arith.constant 0 : i32
    %c0_i32_2 = arith.constant 0 : i32
    return %c0_i32, %c0_i32_0, %c0_i32_1 : i32, i32, i32
  }
  func.func @transform_9(%arg0: i32) -> (i32, i32) {
    %c0_i32 = arith.constant 0 : i32
    %c0_i32_0 = arith.constant 0 : i32
    %c0_i32_1 = arith.constant 0 : i32
    return %c0_i32, %c0_i32_0 : i32, i32
  }
  func.func @transform_10(%arg0: i32) -> (i32, i32) {
    %c0_i32 = arith.constant 0 : i32
    %c0_i32_0 = arith.constant 0 : i32
    %c0_i32_1 = arith.constant 0 : i32
    return %c0_i32, %c0_i32_0 : i32, i32
  }
  func.func @transform_11(%arg0: i32) -> (i32, i32, i32) {
    %c0_i32 = arith.constant 0 : i32
    %c0_i32_0 = arith.constant 0 : i32
    %c0_i32_1 = arith.constant 0 : i32
    return %arg0, %c0_i32, %c0_i32_0 : i32, i32, i32
  }
  func.func @transform_12(%arg0: i32) -> (i32, i32, i32) {
    %c0_i32 = arith.constant 0 : i32
    %c0_i32_0 = arith.constant 0 : i32
    %c0_i32_1 = arith.constant 0 : i32
    return %arg0, %c0_i32, %c0_i32_0 : i32, i32, i32
  }
}

</mosaic_0001>

<llo_original>
// kernel: custom-call
$region0: #{custom-call}
  %s0 = inlined_call_operand.vmem [shape: f32[1028], index: 0, kind: output, shape index: {}]

// kernel: cross_attention_block.1
$region0: #{cross_attention_block.1}
  #allocation0 [shape = 'u32[]', space=smem, size = 0x4, offset = 0x4, fixed_abs, tag = 'smem constant byte address 0x4 - core index']
  #allocation1 [shape = 'u32[144,128]{1,0:T(1,128)}', space=vmem, size = 0x12000, scoped, tag = 'internal scratch']
  %s0 = inlined_call_operand.vmem [shape: f32[2,8,64], index: 0, kind: input, shape index: {}]
  %s1 = inlined_call_operand.vmem [shape: f32[2,16,64], index: 1, kind: input, shape index: {}]
  %s2 = inlined_call_operand.vmem [shape: f32[64,64], index: 2, kind: input, shape index: {}]
  %s3 = inlined_call_operand.vmem [shape: f32[64,128], index: 3, kind: input, shape index: {}]
  %s4 = inlined_call_operand.vmem [shape: f32[1,128], index: 4, kind: input, shape index: {}]
  %s5 = inlined_call_operand.vmem [shape: f32[64,64], index: 5, kind: input, shape index: {}]
  %s6 = inlined_call_operand.vmem [shape: f32[64,1028], index: 6, kind: input, shape index: {}]
  %s7 = inlined_call_operand.vmem [shape: f32[1,1028], index: 7, kind: input, shape index: {}]
  %s8 = inlined_call_operand.vmem [shape: f32[4,256,64], index: 8, kind: input, shape index: {}]
  %s9 = inlined_call_operand.vmem [shape: f32[4,64], index: 9, kind: input, shape index: {}]
  %s10 = inlined_call_operand.vmem [shape: f32[6,64], index: 10, kind: input, shape index: {}]
  %s11 = inlined_call_operand.hbm [shape: f32[2,8,64], index: 11, kind: output, shape index: {0}]
  %s12 = inlined_call_operand.vmem [shape: f32[2,8,4], index: 12, kind: output, shape index: {1}]
  %13 = xla_tuple %s11, %s12
  %s14 = sld [smem:[#allocation0]]
  $region85: #{cross_attention_block.1} parent=0
    _
  %s16 = ssub.s32 1, %s14
  %s17 = scalar_select 0, %s16, %s14
  $region1: #{cross_attention_block.1} parent=0
    #allocation2 [shape = 'u8[8192]{0}', space=vmem, size = 0x2000, scoped, tag = 'output window, operand 0']
    #allocation3 [shape = 's32[2]{0}', space=sflag, size = 0x8, scoped, tag = 'scoped memory for cross_attention_block.1']
    %18 = vsyncpa [#allocation3], 0
    %s19 = scalar_lea.sflag [#allocation3], 1
    %20 = vsyncpa %s19, 0
    loop: start=0, step=1, limit=4
    $region2: #{cross_attention_block.1} parent=1 // loop_pre_header
      _
    $region3: #{cross_attention_block.1} parent=1 // loop_header
      %s22 = sphi 0, %s26
      %p23 = scmp.ge.s32.totalorder %s22, 4
      %s32 = sphi 0, %s34
      %s35 = sphi 0, %s32
      %s36 = sphi 0, %s35
      %s52 = sphi 0, %s36
      %s58 = sphi 0, %s60
      %s61 = sphi 0, %s58
      %s62 = sphi 0, %s61
      %s78 = sphi 0, %s62
      %s82 = sphi 0, %s82
      %s84 = sphi 0, %s82
      %s85 = sphi 0, %s84
      %s99 = sphi 0, %s85
      %s103 = sphi 0, %s103
      %s105 = sphi 0, %s103
      %s106 = sphi 0, %s105
      %s120 = sphi 0, %s106
      %s124 = sphi 0, %s124
      %s126 = sphi 0, %s124
      %s127 = sphi 0, %s126
      %s141 = sphi 0, %s127
      %s145 = sphi 0, %s145
      %s147 = sphi 0, %s145
      %s148 = sphi 0, %s147
      %s162 = sphi 0, %s148
      %s166 = sphi 0, %s166
      %s168 = sphi 0, %s166
      %s169 = sphi 0, %s168
      %s183 = sphi 0, %s169
      %s187 = sphi 0, %s187
      %s189 = sphi 0, %s187
      %s190 = sphi 0, %s189
      %s204 = sphi 0, %s190
      %s208 = sphi 0, %s208
      %s210 = sphi 0, %s208
      %s211 = sphi 0, %s210
      %s225 = sphi 0, %s211
      %s229 = sphi 0, %s229
      %s231 = sphi 0, %s229
      %s232 = sphi 0, %s231
      %s246 = sphi 0, %s232
      %s250 = sphi 0, %s250
      %s252 = sphi 0, %s250
      %s253 = sphi 0, %s252
      %s267 = sphi 0, %s253
      %s273 = sphi 0, %s275
      %s276 = sphi 0, %s273
      %s277 = sphi 0, %s276
      %s293 = sphi 0, %s277
      %s299 = sphi 0, %s301
      %s302 = sphi 0, %s299
      %s303 = sphi 0, %s302
      %s319 = sphi 0, %s303
    $region4: #{cross_attention_block.1} parent=1 // loop_header_branch
      %25 = sbr.rel (%p23) target = $region8
    $region5: #{cross_attention_block.1} parent=1 // loop_body
      %s27 = ssub.s32 %s22, 1
      %s28 = ssub.s32 %s22, 2
      %s29 = sadd.s32 %s22, 1
      %s30 = ssub.s32 %s22, %s29
      %p31 = scmp.eq.s32.totalorder %s30, 0
      %s33 = sadd.s32 %s32, 1
      %s34 = scalar_select %p31, %s32, %s33
      %p37 = pneg %p31
      %p38 = scmp.eq.s32.totalorder %s22, 1
      %p39 = por %p37, %p38
      %p40 = scmp.ne.s32.totalorder %s32, %s35
      %p41 = scmp.eq.s32.totalorder %s22, 0
      %p42 = por %p40, %p41
      %p43 = scmp.ne.s32.totalorder %s32, %s35
      %p44 = scmp.eq.s32.totalorder %s27, 1
      %p45 = por %p43, %p44
      %p46 = scmp.ne.s32.totalorder %s35, %s36
      %p47 = scmp.eq.s32.totalorder %s27, 0
      %p48 = por %p46, %p47
      %p49 = scmp.ne.s32.totalorder %s35, %s36
      %p50 = scmp.eq.s32.totalorder %s28, 1
      %p51 = por %p49, %p50
      %p53 = scmp.ne.s32.totalorder %s36, %s52
      %p54 = scmp.eq.s32.totalorder %s28, 0
      %p55 = por %p53, %p54
      %s56 = ssub.s32 %s22, %s29
      %p57 = scmp.eq.s32.totalorder %s56, 0
      %s59 = sadd.s32 %s58, 1
      %s60 = scalar_select %p57, %s58, %s59
      %p63 = pneg %p57
      %p64 = scmp.eq.s32.totalorder %s22, 1
      %p65 = por %p63, %p64
      %p66 = scmp.ne.s32.totalorder %s58, %s61
      %p67 = scmp.eq.s32.totalorder %s22, 0
      %p68 = por %p66, %p67
      %p69 = scmp.ne.s32.totalorder %s58, %s61
      %p70 = scmp.eq.s32.totalorder %s27, 1
      %p71 = por %p69, %p70
      %p72 = scmp.ne.s32.totalorder %s61, %s62
      %p73 = scmp.eq.s32.totalorder %s27, 0
      %p74 = por %p72, %p73
      %p75 = scmp.ne.s32.totalorder %s61, %s62
      %p76 = scmp.eq.s32.totalorder %s28, 1
      %p77 = por %p75, %p76
      %p79 = scmp.ne.s32.totalorder %s62, %s78
      %p80 = scmp.eq.s32.totalorder %s28, 0
      %p81 = por %p79, %p80
      %s83 = sadd.s32 %s82, 1
      %p86 = scmp.eq.s32.totalorder %s22, 1
      %p87 = scmp.ne.s32.totalorder %s82, %s84
      %p88 = scmp.eq.s32.totalorder %s22, 0
      %p89 = por %p87, %p88
      %p90 = scmp.ne.s32.totalorder %s82, %s84
      %p91 = scmp.eq.s32.totalorder %s27, 1
      %p92 = por %p90, %p91
      %p93 = scmp.ne.s32.totalorder %s84, %s85
      %p94 = scmp.eq.s32.totalorder %s27, 0
      %p95 = por %p93, %p94
      %p96 = scmp.ne.s32.totalorder %s84, %s85
      %p97 = scmp.eq.s32.totalorder %s28, 1
      %p98 = por %p96, %p97
      %p100 = scmp.ne.s32.totalorder %s85, %s99
      %p101 = scmp.eq.s32.totalorder %s28, 0
      %p102 = por %p100, %p101
      %s104 = sadd.s32 %s103, 1
      %p107 = scmp.eq.s32.totalorder %s22, 1
      %p108 = scmp.ne.s32.totalorder %s103, %s105
      %p109 = scmp.eq.s32.totalorder %s22, 0
      %p110 = por %p108, %p109
      %p111 = scmp.ne.s32.totalorder %s103, %s105
      %p112 = scmp.eq.s32.totalorder %s27, 1
      %p113 = por %p111, %p112
      %p114 = scmp.ne.s32.totalorder %s105, %s106
      %p115 = scmp.eq.s32.totalorder %s27, 0
      %p116 = por %p114, %p115
      %p117 = scmp.ne.s32.totalorder %s105, %s106
      %p118 = scmp.eq.s32.totalorder %s28, 1
      %p119 = por %p117, %p118
      %p121 = scmp.ne.s32.totalorder %s106, %s120
      %p122 = scmp.eq.s32.totalorder %s28, 0
      %p123 = por %p121, %p122
      %s125 = sadd.s32 %s124, 1
      %p128 = scmp.eq.s32.totalorder %s22, 1
      %p129 = scmp.ne.s32.totalorder %s124, %s126
      %p130 = scmp.eq.s32.totalorder %s22, 0
      %p131 = por %p129, %p130
      %p132 = scmp.ne.s32.totalorder %s124, %s126
      %p133 = scmp.eq.s32.totalorder %s27, 1
      %p134 = por %p132, %p133
      %p135 = scmp.ne.s32.totalorder %s126, %s127
      %p136 = scmp.eq.s32.totalorder %s27, 0
      %p137 = por %p135, %p136
      %p138 = scmp.ne.s32.totalorder %s126, %s127
      %p139 = scmp.eq.s32.totalorder %s28, 1
      %p140 = por %p138, %p139
      %p142 = scmp.ne.s32.totalorder %s127, %s141
      %p143 = scmp.eq.s32.totalorder %s28, 0
      %p144 = por %p142, %p143
      %s146 = sadd.s32 %s145, 1
      %p149 = scmp.eq.s32.totalorder %s22, 1
      %p150 = scmp.ne.s32.totalorder %s145, %s147
      %p151 = scmp.eq.s32.totalorder %s22, 0
      %p152 = por %p150, %p151
      %p153 = scmp.ne.s32.totalorder %s145, %s147
      %p154 = scmp.eq.s32.totalorder %s27, 1
      %p155 = por %p153, %p154
      %p156 = scmp.ne.s32.totalorder %s147, %s148
      %p157 = scmp.eq.s32.totalorder %s27, 0
      %p158 = por %p156, %p157
      %p159 = scmp.ne.s32.totalorder %s147, %s148
      %p160 = scmp.eq.s32.totalorder %s28, 1
      %p161 = por %p159, %p160
      %p163 = scmp.ne.s32.totalorder %s148, %s162
      %p164 = scmp.eq.s32.totalorder %s28, 0
      %p165 = por %p163, %p164
      %s167 = sadd.s32 %s166, 1
      %p170 = scmp.eq.s32.totalorder %s22, 1
      %p171 = scmp.ne.s32.totalorder %s166, %s168
      %p172 = scmp.eq.s32.totalorder %s22, 0
      %p173 = por %p171, %p172
      %p174 = scmp.ne.s32.totalorder %s166, %s168
      %p175 = scmp.eq.s32.totalorder %s27, 1
      %p176 = por %p174, %p175
      %p177 = scmp.ne.s32.totalorder %s168, %s169
      %p178 = scmp.eq.s32.totalorder %s27, 0
      %p179 = por %p177, %p178
      %p180 = scmp.ne.s32.totalorder %s168, %s169
      %p181 = scmp.eq.s32.totalorder %s28, 1
      %p182 = por %p180, %p181
      %p184 = scmp.ne.s32.totalorder %s169, %s183
      %p185 = scmp.eq.s32.totalorder %s28, 0
      %p186 = por %p184, %p185
      %s188 = sadd.s32 %s187, 1
      %p191 = scmp.eq.s32.totalorder %s22, 1
      %p192 = scmp.ne.s32.totalorder %s187, %s189
      %p193 = scmp.eq.s32.totalorder %s22, 0
      %p194 = por %p192, %p193
      %p195 = scmp.ne.s32.totalorder %s187, %s189
      %p196 = scmp.eq.s32.totalorder %s27, 1
      %p197 = por %p195, %p196
      %p198 = scmp.ne.s32.totalorder %s189, %s190
      %p199 = scmp.eq.s32.totalorder %s27, 0
      %p200 = por %p198, %p199
      %p201 = scmp.ne.s32.totalorder %s189, %s190
      %p202 = scmp.eq.s32.totalorder %s28, 1
      %p203 = por %p201, %p202
      %p205 = scmp.ne.s32.totalorder %s190, %s204
      %p206 = scmp.eq.s32.totalorder %s28, 0
      %p207 = por %p205, %p206
      %s209 = sadd.s32 %s208, 1
      %p212 = scmp.eq.s32.totalorder %s22, 1
      %p213 = scmp.ne.s32.totalorder %s208, %s210
      %p214 = scmp.eq.s32.totalorder %s22, 0
      %p215 = por %p213, %p214
      %p216 = scmp.ne.s32.totalorder %s208, %s210
      %p217 = scmp.eq.s32.totalorder %s27, 1
      %p218 = por %p216, %p217
      %p219 = scmp.ne.s32.totalorder %s210, %s211
      %p220 = scmp.eq.s32.totalorder %s27, 0
      %p221 = por %p219, %p220
      %p222 = scmp.ne.s32.totalorder %s210, %s211
      %p223 = scmp.eq.s32.totalorder %s28, 1
      %p224 = por %p222, %p223
      %p226 = scmp.ne.s32.totalorder %s211, %s225
      %p227 = scmp.eq.s32.totalorder %s28, 0
      %p228 = por %p226, %p227
      %s230 = sadd.s32 %s229, 1
      %p233 = scmp.eq.s32.totalorder %s22, 1
      %p234 = scmp.ne.s32.totalorder %s229, %s231
      %p235 = scmp.eq.s32.totalorder %s22, 0
      %p236 = por %p234, %p235
      %p237 = scmp.ne.s32.totalorder %s229, %s231
      %p238 = scmp.eq.s32.totalorder %s27, 1
      %p239 = por %p237, %p238
      %p240 = scmp.ne.s32.totalorder %s231, %s232
      %p241 = scmp.eq.s32.totalorder %s27, 0
      %p242 = por %p240, %p241
      %p243 = scmp.ne.s32.totalorder %s231, %s232
      %p244 = scmp.eq.s32.totalorder %s28, 1
      %p245 = por %p243, %p244
      %p247 = scmp.ne.s32.totalorder %s232, %s246
      %p248 = scmp.eq.s32.totalorder %s28, 0
      %p249 = por %p247, %p248
      %s251 = sadd.s32 %s250, 1
      %p254 = scmp.eq.s32.totalorder %s22, 1
      %p255 = scmp.ne.s32.totalorder %s250, %s252
      %p256 = scmp.eq.s32.totalorder %s22, 0
      %p257 = por %p255, %p256
      %p258 = scmp.ne.s32.totalorder %s250, %s252
      %p259 = scmp.eq.s32.totalorder %s27, 1
      %p260 = por %p258, %p259
      %p261 = scmp.ne.s32.totalorder %s252, %s253
      %p262 = scmp.eq.s32.totalorder %s27, 0
      %p263 = por %p261, %p262
      %p264 = scmp.ne.s32.totalorder %s252, %s253
      %p265 = scmp.eq.s32.totalorder %s28, 1
      %p266 = por %p264, %p265
      %p268 = scmp.ne.s32.totalorder %s253, %s267
      %p269 = scmp.eq.s32.totalorder %s28, 0
      %p270 = por %p268, %p269
      %s271 = ssub.s32 %s22, %s29
      %p272 = scmp.eq.s32.totalorder %s271, 0
      %s274 = sadd.s32 %s273, 1
      %s275 = scalar_select %p272, %s273, %s274
      %p278 = pneg %p272
      %p279 = scmp.eq.s32.totalorder %s22, 1
      %p280 = por %p278, %p279
      %p281 = scmp.ne.s32.totalorder %s273, %s276
      %p282 = scmp.eq.s32.totalorder %s22, 0
      %p283 = por %p281, %p282
      %p284 = scmp.ne.s32.totalorder %s273, %s276
      %p285 = scmp.eq.s32.totalorder %s27, 1
      %p286 = por %p284, %p285
      %p287 = scmp.ne.s32.totalorder %s276, %s277
      %p288 = scmp.eq.s32.totalorder %s27, 0
      %p289 = por %p287, %p288
      %p290 = scmp.ne.s32.totalorder %s276, %s277
      %p291 = scmp.eq.s32.totalorder %s28, 1
      %p292 = por %p290, %p291
      %p294 = scmp.ne.s32.totalorder %s277, %s293
      %p295 = scmp.eq.s32.totalorder %s28, 0
      %p296 = por %p294, %p295
      %s297 = ssub.s32 %s22, %s29
      %p298 = scmp.eq.s32.totalorder %s297, 0
      %s300 = sadd.s32 %s299, 1
      %s301 = scalar_select %p298, %s299, %s300
      %p304 = pneg %p298
      %p305 = scmp.eq.s32.totalorder %s22, 1
      %p306 = por %p304, %p305
      %p307 = scmp.ne.s32.totalorder %s299, %s302
      %p308 = scmp.eq.s32.totalorder %s22, 0
      %p309 = por %p307, %p308
      %p310 = scmp.ne.s32.totalorder %s299, %s302
      %p311 = scmp.eq.s32.totalorder %s27, 1
      %p312 = por %p310, %p311
      %p313 = scmp.ne.s32.totalorder %s302, %s303
      %p314 = scmp.eq.s32.totalorder %s27, 0
      %p315 = por %p313, %p314
      %p316 = scmp.ne.s32.totalorder %s302, %s303
      %p317 = scmp.eq.s32.totalorder %s28, 1
      %p318 = por %p316, %p317
      %p320 = scmp.ne.s32.totalorder %s303, %s319
      %p321 = scmp.eq.s32.totalorder %s28, 0
      %p322 = por %p320, %p321
      %p323 = scmp.le.s32.totalorder 1, %s22
      %p324 = scmp.lt.s32.totalorder %s22, 3
      %p325 = pnand %p323, %p324
      %p326 = pneg %p325
      // Predicated region
      $region9: #{cross_attention_block.1} parent=5 // pred_check
        _
      $region10: #{cross_attention_block.1} parent=5 // pred_check_branch
        %328 = sbr.rel (%p325) target = $region12
      $region11: #{cross_attention_block.1} parent=5 // pred_region
        %s329 = ssub.s32 %s22, 1
        // Predicated region
        $region13: #{cross_attention_block.1} parent=11 // pred_check
          %p330 = pneg %p95
        $region14: #{cross_attention_block.1} parent=11 // pred_check_branch
          %332 = sbr.rel (%p330) target = $region16
        $region15: #{cross_attention_block.1} parent=11 // pred_region
          _
        $region16: #{cross_attention_block.1} parent=11 // pred_fallthru
          _
        // Predicated region
        $region17: #{cross_attention_block.1} parent=11 // pred_check
          %p333 = pneg %p116
        $region18: #{cross_attention_block.1} parent=11 // pred_check_branch
          %335 = sbr.rel (%p333) target = $region20
        $region19: #{cross_attention_block.1} parent=11 // pred_region
          _
        $region20: #{cross_attention_block.1} parent=11 // pred_fallthru
          _
        // Predicated region
        $region21: #{cross_attention_block.1} parent=11 // pred_check
          %p336 = pneg %p137
        $region22: #{cross_attention_block.1} parent=11 // pred_check_branch
          %338 = sbr.rel (%p336) target = $region24
        $region23: #{cross_attention_block.1} parent=11 // pred_region
          _
        $region24: #{cross_attention_block.1} parent=11 // pred_fallthru
          _
        // Predicated region
        $region25: #{cross_attention_block.1} parent=11 // pred_check
          %p339 = pneg %p158
        $region26: #{cross_attention_block.1} parent=11 // pred_check_branch
          %341 = sbr.rel (%p339) target = $region28
        $region27: #{cross_attention_block.1} parent=11 // pred_region
          _
        $region28: #{cross_attention_block.1} parent=11 // pred_fallthru
          _
        // Predicated region
        $region29: #{cross_attention_block.1} parent=11 // pred_check
          %p342 = pneg %p179
        $region30: #{cross_attention_block.1} parent=11 // pred_check_branch
          %344 = sbr.rel (%p342) target = $region32
        $region31: #{cross_attention_block.1} parent=11 // pred_region
          _
        $region32: #{cross_attention_block.1} parent=11 // pred_fallthru
          _
        // Predicated region
        $region33: #{cross_attention_block.1} parent=11 // pred_check
          %p345 = pneg %p200
        $region34: #{cross_attention_block.1} parent=11 // pred_check_branch
          %347 = sbr.rel (%p345) target = $region36
        $region35: #{cross_attention_block.1} parent=11 // pred_region
          _
        $region36: #{cross_attention_block.1} parent=11 // pred_fallthru
          _
        // Predicated region
        $region37: #{cross_attention_block.1} parent=11 // pred_check
          %p348 = pneg %p221
        $region38: #{cross_attention_block.1} parent=11 // pred_check_branch
          %350 = sbr.rel (%p348) target = $region40
        $region39: #{cross_attention_block.1} parent=11 // pred_region
          _
        $region40: #{cross_attention_block.1} parent=11 // pred_fallthru
          _
        // Predicated region
        $region41: #{cross_attention_block.1} parent=11 // pred_check
          %p351 = pneg %p242
        $region42: #{cross_attention_block.1} parent=11 // pred_check_branch
          %353 = sbr.rel (%p351) target = $region44
        $region43: #{cross_attention_block.1} parent=11 // pred_region
          _
        $region44: #{cross_attention_block.1} parent=11 // pred_fallthru
          _
        // Predicated region
        $region45: #{cross_attention_block.1} parent=11 // pred_check
          %p354 = pneg %p263
        $region46: #{cross_attention_block.1} parent=11 // pred_check_branch
          %356 = sbr.rel (%p354) target = $region48
        $region47: #{cross_attention_block.1} parent=11 // pred_region
          _
        $region48: #{cross_attention_block.1} parent=11 // pred_fallthru
          _
      $region12: #{cross_attention_block.1} parent=5 // pred_fallthru
        _
      %p357 = scmp.lt.s32.totalorder %s22, 2
      // Predicated region
      $region49: #{cross_attention_block.1} parent=5 // pred_check
        %p358 = pneg %p357
      $region50: #{cross_attention_block.1} parent=5 // pred_check_branch
        %360 = sbr.rel (%p358) target = $region52
      $region51: #{cross_attention_block.1} parent=5 // pred_region
        // Predicated region
        $region53: #{cross_attention_block.1} parent=51 // pred_check
          %p361 = pneg %p42
        $region54: #{cross_attention_block.1} parent=51 // pred_check_branch
          %363 = sbr.rel (%p361) target = $region56
        $region55: #{cross_attention_block.1} parent=51 // pred_region
          %p364 = scmp.lt.s32.totalorder %s22, 1
          %s365 = scalar_select %p364, %s22, 1
          %s366 = smul.addr %s365, 8
          %s367 = scalar_lea.vmem %s0, %s366
        $region56: #{cross_attention_block.1} parent=51 // pred_fallthru
          _
        // Predicated region
        $region57: #{cross_attention_block.1} parent=51 // pred_check
          %p368 = pneg %p68
        $region58: #{cross_attention_block.1} parent=51 // pred_check_branch
          %370 = sbr.rel (%p368) target = $region60
        $region59: #{cross_attention_block.1} parent=51 // pred_region
          %p371 = scmp.lt.s32.totalorder %s22, 1
          %s372 = scalar_select %p371, %s22, 1
          %s373 = smul.addr %s372, 2
          %s374 = smul.addr %s373, 8
          %s375 = scalar_lea.vmem %s1, %s374
        $region60: #{cross_attention_block.1} parent=51 // pred_fallthru
          _
      $region52: #{cross_attention_block.1} parent=5 // pred_fallthru
        _
      %p376 = scmp.le.s32.totalorder 1, %s22
      %p377 = scmp.lt.s32.totalorder %s22, 3
      %p378 = pnand %p376, %p377
      %p379 = pneg %p378
      // Predicated region
      $region61: #{cross_attention_block.1} parent=5 // pred_check
        _
      $region62: #{cross_attention_block.1} parent=5 // pred_check_branch
        %381 = sbr.rel (%p378) target = $region64
      $region63: #{cross_attention_block.1} parent=5 // pred_region
        %s382 = ssub.s32 %s22, 1
        %p383 = scmp.lt.s32.totalorder %s27, 1
        %s384 = scalar_select %p383, %s27, 1
        %s385 = smul.addr %s384, 8
        %s386 = scalar_lea.vmem %s0, %s385
        %p387 = pneg %p48
        %p388 = pneg %p45
        %p389 = scmp.lt.s32.totalorder %s27, 1
        %s390 = scalar_select %p389, %s27, 1
        %s391 = smul.addr %s390, 2
        %s392 = smul.addr %s391, 8
        %s393 = scalar_lea.vmem %s1, %s392
        %p394 = pneg %p74
        %p395 = pneg %p71
        %p396 = pneg %p95
        %p397 = pneg %p92
        %p398 = pneg %p116
        %p399 = pneg %p113
        %p400 = pneg %p137
        %p401 = pneg %p134
        %p402 = pneg %p158
        %p403 = pneg %p155
        %p404 = pneg %p179
        %p405 = pneg %p176
        %p406 = pneg %p200
        %p407 = pneg %p197
        %p408 = pneg %p221
        %p409 = pneg %p218
        %p410 = pneg %p242
        %p411 = pneg %p239
        %p412 = pneg %p263
        %p413 = pneg %p260
        %p414 = pneg %p289
        %p415 = pneg %p286
        %s416 = sand.u32 %s276, 1
        %s417 = scalar_lea.sflag [#allocation3], %s416
        %s418 = sand.u32 %s276, 1
        %s419 = smul.addr %s418, 8
        %s420 = scalar_lea.vmem [#allocation2], %s419
        %p421 = pneg %p315
        %p422 = pneg %p312
        %p423 = scmp.lt.s32.totalorder %s27, 1
        %s424 = scalar_select %p423, %s27, 1
        %s425 = smul.addr %s424, 8
        %s426 = scalar_lea.vmem %s12, %s425
        %p427 = scmp.lt.s32.totalorder %s27, 1
        %s428 = scalar_select %p427, %s27, 1
        %s429 = smul.addr %s428, 8
        %s430 = scalar_lea.vmem %s0, %s429
        %p431 = scmp.lt.s32.totalorder %s27, 1
        %s432 = scalar_select %p431, %s27, 1
        %s433 = smul.addr %s432, 2
        %s434 = smul.addr %s433, 8
        %s435 = scalar_lea.vmem %s1, %s434
        %p436 = scmp.lt.s32.totalorder %s27, 1
        %s437 = scalar_select %p436, %s27, 1
        %s438 = smul.addr %s437, 8
        %s439 = scalar_lea.vmem %s12, %s438
        %v440 = vld [vmem:[%s430] sm:$0xff]
        %v441 = vld [vmem:[%s435] sm:$0xff]
        %v442 = vld [vmem:[%s435 + $0x8] sm:$0xff]
        %v443 = vld [vmem:[%s10] sm:$0x3f]
        %v444 = vld [vmem:[%s2] sm:$0xff]
        %v445 = vld [vmem:[%s2 + $0x8] sm:$0xff]
        %v446 = vld [vmem:[%s2 + $0x10] sm:$0xff]
        %v447 = vld [vmem:[%s2 + $0x18] sm:$0xff]
        %v448 = vld [vmem:[%s2 + $0x20] sm:$0xff]
        %v449 = vld [vmem:[%s2 + $0x28] sm:$0xff]
        %v450 = vld [vmem:[%s2 + $0x30] sm:$0xff]
        %v451 = vld [vmem:[%s2 + $0x38] sm:$0xff]
        %v452 = vlaneseq
        %v453 = vshrl.u32 %v452, 7
        %v454 = vsub.s32 0, %v453
        %v455 = vrot.slane %v443, %v454
        %vm456 = vcmask 523264
        %v458 = vsel %vm456, %v440, 0
        %460 = vmatprep.subr.mxu0 0.0
        %461 = vmatpush1.msra.mxu0 %v444
        %462 = vmatprep.subr.mxu0 0.0
        %463 = vmatpush1.msra.mxu0 %v445
        %464 = vmatprep.subr.mxu0 0.0
        %465 = vmatpush1.msra.mxu0 %v446
        %466 = vmatprep.subr.mxu0 0.0
        %467 = vmatpush1.msra.mxu0 %v447
        %468 = vmatprep.subr.mxu0 0.0
        %469 = vmatpush1.msra.mxu0 %v448
        %470 = vmatprep.subr.mxu0 0.0
        %471 = vmatpush1.msra.mxu0 %v449
        %472 = vmatprep.subr.mxu0 0.0
        %473 = vmatpush1.msra.mxu0 %v450
        %474 = vmatprep.subr.mxu0 0.0
        %475 = vmatpush1.msra.mxu0 %v451
        %476 = vmatprep.subr.mxu0 0.0
        %477 = vmatpush1.msra.mxu0 0.0
        %478 = vmatprep.subr.mxu0 0.0
        %479 = vmatpush1.msra.mxu0 0.0
        %480 = vmatprep.subr.mxu0 0.0
        %481 = vmatpush1.msra.mxu0 0.0
        %482 = vmatprep.subr.mxu0 0.0
        %483 = vmatpush1.msra.mxu0 0.0
        %484 = vmatprep.subr.mxu0 0.0
        %485 = vmatpush1.msra.mxu0 0.0
        %486 = vmatprep.subr.mxu0 0.0
        %487 = vmatpush1.msra.mxu0 0.0
        %488 = vmatprep.subr.mxu0 0.0
        %489 = vmatpush1.msra.mxu0 0.0
        %490 = vmatprep.subr.mxu0 0.0
        %491 = vmatpush1.msra.mxu0 0.0
        %492 = vmatprep.subr.mxu0 0.0
        %493 = vmatpush1.msra.mxu0 0.0
        %494 = vmatprep.subr.mxu0 0.0
        %495 = vmatpush1.msra.mxu0 0.0
        %496 = vmatprep.subr.mxu0 0.0
        %497 = vmatpush1.msra.mxu0 0.0
        %498 = vmatprep.subr.mxu0 0.0
        %499 = vmatpush1.msra.mxu0 0.0
        %500 = vmatprep.subr.mxu0 0.0
        %501 = vmatpush1.msra.mxu0 0.0
        %502 = vmatprep.subr.mxu0 0.0
        %503 = vmatpush1.msra.mxu0 0.0
        %504 = vmatprep.subr.mxu0 0.0
        %505 = vmatpush1.msra.mxu0 0.0
        %506 = vmatprep.subr.mxu0 0.0
        %507 = vmatpush1.msra.mxu0 0.0
        %508 = vmatprep.subr.mxu0 0.0
        %509 = vmatpush1.msra.mxu0 0.0
        %510 = vmatprep.subr.mxu0 0.0
        %511 = vmatpush1.msra.mxu0 0.0
        %512 = vmatprep.subr.mxu0 0.0
        %513 = vmatpush1.msra.mxu0 0.0
        %514 = vmatprep.subr.mxu0 0.0
        %515 = vmatpush1.msra.mxu0 0.0
        %516 = vmatprep.subr.mxu0 0.0
        %517 = vmatpush1.msra.mxu0 0.0
        %518 = vmatprep.subr.mxu0 0.0
        %519 = vmatpush1.msra.mxu0 0.0
        %520 = vmatprep.subr.mxu0 0.0
        %521 = vmatpush1.msra.mxu0 0.0
        %522 = vmatprep.subr.mxu0 0.0
        %523 = vmatpush1.msra.mxu0 0.0
        %524 = vmatprep.mubr.f32.mxu0 0.0
        %525 = vmatmul.mubr.f32.gmra.mrb[0].mxu0 %v458
        %v526 = vpop.f32.mrb[0].mxu0
        %v527 = vadd.f32 %v455, %v526
        %v528 = vpop.f32.mrb[0].mxu0
        %529 = vdwg.mxu0
        %v530 = vld [vmem:[%s3] sm:$0xff]
        %v531 = vld [vmem:[%s3 + $0x8] sm:$0xff]
        %v532 = vld [vmem:[%s3 + $0x10] sm:$0xff]
        %v533 = vld [vmem:[%s3 + $0x18] sm:$0xff]
        %v534 = vld [vmem:[%s3 + $0x20] sm:$0xff]
        %v535 = vld [vmem:[%s3 + $0x28] sm:$0xff]
        %v536 = vld [vmem:[%s3 + $0x30] sm:$0xff]
        %v537 = vld [vmem:[%s3 + $0x38] sm:$0xff]
        %v538 = vld [vmem:[%s4] sm:$0x1]
        %v540 = vlaneseq
        %v541 = vshrl.u32 %v540, 7
        %v542 = vsub.s32 0, %v541
        %v543 = vrot.slane %v538, %v542
        %v546 = vsel %vm456, %v441, 0
        %v549 = vsel %vm456, %v442, 0
        %551 = vmatprep.subr.mxu0 0.0
        %552 = vmatpush1.msra.mxu0 %v530
        %553 = vmatprep.subr.mxu0 0.0
        %554 = vmatpush1.msra.mxu0 %v531
        %555 = vmatprep.subr.mxu0 0.0
        %556 = vmatpush1.msra.mxu0 %v532
        %557 = vmatprep.subr.mxu0 0.0
        %558 = vmatpush1.msra.mxu0 %v533
        %559 = vmatprep.subr.mxu0 0.0
        %560 = vmatpush1.msra.mxu0 %v534
        %561 = vmatprep.subr.mxu0 0.0
        %562 = vmatpush1.msra.mxu0 %v535
        %563 = vmatprep.subr.mxu0 0.0
        %564 = vmatpush1.msra.mxu0 %v536
        %565 = vmatprep.subr.mxu0 0.0
        %566 = vmatpush1.msra.mxu0 %v537
        %567 = vmatprep.subr.mxu0 0.0
        %568 = vmatpush1.msra.mxu0 0.0
        %569 = vmatprep.subr.mxu0 0.0
        %570 = vmatpush1.msra.mxu0 0.0
        %571 = vmatprep.subr.mxu0 0.0
        %572 = vmatpush1.msra.mxu0 0.0
        %573 = vmatprep.subr.mxu0 0.0
        %574 = vmatpush1.msra.mxu0 0.0
        %575 = vmatprep.subr.mxu0 0.0
        %576 = vmatpush1.msra.mxu0 0.0
        %577 = vmatprep.subr.mxu0 0.0
        %578 = vmatpush1.msra.mxu0 0.0
        %579 = vmatprep.subr.mxu0 0.0
        %580 = vmatpush1.msra.mxu0 0.0
        %581 = vmatprep.subr.mxu0 0.0
        %582 = vmatpush1.msra.mxu0 0.0
        %583 = vmatprep.subr.mxu0 0.0
        %584 = vmatpush1.msra.mxu0 0.0
        %585 = vmatprep.subr.mxu0 0.0
        %586 = vmatpush1.msra.mxu0 0.0
        %587 = vmatprep.subr.mxu0 0.0
        %588 = vmatpush1.msra.mxu0 0.0
        %589 = vmatprep.subr.mxu0 0.0
        %590 = vmatpush1.msra.mxu0 0.0
        %591 = vmatprep.subr.mxu0 0.0
        %592 = vmatpush1.msra.mxu0 0.0
        %593 = vmatprep.subr.mxu0 0.0
        %594 = vmatpush1.msra.mxu0 0.0
        %595 = vmatprep.subr.mxu0 0.0
        %596 = vmatpush1.msra.mxu0 0.0
        %597 = vmatprep.subr.mxu0 0.0
        %598 = vmatpush1.msra.mxu0 0.0
        %599 = vmatprep.subr.mxu0 0.0
        %600 = vmatpush1.msra.mxu0 0.0
        %601 = vmatprep.subr.mxu0 0.0
        %602 = vmatpush1.msra.mxu0 0.0
        %603 = vmatprep.subr.mxu0 0.0
        %604 = vmatpush1.msra.mxu0 0.0
        %605 = vmatprep.subr.mxu0 0.0
        %606 = vmatpush1.msra.mxu0 0.0
        %607 = vmatprep.subr.mxu0 0.0
        %608 = vmatpush1.msra.mxu0 0.0
        %609 = vmatprep.subr.mxu0 0.0
        %610 = vmatpush1.msra.mxu0 0.0
        %611 = vmatprep.subr.mxu0 0.0
        %612 = vmatpush1.msra.mxu0 0.0
        %613 = vmatprep.subr.mxu0 0.0
        %614 = vmatpush1.msra.mxu0 0.0
        %615 = vmatprep.mubr.f32.mxu0 0.0
        %616 = vmatmul.mubr.f32.gmra.mrb[0].mxu0 %v546
        %v617 = vpop.f32.mrb[0].mxu0
        %v618 = vadd.f32 %v543, %v617
        %v619 = vpop.f32.mrb[0].mxu0
        %620 = vmatprep.mubr.f32.mxu0 0.0
        %621 = vmatmul.mubr.f32.gmra.mrb[0].mxu0 %v549
        %v622 = vpop.f32.mrb[0].mxu0
        %v623 = vadd.f32 %v543, %v622
        %v624 = vpop.f32.mrb[0].mxu0
        %625 = vdwg.mxu0
        %v626 = vld [vmem:[%s5] sm:$0xff]
        %v627 = vld [vmem:[%s5 + $0x8] sm:$0xff]
        %v628 = vld [vmem:[%s5 + $0x10] sm:$0xff]
        %v629 = vld [vmem:[%s5 + $0x18] sm:$0xff]
        %v630 = vld [vmem:[%s5 + $0x20] sm:$0xff]
        %v631 = vld [vmem:[%s5 + $0x28] sm:$0xff]
        %v632 = vld [vmem:[%s5 + $0x30] sm:$0xff]
        %v633 = vld [vmem:[%s5 + $0x38] sm:$0xff]
        %vm634 = vcmask 130048
        %v636 = vsel %vm634, %v527, 0
        %v639 = vsel %vm634, %v618, 0
        %v642 = vsel %vm634, %v623, 0
        %644 = vmatprep.subr.mxu0 0.0
        %645 = vmatpush1.xpose.msra.mxu0 %v639
        %646 = vmatprep.subr.mxu0 0.0
        %647 = vmatpush1.xpose.msra.mxu0 %v642
        %648 = vmatprep.subr.mxu0 0.0
        %649 = vmatpush1.xpose.msra.mxu0 0.0
        %650 = vmatprep.subr.mxu0 0.0
        %651 = vmatpush1.xpose.msra.mxu0 0.0
        %652 = vmatprep.subr.mxu0 0.0
        %653 = vmatpush1.xpose.msra.mxu0 0.0
        %654 = vmatprep.subr.mxu0 0.0
        %655 = vmatpush1.xpose.msra.mxu0 0.0
        %656 = vmatprep.subr.mxu0 0.0
        %657 = vmatpush1.xpose.msra.mxu0 0.0
        %658 = vmatprep.subr.mxu0 0.0
        %659 = vmatpush1.xpose.msra.mxu0 0.0
        %660 = vmatprep.subr.mxu0 0.0
        %661 = vmatpush1.xpose.msra.mxu0 0.0
        %662 = vmatprep.subr.mxu0 0.0
        %663 = vmatpush1.xpose.msra.mxu0 0.0
        %664 = vmatprep.subr.mxu0 0.0
        %665 = vmatpush1.xpose.msra.mxu0 0.0
        %666 = vmatprep.subr.mxu0 0.0
        %667 = vmatpush1.xpose.msra.mxu0 0.0
        %668 = vmatprep.subr.mxu0 0.0
        %669 = vmatpush1.xpose.msra.mxu0 0.0
        %670 = vmatprep.subr.mxu0 0.0
        %671 = vmatpush1.xpose.msra.mxu0 0.0
        %672 = vmatprep.subr.mxu0 0.0
        %673 = vmatpush1.xpose.msra.mxu0 0.0
        %674 = vmatprep.subr.mxu0 0.0
        %675 = vmatpush1.xpose.msra.mxu0 0.0
        %676 = vmatprep.subr.mxu0 0.0
        %677 = vmatpush1.xpose.msra.mxu0 0.0
        %678 = vmatprep.subr.mxu0 0.0
        %679 = vmatpush1.xpose.msra.mxu0 0.0
        %680 = vmatprep.subr.mxu0 0.0
        %681 = vmatpush1.xpose.msra.mxu0 0.0
        %682 = vmatprep.subr.mxu0 0.0
        %683 = vmatpush1.xpose.msra.mxu0 0.0
        %684 = vmatprep.subr.mxu0 0.0
        %685 = vmatpush1.xpose.msra.mxu0 0.0
        %686 = vmatprep.subr.mxu0 0.0
        %687 = vmatpush1.xpose.msra.mxu0 0.0
        %688 = vmatprep.subr.mxu0 0.0
        %689 = vmatpush1.xpose.msra.mxu0 0.0
        %690 = vmatprep.subr.mxu0 0.0
        %691 = vmatpush1.xpose.msra.mxu0 0.0
        %692 = vmatprep.subr.mxu0 0.0
        %693 = vmatpush1.xpose.msra.mxu0 0.0
        %694 = vmatprep.subr.mxu0 0.0
        %695 = vmatpush1.xpose.msra.mxu0 0.0
        %696 = vmatprep.subr.mxu0 0.0
        %697 = vmatpush1.xpose.msra.mxu0 0.0
        %698 = vmatprep.subr.mxu0 0.0
        %699 = vmatpush1.xpose.msra.mxu0 0.0
        %700 = vmatprep.subr.mxu0 0.0
        %701 = vmatpush1.xpose.msra.mxu0 0.0
        %702 = vmatprep.subr.mxu0 0.0
        %703 = vmatpush1.xpose.msra.mxu0 0.0
        %704 = vmatprep.subr.mxu0 0.0
        %705 = vmatpush1.xpose.msra.mxu0 0.0
        %706 = vmatprep.subr.mxu0 0.0
        %707 = vmatpush1.xpose.msra.mxu0 0.0
        %708 = vmatprep.mubr.f32.mxu0 0.0
        %709 = vmatmul.mubr.f32.gmra.mrb[0].mxu0 %v636
        %v710 = vpop.f32.mrb[0].mxu0
        %v711 = vadd.f32 0.0, %v710
        %v712 = vpop.f32.mrb[0].mxu0
        %713 = vdwg.mxu0
        %v714 = vsel %vm634, %v711, -inf
        %715 = vmax.xlane.f32.xlu0 %v714
        %v716 = vpop.xlane.xlu0 %715
        %v717 = vsub.f32 %v711, %v716
        %v718 = vmul.f32 %v717, 1.442695
        %v719 = vpow.pop %v718
        %v720 = vsel %vm634, %v719, 0.0
        %721 = vadd.xlane.f32.xlu0 %v720
        %v722 = vpop.xlane.xlu0 %721
        %v723 = vrcp.pop %v722
        %v724 = vmul.f32 %v719, %v723
        %725 = vrot.lane.b32.xlu0 %v618, 64
        %v726 = vpop.permute.xlu0 %725
        %727 = vrot.lane.b32.xlu0 %v623, 64
        %v728 = vpop.permute.xlu0 %727
        %v732 = vsel %vm634, %v724, 0
        %734 = vmatprep.subr.mxu0 0.0
        %735 = vmatpush1.msra.mxu0 %v726
        %736 = vmatprep.subr.mxu0 0.0
        %737 = vmatpush1.msra.mxu0 %v728
        %738 = vmatprep.subr.mxu0 0.0
        %739 = vmatpush1.msra.mxu0 0.0
        %740 = vmatprep.subr.mxu0 0.0
        %741 = vmatpush1.msra.mxu0 0.0
        %742 = vmatprep.subr.mxu0 0.0
        %743 = vmatpush1.msra.mxu0 0.0
        %744 = vmatprep.subr.mxu0 0.0
        %745 = vmatpush1.msra.mxu0 0.0
        %746 = vmatprep.subr.mxu0 0.0
        %747 = vmatpush1.msra.mxu0 0.0
        %748 = vmatprep.subr.mxu0 0.0
        %749 = vmatpush1.msra.mxu0 0.0
        %750 = vmatprep.subr.mxu0 0.0
        %751 = vmatpush1.msra.mxu0 0.0
        %752 = vmatprep.subr.mxu0 0.0
        %753 = vmatpush1.msra.mxu0 0.0
        %754 = vmatprep.subr.mxu0 0.0
        %755 = vmatpush1.msra.mxu0 0.0
        %756 = vmatprep.subr.mxu0 0.0
        %757 = vmatpush1.msra.mxu0 0.0
        %758 = vmatprep.subr.mxu0 0.0
        %759 = vmatpush1.msra.mxu0 0.0
        %760 = vmatprep.subr.mxu0 0.0
        %761 = vmatpush1.msra.mxu0 0.0
        %762 = vmatprep.subr.mxu0 0.0
        %763 = vmatpush1.msra.mxu0 0.0
        %764 = vmatprep.subr.mxu0 0.0
        %765 = vmatpush1.msra.mxu0 0.0
        %766 = vmatprep.subr.mxu0 0.0
        %767 = vmatpush1.msra.mxu0 0.0
        %768 = vmatprep.subr.mxu0 0.0
        %769 = vmatpush1.msra.mxu0 0.0
        %770 = vmatprep.subr.mxu0 0.0
        %771 = vmatpush1.msra.mxu0 0.0
        %772 = vmatprep.subr.mxu0 0.0
        %773 = vmatpush1.msra.mxu0 0.0
        %774 = vmatprep.subr.mxu0 0.0
        %775 = vmatpush1.msra.mxu0 0.0
        %776 = vmatprep.subr.mxu0 0.0
        %777 = vmatpush1.msra.mxu0 0.0
        %778 = vmatprep.subr.mxu0 0.0
        %779 = vmatpush1.msra.mxu0 0.0
        %780 = vmatprep.subr.mxu0 0.0
        %781 = vmatpush1.msra.mxu0 0.0
        %782 = vmatprep.subr.mxu0 0.0
        %783 = vmatpush1.msra.mxu0 0.0
        %784 = vmatprep.subr.mxu0 0.0
        %785 = vmatpush1.msra.mxu0 0.0
        %786 = vmatprep.subr.mxu0 0.0
        %787 = vmatpush1.msra.mxu0 0.0
        %788 = vmatprep.subr.mxu0 0.0
        %789 = vmatpush1.msra.mxu0 0.0
        %790 = vmatprep.subr.mxu0 0.0
        %791 = vmatpush1.msra.mxu0 0.0
        %792 = vmatprep.subr.mxu0 0.0
        %793 = vmatpush1.msra.mxu0 0.0
        %794 = vmatprep.subr.mxu0 0.0
        %795 = vmatpush1.msra.mxu0 0.0
        %796 = vmatprep.subr.mxu0 0.0
        %797 = vmatpush1.msra.mxu0 0.0
        %798 = vmatprep.mubr.f32.mxu0 0.0
        %799 = vmatmul.mubr.f32.gmra.mrb[0].mxu0 %v732
        %v800 = vpop.f32.mrb[0].mxu0
        %v801 = vadd.f32 0.0, %v800
        %v802 = vpop.f32.mrb[0].mxu0
        %803 = vdwg.mxu0
        %804 = vrot.lane.b32.xlu0 %v527, 112
        %v805 = vpop.permute.xlu0 %804
        %806 = vrot.lane.b32.xlu0 %v618, 112
        %v807 = vpop.permute.xlu0 %806
        %808 = vrot.lane.b32.xlu0 %v623, 112
        %v809 = vpop.permute.xlu0 %808
        %v810 = vsel %vm634, %v805, 0
        %v812 = vsel %vm634, %v807, 0
        %v814 = vsel %vm634, %v809, 0
        %816 = vmatprep.subr.mxu0 0.0
        %817 = vmatpush1.xpose.msra.mxu0 %v812
        %818 = vmatprep.subr.mxu0 0.0
        %819 = vmatpush1.xpose.msra.mxu0 %v814
        %820 = vmatprep.subr.mxu0 0.0
        %821 = vmatpush1.xpose.msra.mxu0 0.0
        %822 = vmatprep.subr.mxu0 0.0
        %823 = vmatpush1.xpose.msra.mxu0 0.0
        %824 = vmatprep.subr.mxu0 0.0
        %825 = vmatpush1.xpose.msra.mxu0 0.0
        %826 = vmatprep.subr.mxu0 0.0
        %827 = vmatpush1.xpose.msra.mxu0 0.0
        %828 = vmatprep.subr.mxu0 0.0
        %829 = vmatpush1.xpose.msra.mxu0 0.0
        %830 = vmatprep.subr.mxu0 0.0
        %831 = vmatpush1.xpose.msra.mxu0 0.0
        %832 = vmatprep.subr.mxu0 0.0
        %833 = vmatpush1.xpose.msra.mxu0 0.0
        %834 = vmatprep.subr.mxu0 0.0
        %835 = vmatpush1.xpose.msra.mxu0 0.0
        %836 = vmatprep.subr.mxu0 0.0
        %837 = vmatpush1.xpose.msra.mxu0 0.0
        %838 = vmatprep.subr.mxu0 0.0
        %839 = vmatpush1.xpose.msra.mxu0 0.0
        %840 = vmatprep.subr.mxu0 0.0
        %841 = vmatpush1.xpose.msra.mxu0 0.0
        %842 = vmatprep.subr.mxu0 0.0
        %843 = vmatpush1.xpose.msra.mxu0 0.0
        %844 = vmatprep.subr.mxu0 0.0
        %845 = vmatpush1.xpose.msra.mxu0 0.0
        %846 = vmatprep.subr.mxu0 0.0
        %847 = vmatpush1.xpose.msra.mxu0 0.0
        %848 = vmatprep.subr.mxu0 0.0
        %849 = vmatpush1.xpose.msra.mxu0 0.0
        %850 = vmatprep.subr.mxu0 0.0
        %851 = vmatpush1.xpose.msra.mxu0 0.0
        %852 = vmatprep.subr.mxu0 0.0
        %853 = vmatpush1.xpose.msra.mxu0 0.0
        %854 = vmatprep.subr.mxu0 0.0
        %855 = vmatpush1.xpose.msra.mxu0 0.0
        %856 = vmatprep.subr.mxu0 0.0
        %857 = vmatpush1.xpose.msra.mxu0 0.0
        %858 = vmatprep.subr.mxu0 0.0
        %859 = vmatpush1.xpose.msra.mxu0 0.0
        %860 = vmatprep.subr.mxu0 0.0
        %861 = vmatpush1.xpose.msra.mxu0 0.0
        %862 = vmatprep.subr.mxu0 0.0
        %863 = vmatpush1.xpose.msra.mxu0 0.0
        %864 = vmatprep.subr.mxu0 0.0
        %865 = vmatpush1.xpose.msra.mxu0 0.0
        %866 = vmatprep.subr.mxu0 0.0
        %867 = vmatpush1.xpose.msra.mxu0 0.0
        %868 = vmatprep.subr.mxu0 0.0
        %869 = vmatpush1.xpose.msra.mxu0 0.0
        %870 = vmatprep.subr.mxu0 0.0
        %871 = vmatpush1.xpose.msra.mxu0 0.0
        %872 = vmatprep.subr.mxu0 0.0
        %873 = vmatpush1.xpose.msra.mxu0 0.0
        %874 = vmatprep.subr.mxu0 0.0
        %875 = vmatpush1.xpose.msra.mxu0 0.0
        %876 = vmatprep.subr.mxu0 0.0
        %877 = vmatpush1.xpose.msra.mxu0 0.0
        %878 = vmatprep.subr.mxu0 0.0
        %879 = vmatpush1.xpose.msra.mxu0 0.0
        %880 = vmatprep.mubr.f32.mxu0 0.0
        %881 = vmatmul.mubr.f32.gmra.mrb[0].mxu0 %v810
        %v882 = vpop.f32.mrb[0].mxu0
        %v883 = vadd.f32 0.0, %v882
        %v884 = vpop.f32.mrb[0].mxu0
        %885 = vdwg.mxu0
        %v886 = vsel %vm634, %v883, -inf
        %887 = vmax.xlane.f32.xlu0 %v886
        %v888 = vpop.xlane.xlu0 %887
        %v889 = vsub.f32 %v883, %v888
        %v890 = vmul.f32 %v889, 1.442695
        %v891 = vpow.pop %v890
        %v892 = vsel %vm634, %v891, 0.0
        %893 = vadd.xlane.f32.xlu0 %v892
        %v894 = vpop.xlane.xlu0 %893
        %v895 = vrcp.pop %v894
        %v896 = vmul.f32 %v891, %v895
        %897 = vrot.lane.b32.xlu0 %v618, 48
        %v898 = vpop.permute.xlu0 %897
        %899 = vrot.lane.b32.xlu0 %v623, 48
        %v900 = vpop.permute.xlu0 %899
        %v904 = vsel %vm634, %v896, 0
        %906 = vmatprep.subr.mxu0 0.0
        %907 = vmatpush1.msra.mxu0 %v898
        %908 = vmatprep.subr.mxu0 0.0
        %909 = vmatpush1.msra.mxu0 %v900
        %910 = vmatprep.subr.mxu0 0.0
        %911 = vmatpush1.msra.mxu0 0.0
        %912 = vmatprep.subr.mxu0 0.0
        %913 = vmatpush1.msra.mxu0 0.0
        %914 = vmatprep.subr.mxu0 0.0
        %915 = vmatpush1.msra.mxu0 0.0
        %916 = vmatprep.subr.mxu0 0.0
        %917 = vmatpush1.msra.mxu0 0.0
        %918 = vmatprep.subr.mxu0 0.0
        %919 = vmatpush1.msra.mxu0 0.0
        %920 = vmatprep.subr.mxu0 0.0
        %921 = vmatpush1.msra.mxu0 0.0
        %922 = vmatprep.subr.mxu0 0.0
        %923 = vmatpush1.msra.mxu0 0.0
        %924 = vmatprep.subr.mxu0 0.0
        %925 = vmatpush1.msra.mxu0 0.0
        %926 = vmatprep.subr.mxu0 0.0
        %927 = vmatpush1.msra.mxu0 0.0
        %928 = vmatprep.subr.mxu0 0.0
        %929 = vmatpush1.msra.mxu0 0.0
        %930 = vmatprep.subr.mxu0 0.0
        %931 = vmatpush1.msra.mxu0 0.0
        %932 = vmatprep.subr.mxu0 0.0
        %933 = vmatpush1.msra.mxu0 0.0
        %934 = vmatprep.subr.mxu0 0.0
        %935 = vmatpush1.msra.mxu0 0.0
        %936 = vmatprep.subr.mxu0 0.0
        %937 = vmatpush1.msra.mxu0 0.0
        %938 = vmatprep.subr.mxu0 0.0
        %939 = vmatpush1.msra.mxu0 0.0
        %940 = vmatprep.subr.mxu0 0.0
        %941 = vmatpush1.msra.mxu0 0.0
        %942 = vmatprep.subr.mxu0 0.0
        %943 = vmatpush1.msra.mxu0 0.0
        %944 = vmatprep.subr.mxu0 0.0
        %945 = vmatpush1.msra.mxu0 0.0
        %946 = vmatprep.subr.mxu0 0.0
        %947 = vmatpush1.msra.mxu0 0.0
        %948 = vmatprep.subr.mxu0 0.0
        %949 = vmatpush1.msra.mxu0 0.0
        %950 = vmatprep.subr.mxu0 0.0
        %951 = vmatpush1.msra.mxu0 0.0
        %952 = vmatprep.subr.mxu0 0.0
        %953 = vmatpush1.msra.mxu0 0.0
        %954 = vmatprep.subr.mxu0 0.0
        %955 = vmatpush1.msra.mxu0 0.0
        %956 = vmatprep.subr.mxu0 0.0
        %957 = vmatpush1.msra.mxu0 0.0
        %958 = vmatprep.subr.mxu0 0.0
        %959 = vmatpush1.msra.mxu0 0.0
        %960 = vmatprep.subr.mxu0 0.0
        %961 = vmatpush1.msra.mxu0 0.0
        %962 = vmatprep.subr.mxu0 0.0
        %963 = vmatpush1.msra.mxu0 0.0
        %964 = vmatprep.subr.mxu0 0.0
        %965 = vmatpush1.msra.mxu0 0.0
        %966 = vmatprep.subr.mxu0 0.0
        %967 = vmatpush1.msra.mxu0 0.0
        %968 = vmatprep.subr.mxu0 0.0
        %969 = vmatpush1.msra.mxu0 0.0
        %970 = vmatprep.mubr.f32.mxu0 0.0
        %971 = vmatmul.mubr.f32.gmra.mrb[0].mxu0 %v904
        %v972 = vpop.f32.mrb[0].mxu0
        %v973 = vadd.f32 0.0, %v972
        %v974 = vpop.f32.mrb[0].mxu0
        %975 = vdwg.mxu0
        %v977 = vsel %vm634, %v973, 0
        %979 = vmatprep.subr.mxu0 0.0
        %980 = vmatpush1.msra.mxu0 %v628
        %981 = vmatprep.subr.mxu0 0.0
        %982 = vmatpush1.msra.mxu0 %v629
        %983 = vmatprep.subr.mxu0 0.0
        %984 = vmatpush1.msra.mxu0 0.0
        %985 = vmatprep.subr.mxu0 0.0
        %986 = vmatpush1.msra.mxu0 0.0
        %987 = vmatprep.subr.mxu0 0.0
        %988 = vmatpush1.msra.mxu0 0.0
        %989 = vmatprep.subr.mxu0 0.0
        %990 = vmatpush1.msra.mxu0 0.0
        %991 = vmatprep.subr.mxu0 0.0
        %992 = vmatpush1.msra.mxu0 0.0
        %993 = vmatprep.subr.mxu0 0.0
        %994 = vmatpush1.msra.mxu0 0.0
        %995 = vmatprep.subr.mxu0 0.0
        %996 = vmatpush1.msra.mxu0 0.0
        %997 = vmatprep.subr.mxu0 0.0
        %998 = vmatpush1.msra.mxu0 0.0
        %999 = vmatprep.subr.mxu0 0.0
        %1000 = vmatpush1.msra.mxu0 0.0
        %1001 = vmatprep.subr.mxu0 0.0
        %1002 = vmatpush1.msra.mxu0 0.0
        %1003 = vmatprep.subr.mxu0 0.0
        %1004 = vmatpush1.msra.mxu0 0.0
        %1005 = vmatprep.subr.mxu0 0.0
        %1006 = vmatpush1.msra.mxu0 0.0
        %1007 = vmatprep.subr.mxu0 0.0
        %1008 = vmatpush1.msra.mxu0 0.0
        %1009 = vmatprep.subr.mxu0 0.0
        %1010 = vmatpush1.msra.mxu0 0.0
        %1011 = vmatprep.subr.mxu0 0.0
        %1012 = vmatpush1.msra.mxu0 0.0
        %1013 = vmatprep.subr.mxu0 0.0
        %1014 = vmatpush1.msra.mxu0 0.0
        %1015 = vmatprep.subr.mxu0 0.0
        %1016 = vmatpush1.msra.mxu0 0.0
        %1017 = vmatprep.subr.mxu0 0.0
        %1018 = vmatpush1.msra.mxu0 0.0
        %1019 = vmatprep.subr.mxu0 0.0
        %1020 = vmatpush1.msra.mxu0 0.0
        %1021 = vmatprep.subr.mxu0 0.0
        %1022 = vmatpush1.msra.mxu0 0.0
        %1023 = vmatprep.subr.mxu0 0.0
        %1024 = vmatpush1.msra.mxu0 0.0
        %1025 = vmatprep.subr.mxu0 0.0
        %1026 = vmatpush1.msra.mxu0 0.0
        %1027 = vmatprep.subr.mxu0 0.0
        %1028 = vmatpush1.msra.mxu0 0.0
        %1029 = vmatprep.subr.mxu0 0.0
        %1030 = vmatpush1.msra.mxu0 0.0
        %1031 = vmatprep.subr.mxu0 0.0
        %1032 = vmatpush1.msra.mxu0 0.0
        %1033 = vmatprep.subr.mxu0 0.0
        %1034 = vmatpush1.msra.mxu0 0.0
        %1035 = vmatprep.subr.mxu0 0.0
        %1036 = vmatpush1.msra.mxu0 0.0
        %1037 = vmatprep.subr.mxu0 0.0
        %1038 = vmatpush1.msra.mxu0 0.0
        %1039 = vmatprep.subr.mxu0 0.0
        %1040 = vmatpush1.msra.mxu0 0.0
        %1041 = vmatprep.subr.mxu0 0.0
        %1042 = vmatpush1.msra.mxu0 0.0
        %1043 = vmatprep.mubr.f32.mxu0 0.0
        %1044 = vmatmul.mubr.f32.gmra.mrb[0].mxu0 %v977
        %v1045 = vpop.f32.mrb[0].mxu0
        %v1046 = vadd.f32 0.0, %v1045
        %v1047 = vpop.f32.mrb[0].mxu0
        %1048 = vdwg.mxu0
        %v1050 = vsel %vm634, %v801, 0
        %1052 = vmatprep.subr.mxu0 0.0
        %1053 = vmatpush1.msra.mxu0 %v626
        %1054 = vmatprep.subr.mxu0 0.0
        %1055 = vmatpush1.msra.mxu0 %v627
        %1056 = vmatprep.subr.mxu0 0.0
        %1057 = vmatpush1.msra.mxu0 0.0
        %1058 = vmatprep.subr.mxu0 0.0
        %1059 = vmatpush1.msra.mxu0 0.0
        %1060 = vmatprep.subr.mxu0 0.0
        %1061 = vmatpush1.msra.mxu0 0.0
        %1062 = vmatprep.subr.mxu0 0.0
        %1063 = vmatpush1.msra.mxu0 0.0
        %1064 = vmatprep.subr.mxu0 0.0
        %1065 = vmatpush1.msra.mxu0 0.0
        %1066 = vmatprep.subr.mxu0 0.0
        %1067 = vmatpush1.msra.mxu0 0.0
        %1068 = vmatprep.subr.mxu0 0.0
        %1069 = vmatpush1.msra.mxu0 0.0
        %1070 = vmatprep.subr.mxu0 0.0
        %1071 = vmatpush1.msra.mxu0 0.0
        %1072 = vmatprep.subr.mxu0 0.0
        %1073 = vmatpush1.msra.mxu0 0.0
        %1074 = vmatprep.subr.mxu0 0.0
        %1075 = vmatpush1.msra.mxu0 0.0
        %1076 = vmatprep.subr.mxu0 0.0
        %1077 = vmatpush1.msra.mxu0 0.0
        %1078 = vmatprep.subr.mxu0 0.0
        %1079 = vmatpush1.msra.mxu0 0.0
        %1080 = vmatprep.subr.mxu0 0.0
        %1081 = vmatpush1.msra.mxu0 0.0
        %1082 = vmatprep.subr.mxu0 0.0
        %1083 = vmatpush1.msra.mxu0 0.0
        %1084 = vmatprep.subr.mxu0 0.0
        %1085 = vmatpush1.msra.mxu0 0.0
        %1086 = vmatprep.subr.mxu0 0.0
        %1087 = vmatpush1.msra.mxu0 0.0
        %1088 = vmatprep.subr.mxu0 0.0
        %1089 = vmatpush1.msra.mxu0 0.0
        %1090 = vmatprep.subr.mxu0 0.0
        %1091 = vmatpush1.msra.mxu0 0.0
        %1092 = vmatprep.subr.mxu0 0.0
        %1093 = vmatpush1.msra.mxu0 0.0
        %1094 = vmatprep.subr.mxu0 0.0
        %1095 = vmatpush1.msra.mxu0 0.0
        %1096 = vmatprep.subr.mxu0 0.0
        %1097 = vmatpush1.msra.mxu0 0.0
        %1098 = vmatprep.subr.mxu0 0.0
        %1099 = vmatpush1.msra.mxu0 0.0
        %1100 = vmatprep.subr.mxu0 0.0
        %1101 = vmatpush1.msra.mxu0 0.0
        %1102 = vmatprep.subr.mxu0 0.0
        %1103 = vmatpush1.msra.mxu0 0.0
        %1104 = vmatprep.subr.mxu0 0.0
        %1105 = vmatpush1.msra.mxu0 0.0
        %1106 = vmatprep.subr.mxu0 0.0
        %1107 = vmatpush1.msra.mxu0 0.0
        %1108 = vmatprep.subr.mxu0 0.0
        %1109 = vmatpush1.msra.mxu0 0.0
        %1110 = vmatprep.subr.mxu0 0.0
        %1111 = vmatpush1.msra.mxu0 0.0
        %1112 = vmatprep.subr.mxu0 0.0
        %1113 = vmatpush1.msra.mxu0 0.0
        %1114 = vmatprep.subr.mxu0 0.0
        %1115 = vmatpush1.msra.mxu0 0.0
        %1116 = vmatprep.mubr.f32.mxu0 0.0
        %1117 = vmatmul.mubr.f32.gmra.mrb[0].mxu0 %v1050
        %v1118 = vpop.f32.mrb[0].mxu0
        %v1119 = vadd.f32 %v1046, %v1118
        %v1120 = vpop.f32.mrb[0].mxu0
        %1121 = vdwg.mxu0
        %1122 = vrot.lane.b32.xlu0 %v527, 96
        %v1123 = vpop.permute.xlu0 %1122
        %1124 = vrot.lane.b32.xlu0 %v618, 96
        %v1125 = vpop.permute.xlu0 %1124
        %1126 = vrot.lane.b32.xlu0 %v623, 96
        %v1127 = vpop.permute.xlu0 %1126
        %v1128 = vsel %vm634, %v1123, 0
        %v1130 = vsel %vm634, %v1125, 0
        %v1132 = vsel %vm634, %v1127, 0
        %1134 = vmatprep.subr.mxu0 0.0
        %1135 = vmatpush1.xpose.msra.mxu0 %v1130
        %1136 = vmatprep.subr.mxu0 0.0
        %1137 = vmatpush1.xpose.msra.mxu0 %v1132
        %1138 = vmatprep.subr.mxu0 0.0
        %1139 = vmatpush1.xpose.msra.mxu0 0.0
        %1140 = vmatprep.subr.mxu0 0.0
        %1141 = vmatpush1.xpose.msra.mxu0 0.0
        %1142 = vmatprep.subr.mxu0 0.0
        %1143 = vmatpush1.xpose.msra.mxu0 0.0
        %1144 = vmatprep.subr.mxu0 0.0
        %1145 = vmatpush1.xpose.msra.mxu0 0.0
        %1146 = vmatprep.subr.mxu0 0.0
        %1147 = vmatpush1.xpose.msra.mxu0 0.0
        %1148 = vmatprep.subr.mxu0 0.0
        %1149 = vmatpush1.xpose.msra.mxu0 0.0
        %1150 = vmatprep.subr.mxu0 0.0
        %1151 = vmatpush1.xpose.msra.mxu0 0.0
        %1152 = vmatprep.subr.mxu0 0.0
        %1153 = vmatpush1.xpose.msra.mxu0 0.0
        %1154 = vmatprep.subr.mxu0 0.0
        %1155 = vmatpush1.xpose.msra.mxu0 0.0
        %1156 = vmatprep.subr.mxu0 0.0
        %1157 = vmatpush1.xpose.msra.mxu0 0.0
        %1158 = vmatprep.subr.mxu0 0.0
        %1159 = vmatpush1.xpose.msra.mxu0 0.0
        %1160 = vmatprep.subr.mxu0 0.0
        %1161 = vmatpush1.xpose.msra.mxu0 0.0
        %1162 = vmatprep.subr.mxu0 0.0
        %1163 = vmatpush1.xpose.msra.mxu0 0.0
        %1164 = vmatprep.subr.mxu0 0.0
        %1165 = vmatpush1.xpose.msra.mxu0 0.0
        %1166 = vmatprep.subr.mxu0 0.0
        %1167 = vmatpush1.xpose.msra.mxu0 0.0
        %1168 = vmatprep.subr.mxu0 0.0
        %1169 = vmatpush1.xpose.msra.mxu0 0.0
        %1170 = vmatprep.subr.mxu0 0.0
        %1171 = vmatpush1.xpose.msra.mxu0 0.0
        %1172 = vmatprep.subr.mxu0 0.0
        %1173 = vmatpush1.xpose.msra.mxu0 0.0
        %1174 = vmatprep.subr.mxu0 0.0
        %1175 = vmatpush1.xpose.msra.mxu0 0.0
        %1176 = vmatprep.subr.mxu0 0.0
        %1177 = vmatpush1.xpose.msra.mxu0 0.0
        %1178 = vmatprep.subr.mxu0 0.0
        %1179 = vmatpush1.xpose.msra.mxu0 0.0
        %1180 = vmatprep.subr.mxu0 0.0
        %1181 = vmatpush1.xpose.msra.mxu0 0.0
        %1182 = vmatprep.subr.mxu0 0.0
        %1183 = vmatpush1.xpose.msra.mxu0 0.0
        %1184 = vmatprep.subr.mxu0 0.0
        %1185 = vmatpush1.xpose.msra.mxu0 0.0
        %1186 = vmatprep.subr.mxu0 0.0
        %1187 = vmatpush1.xpose.msra.mxu0 0.0
        %1188 = vmatprep.subr.mxu0 0.0
        %1189 = vmatpush1.xpose.msra.mxu0 0.0
        %1190 = vmatprep.subr.mxu0 0.0
        %1191 = vmatpush1.xpose.msra.mxu0 0.0
        %1192 = vmatprep.subr.mxu0 0.0
        %1193 = vmatpush1.xpose.msra.mxu0 0.0
        %1194 = vmatprep.subr.mxu0 0.0
        %1195 = vmatpush1.xpose.msra.mxu0 0.0
        %1196 = vmatprep.subr.mxu0 0.0
        %1197 = vmatpush1.xpose.msra.mxu0 0.0
        %1198 = vmatprep.mubr.f32.mxu0 0.0
        %1199 = vmatmul.mubr.f32.gmra.mrb[0].mxu0 %v1128
        %v1200 = vpop.f32.mrb[0].mxu0
        %v1201 = vadd.f32 0.0, %v1200
        %v1202 = vpop.f32.mrb[0].mxu0
        %1203 = vdwg.mxu0
        %v1204 = vsel %vm634, %v1201, -inf
        %1205 = vmax.xlane.f32.xlu0 %v1204
        %v1206 = vpop.xlane.xlu0 %1205
        %v1207 = vsub.f32 %v1201, %v1206
        %v1208 = vmul.f32 %v1207, 1.442695
        %v1209 = vpow.pop %v1208
        %v1210 = vsel %vm634, %v1209, 0.0
        %1211 = vadd.xlane.f32.xlu0 %v1210
        %v1212 = vpop.xlane.xlu0 %1211
        %v1213 = vrcp.pop %v1212
        %v1214 = vmul.f32 %v1209, %v1213
        %1215 = vrot.lane.b32.xlu0 %v618, 32
        %v1216 = vpop.permute.xlu0 %1215
        %1217 = vrot.lane.b32.xlu0 %v623, 32
        %v1218 = vpop.permute.xlu0 %1217
        %v1222 = vsel %vm634, %v1214, 0
        %1224 = vmatprep.subr.mxu0 0.0
        %1225 = vmatpush1.msra.mxu0 %v1216
        %1226 = vmatprep.subr.mxu0 0.0
        %1227 = vmatpush1.msra.mxu0 %v1218
        %1228 = vmatprep.subr.mxu0 0.0
        %1229 = vmatpush1.msra.mxu0 0.0
        %1230 = vmatprep.subr.mxu0 0.0
        %1231 = vmatpush1.msra.mxu0 0.0
        %1232 = vmatprep.subr.mxu0 0.0
        %1233 = vmatpush1.msra.mxu0 0.0
        %1234 = vmatprep.subr.mxu0 0.0
        %1235 = vmatpush1.msra.mxu0 0.0
        %1236 = vmatprep.subr.mxu0 0.0
        %1237 = vmatpush1.msra.mxu0 0.0
        %1238 = vmatprep.subr.mxu0 0.0
        %1239 = vmatpush1.msra.mxu0 0.0
        %1240 = vmatprep.subr.mxu0 0.0
        %1241 = vmatpush1.msra.mxu0 0.0
        %1242 = vmatprep.subr.mxu0 0.0
        %1243 = vmatpush1.msra.mxu0 0.0
        %1244 = vmatprep.subr.mxu0 0.0
        %1245 = vmatpush1.msra.mxu0 0.0
        %1246 = vmatprep.subr.mxu0 0.0
        %1247 = vmatpush1.msra.mxu0 0.0
        %1248 = vmatprep.subr.mxu0 0.0
        %1249 = vmatpush1.msra.mxu0 0.0
        %1250 = vmatprep.subr.mxu0 0.0
        %1251 = vmatpush1.msra.mxu0 0.0
        %1252 = vmatprep.subr.mxu0 0.0
        %1253 = vmatpush1.msra.mxu0 0.0
        %1254 = vmatprep.subr.mxu0 0.0
        %1255 = vmatpush1.msra.mxu0 0.0
        %1256 = vmatprep.subr.mxu0 0.0
        %1257 = vmatpush1.msra.mxu0 0.0
        %1258 = vmatprep.subr.mxu0 0.0
        %1259 = vmatpush1.msra.mxu0 0.0
        %1260 = vmatprep.subr.mxu0 0.0
        %1261 = vmatpush1.msra.mxu0 0.0
        %1262 = vmatprep.subr.mxu0 0.0
        %1263 = vmatpush1.msra.mxu0 0.0
        %1264 = vmatprep.subr.mxu0 0.0
        %1265 = vmatpush1.msra.mxu0 0.0
        %1266 = vmatprep.subr.mxu0 0.0
        %1267 = vmatpush1.msra.mxu0 0.0
        %1268 = vmatprep.subr.mxu0 0.0
        %1269 = vmatpush1.msra.mxu0 0.0
        %1270 = vmatprep.subr.mxu0 0.0
        %1271 = vmatpush1.msra.mxu0 0.0
        %1272 = vmatprep.subr.mxu0 0.0
        %1273 = vmatpush1.msra.mxu0 0.0
        %1274 = vmatprep.subr.mxu0 0.0
        %1275 = vmatpush1.msra.mxu0 0.0
        %1276 = vmatprep.subr.mxu0 0.0
        %1277 = vmatpush1.msra.mxu0 0.0
        %1278 = vmatprep.subr.mxu0 0.0
        %1279 = vmatpush1.msra.mxu0 0.0
        %1280 = vmatprep.subr.mxu0 0.0
        %1281 = vmatpush1.msra.mxu0 0.0
        %1282 = vmatprep.subr.mxu0 0.0
        %1283 = vmatpush1.msra.mxu0 0.0
        %1284 = vmatprep.subr.mxu0 0.0
        %1285 = vmatpush1.msra.mxu0 0.0
        %1286 = vmatprep.subr.mxu0 0.0
        %1287 = vmatpush1.msra.mxu0 0.0
        %1288 = vmatprep.mubr.f32.mxu0 0.0
        %1289 = vmatmul.mubr.f32.gmra.mrb[0].mxu0 %v1222
        %v1290 = vpop.f32.mrb[0].mxu0
        %v1291 = vadd.f32 0.0, %v1290
        %v1292 = vpop.f32.mrb[0].mxu0
        %1293 = vdwg.mxu0
        %v1295 = vsel %vm634, %v1291, 0
        %1297 = vmatprep.subr.mxu0 0.0
        %1298 = vmatpush1.msra.mxu0 %v630
        %1299 = vmatprep.subr.mxu0 0.0
        %1300 = vmatpush1.msra.mxu0 %v631
        %1301 = vmatprep.subr.mxu0 0.0
        %1302 = vmatpush1.msra.mxu0 0.0
        %1303 = vmatprep.subr.mxu0 0.0
        %1304 = vmatpush1.msra.mxu0 0.0
        %1305 = vmatprep.subr.mxu0 0.0
        %1306 = vmatpush1.msra.mxu0 0.0
        %1307 = vmatprep.subr.mxu0 0.0
        %1308 = vmatpush1.msra.mxu0 0.0
        %1309 = vmatprep.subr.mxu0 0.0
        %1310 = vmatpush1.msra.mxu0 0.0
        %1311 = vmatprep.subr.mxu0 0.0
        %1312 = vmatpush1.msra.mxu0 0.0
        %1313 = vmatprep.subr.mxu0 0.0
        %1314 = vmatpush1.msra.mxu0 0.0
        %1315 = vmatprep.subr.mxu0 0.0
        %1316 = vmatpush1.msra.mxu0 0.0
        %1317 = vmatprep.subr.mxu0 0.0
        %1318 = vmatpush1.msra.mxu0 0.0
        %1319 = vmatprep.subr.mxu0 0.0
        %1320 = vmatpush1.msra.mxu0 0.0
        %1321 = vmatprep.subr.mxu0 0.0
        %1322 = vmatpush1.msra.mxu0 0.0
        %1323 = vmatprep.subr.mxu0 0.0
        %1324 = vmatpush1.msra.mxu0 0.0
        %1325 = vmatprep.subr.mxu0 0.0
        %1326 = vmatpush1.msra.mxu0 0.0
        %1327 = vmatprep.subr.mxu0 0.0
        %1328 = vmatpush1.msra.mxu0 0.0
        %1329 = vmatprep.subr.mxu0 0.0
        %1330 = vmatpush1.msra.mxu0 0.0
        %1331 = vmatprep.subr.mxu0 0.0
        %1332 = vmatpush1.msra.mxu0 0.0
        %1333 = vmatprep.subr.mxu0 0.0
        %1334 = vmatpush1.msra.mxu0 0.0
        %1335 = vmatprep.subr.mxu0 0.0
        %1336 = vmatpush1.msra.mxu0 0.0
        %1337 = vmatprep.subr.mxu0 0.0
        %1338 = vmatpush1.msra.mxu0 0.0
        %1339 = vmatprep.subr.mxu0 0.0
        %1340 = vmatpush1.msra.mxu0 0.0
        %1341 = vmatprep.subr.mxu0 0.0
        %1342 = vmatpush1.msra.mxu0 0.0
        %1343 = vmatprep.subr.mxu0 0.0
        %1344 = vmatpush1.msra.mxu0 0.0
        %1345 = vmatprep.subr.mxu0 0.0
        %1346 = vmatpush1.msra.mxu0 0.0
        %1347 = vmatprep.subr.mxu0 0.0
        %1348 = vmatpush1.msra.mxu0 0.0
        %1349 = vmatprep.subr.mxu0 0.0
        %1350 = vmatpush1.msra.mxu0 0.0
        %1351 = vmatprep.subr.mxu0 0.0
        %1352 = vmatpush1.msra.mxu0 0.0
        %1353 = vmatprep.subr.mxu0 0.0
        %1354 = vmatpush1.msra.mxu0 0.0
        %1355 = vmatprep.subr.mxu0 0.0
        %1356 = vmatpush1.msra.mxu0 0.0
        %1357 = vmatprep.subr.mxu0 0.0
        %1358 = vmatpush1.msra.mxu0 0.0
        %1359 = vmatprep.subr.mxu0 0.0
        %1360 = vmatpush1.msra.mxu0 0.0
        %1361 = vmatprep.mubr.f32.mxu0 0.0
        %1362 = vmatmul.mubr.f32.gmra.mrb[0].mxu0 %v1295
        %v1363 = vpop.f32.mrb[0].mxu0
        %v1364 = vadd.f32 0.0, %v1363
        %v1365 = vpop.f32.mrb[0].mxu0
        %1366 = vdwg.mxu0
        %v1367 = vadd.f32 %v1119, %v1364
        %1368 = vrot.lane.b32.xlu0 %v527, 80
        %v1369 = vpop.permute.xlu0 %1368
        %1370 = vrot.lane.b32.xlu0 %v618, 80
        %v1371 = vpop.permute.xlu0 %1370
        %1372 = vrot.lane.b32.xlu0 %v623, 80
        %v1373 = vpop.permute.xlu0 %1372
        %v1374 = vsel %vm634, %v1369, 0
        %v1376 = vsel %vm634, %v1371, 0
        %v1378 = vsel %vm634, %v1373, 0
        %1380 = vmatprep.subr.mxu0 0.0
        %1381 = vmatpush1.xpose.msra.mxu0 %v1376
        %1382 = vmatprep.subr.mxu0 0.0
        %1383 = vmatpush1.xpose.msra.mxu0 %v1378
        %1384 = vmatprep.subr.mxu0 0.0
        %1385 = vmatpush1.xpose.msra.mxu0 0.0
        %1386 = vmatprep.subr.mxu0 0.0
        %1387 = vmatpush1.xpose.msra.mxu0 0.0
        %1388 = vmatprep.subr.mxu0 0.0
        %1389 = vmatpush1.xpose.msra.mxu0 0.0
        %1390 = vmatprep.subr.mxu0 0.0
        %1391 = vmatpush1.xpose.msra.mxu0 0.0
        %1392 = vmatprep.subr.mxu0 0.0
        %1393 = vmatpush1.xpose.msra.mxu0 0.0
        %1394 = vmatprep.subr.mxu0 0.0
        %1395 = vmatpush1.xpose.msra.mxu0 0.0
        %1396 = vmatprep.subr.mxu0 0.0
        %1397 = vmatpush1.xpose.msra.mxu0 0.0
        %1398 = vmatprep.subr.mxu0 0.0
        %1399 = vmatpush1.xpose.msra.mxu0 0.0
        %1400 = vmatprep.subr.mxu0 0.0
        %1401 = vmatpush1.xpose.msra.mxu0 0.0
        %1402 = vmatprep.subr.mxu0 0.0
        %1403 = vmatpush1.xpose.msra.mxu0 0.0
        %1404 = vmatprep.subr.mxu0 0.0
        %1405 = vmatpush1.xpose.msra.mxu0 0.0
        %1406 = vmatprep.subr.mxu0 0.0
        %1407 = vmatpush1.xpose.msra.mxu0 0.0
        %1408 = vmatprep.subr.mxu0 0.0
        %1409 = vmatpush1.xpose.msra.mxu0 0.0
        %1410 = vmatprep.subr.mxu0 0.0
        %1411 = vmatpush1.xpose.msra.mxu0 0.0
        %1412 = vmatprep.subr.mxu0 0.0
        %1413 = vmatpush1.xpose.msra.mxu0 0.0
        %1414 = vmatprep.subr.mxu0 0.0
        %1415 = vmatpush1.xpose.msra.mxu0 0.0
        %1416 = vmatprep.subr.mxu0 0.0
        %1417 = vmatpush1.xpose.msra.mxu0 0.0
        %1418 = vmatprep.subr.mxu0 0.0
        %1419 = vmatpush1.xpose.msra.mxu0 0.0
        %1420 = vmatprep.subr.mxu0 0.0
        %1421 = vmatpush1.xpose.msra.mxu0 0.0
        %1422 = vmatprep.subr.mxu0 0.0
        %1423 = vmatpush1.xpose.msra.mxu0 0.0
        %1424 = vmatprep.subr.mxu0 0.0
        %1425 = vmatpush1.xpose.msra.mxu0 0.0
        %1426 = vmatprep.subr.mxu0 0.0
        %1427 = vmatpush1.xpose.msra.mxu0 0.0
        %1428 = vmatprep.subr.mxu0 0.0
        %1429 = vmatpush1.xpose.msra.mxu0 0.0
        %1430 = vmatprep.subr.mxu0 0.0
        %1431 = vmatpush1.xpose.msra.mxu0 0.0
        %1432 = vmatprep.subr.mxu0 0.0
        %1433 = vmatpush1.xpose.msra.mxu0 0.0
        %1434 = vmatprep.subr.mxu0 0.0
        %1435 = vmatpush1.xpose.msra.mxu0 0.0
        %1436 = vmatprep.subr.mxu0 0.0
        %1437 = vmatpush1.xpose.msra.mxu0 0.0
        %1438 = vmatprep.subr.mxu0 0.0
        %1439 = vmatpush1.xpose.msra.mxu0 0.0
        %1440 = vmatprep.subr.mxu0 0.0
        %1441 = vmatpush1.xpose.msra.mxu0 0.0
        %1442 = vmatprep.subr.mxu0 0.0
        %1443 = vmatpush1.xpose.msra.mxu0 0.0
        %1444 = vmatprep.mubr.f32.mxu0 0.0
        %1445 = vmatmul.mubr.f32.gmra.mrb[0].mxu0 %v1374
        %v1446 = vpop.f32.mrb[0].mxu0
        %v1447 = vadd.f32 0.0, %v1446
        %v1448 = vpop.f32.mrb[0].mxu0
        %1449 = vdwg.mxu0
        %v1450 = vsel %vm634, %v1447, -inf
        %1451 = vmax.xlane.f32.xlu0 %v1450
        %v1452 = vpop.xlane.xlu0 %1451
        %v1453 = vsub.f32 %v1447, %v1452
        %v1454 = vmul.f32 %v1453, 1.442695
        %v1455 = vpow.pop %v1454
        %v1456 = vsel %vm634, %v1455, 0.0
        %1457 = vadd.xlane.f32.xlu0 %v1456
        %v1458 = vpop.xlane.xlu0 %1457
        %v1459 = vrcp.pop %v1458
        %v1460 = vmul.f32 %v1455, %v1459
        %1461 = vrot.lane.b32.xlu0 %v618, 16
        %v1462 = vpop.permute.xlu0 %1461
        %1463 = vrot.lane.b32.xlu0 %v623, 16
        %v1464 = vpop.permute.xlu0 %1463
        %v1468 = vsel %vm634, %v1460, 0
        %1470 = vmatprep.subr.mxu0 0.0
        %1471 = vmatpush1.msra.mxu0 %v1462
        %1472 = vmatprep.subr.mxu0 0.0
        %1473 = vmatpush1.msra.mxu0 %v1464
        %1474 = vmatprep.subr.mxu0 0.0
        %1475 = vmatpush1.msra.mxu0 0.0
        %1476 = vmatprep.subr.mxu0 0.0
        %1477 = vmatpush1.msra.mxu0 0.0
        %1478 = vmatprep.subr.mxu0 0.0
        %1479 = vmatpush1.msra.mxu0 0.0
        %1480 = vmatprep.subr.mxu0 0.0
        %1481 = vmatpush1.msra.mxu0 0.0
        %1482 = vmatprep.subr.mxu0 0.0
        %1483 = vmatpush1.msra.mxu0 0.0
        %1484 = vmatprep.subr.mxu0 0.0
        %1485 = vmatpush1.msra.mxu0 0.0
        %1486 = vmatprep.subr.mxu0 0.0
        %1487 = vmatpush1.msra.mxu0 0.0
        %1488 = vmatprep.subr.mxu0 0.0
        %1489 = vmatpush1.msra.mxu0 0.0
        %1490 = vmatprep.subr.mxu0 0.0
        %1491 = vmatpush1.msra.mxu0 0.0
        %1492 = vmatprep.subr.mxu0 0.0
        %1493 = vmatpush1.msra.mxu0 0.0
        %1494 = vmatprep.subr.mxu0 0.0
        %1495 = vmatpush1.msra.mxu0 0.0
        %1496 = vmatprep.subr.mxu0 0.0
        %1497 = vmatpush1.msra.mxu0 0.0
        %1498 = vmatprep.subr.mxu0 0.0
        %1499 = vmatpush1.msra.mxu0 0.0
        %1500 = vmatprep.subr.mxu0 0.0
        %1501 = vmatpush1.msra.mxu0 0.0
        %1502 = vmatprep.subr.mxu0 0.0
        %1503 = vmatpush1.msra.mxu0 0.0
        %1504 = vmatprep.subr.mxu0 0.0
        %1505 = vmatpush1.msra.mxu0 0.0
        %1506 = vmatprep.subr.mxu0 0.0
        %1507 = vmatpush1.msra.mxu0 0.0
        %1508 = vmatprep.subr.mxu0 0.0
        %1509 = vmatpush1.msra.mxu0 0.0
        %1510 = vmatprep.subr.mxu0 0.0
        %1511 = vmatpush1.msra.mxu0 0.0
        %1512 = vmatprep.subr.mxu0 0.0
        %1513 = vmatpush1.msra.mxu0 0.0
        %1514 = vmatprep.subr.mxu0 0.0
        %1515 = vmatpush1.msra.mxu0 0.0
        %1516 = vmatprep.subr.mxu0 0.0
        %1517 = vmatpush1.msra.mxu0 0.0
        %1518 = vmatprep.subr.mxu0 0.0
        %1519 = vmatpush1.msra.mxu0 0.0
        %1520 = vmatprep.subr.mxu0 0.0
        %1521 = vmatpush1.msra.mxu0 0.0
        %1522 = vmatprep.subr.mxu0 0.0
        %1523 = vmatpush1.msra.mxu0 0.0
        %1524 = vmatprep.subr.mxu0 0.0
        %1525 = vmatpush1.msra.mxu0 0.0
        %1526 = vmatprep.subr.mxu0 0.0
        %1527 = vmatpush1.msra.mxu0 0.0
        %1528 = vmatprep.subr.mxu0 0.0
        %1529 = vmatpush1.msra.mxu0 0.0
        %1530 = vmatprep.subr.mxu0 0.0
        %1531 = vmatpush1.msra.mxu0 0.0
        %1532 = vmatprep.subr.mxu0 0.0
        %1533 = vmatpush1.msra.mxu0 0.0
        %1534 = vmatprep.mubr.f32.mxu0 0.0
        %1535 = vmatmul.mubr.f32.gmra.mrb[0].mxu0 %v1468
        %v1536 = vpop.f32.mrb[0].mxu0
        %v1537 = vadd.f32 0.0, %v1536
        %v1538 = vpop.f32.mrb[0].mxu0
        %1539 = vdwg.mxu0
        %v1541 = vsel %vm634, %v1537, 0
        %1543 = vmatprep.subr.mxu0 0.0
        %1544 = vmatpush1.msra.mxu0 %v632
        %1545 = vmatprep.subr.mxu0 0.0
        %1546 = vmatpush1.msra.mxu0 %v633
        %1547 = vmatprep.subr.mxu0 0.0
        %1548 = vmatpush1.msra.mxu0 0.0
        %1549 = vmatprep.subr.mxu0 0.0
        %1550 = vmatpush1.msra.mxu0 0.0
        %1551 = vmatprep.subr.mxu0 0.0
        %1552 = vmatpush1.msra.mxu0 0.0
        %1553 = vmatprep.subr.mxu0 0.0
        %1554 = vmatpush1.msra.mxu0 0.0
        %1555 = vmatprep.subr.mxu0 0.0
        %1556 = vmatpush1.msra.mxu0 0.0
        %1557 = vmatprep.subr.mxu0 0.0
        %1558 = vmatpush1.msra.mxu0 0.0
        %1559 = vmatprep.subr.mxu0 0.0
        %1560 = vmatpush1.msra.mxu0 0.0
        %1561 = vmatprep.subr.mxu0 0.0
        %1562 = vmatpush1.msra.mxu0 0.0
        %1563 = vmatprep.subr.mxu0 0.0
        %1564 = vmatpush1.msra.mxu0 0.0
        %1565 = vmatprep.subr.mxu0 0.0
        %1566 = vmatpush1.msra.mxu0 0.0
        %1567 = vmatprep.subr.mxu0 0.0
        %1568 = vmatpush1.msra.mxu0 0.0
        %1569 = vmatprep.subr.mxu0 0.0
        %1570 = vmatpush1.msra.mxu0 0.0
        %1571 = vmatprep.subr.mxu0 0.0
        %1572 = vmatpush1.msra.mxu0 0.0
        %1573 = vmatprep.subr.mxu0 0.0
        %1574 = vmatpush1.msra.mxu0 0.0
        %1575 = vmatprep.subr.mxu0 0.0
        %1576 = vmatpush1.msra.mxu0 0.0
        %1577 = vmatprep.subr.mxu0 0.0
        %1578 = vmatpush1.msra.mxu0 0.0
        %1579 = vmatprep.subr.mxu0 0.0
        %1580 = vmatpush1.msra.mxu0 0.0
        %1581 = vmatprep.subr.mxu0 0.0
        %1582 = vmatpush1.msra.mxu0 0.0
        %1583 = vmatprep.subr.mxu0 0.0
        %1584 = vmatpush1.msra.mxu0 0.0
        %1585 = vmatprep.subr.mxu0 0.0
        %1586 = vmatpush1.msra.mxu0 0.0
        %1587 = vmatprep.subr.mxu0 0.0
        %1588 = vmatpush1.msra.mxu0 0.0
        %1589 = vmatprep.subr.mxu0 0.0
        %1590 = vmatpush1.msra.mxu0 0.0
        %1591 = vmatprep.subr.mxu0 0.0
        %1592 = vmatpush1.msra.mxu0 0.0
        %1593 = vmatprep.subr.mxu0 0.0
        %1594 = vmatpush1.msra.mxu0 0.0
        %1595 = vmatprep.subr.mxu0 0.0
        %1596 = vmatpush1.msra.mxu0 0.0
        %1597 = vmatprep.subr.mxu0 0.0
        %1598 = vmatpush1.msra.mxu0 0.0
        %1599 = vmatprep.subr.mxu0 0.0
        %1600 = vmatpush1.msra.mxu0 0.0
        %1601 = vmatprep.subr.mxu0 0.0
        %1602 = vmatpush1.msra.mxu0 0.0
        %1603 = vmatprep.subr.mxu0 0.0
        %1604 = vmatpush1.msra.mxu0 0.0
        %1605 = vmatprep.subr.mxu0 0.0
        %1606 = vmatpush1.msra.mxu0 0.0
        %1607 = vmatprep.mubr.f32.mxu0 0.0
        %1608 = vmatmul.mubr.f32.gmra.mrb[0].mxu0 %v1541
        %v1609 = vpop.f32.mrb[0].mxu0
        %v1610 = vadd.f32 0.0, %v1609
        %v1611 = vpop.f32.mrb[0].mxu0
        %1612 = vdwg.mxu0
        %v1613 = vadd.f32 %v1367, %v1610
        %v1614 = vlaneseq
        %v1615 = vshrl.u32 %v1614, 7
        %v1616 = vsub.s32 1, %v1615
        %v1617 = vrot.slane %v443, %v1616
        %v1618 = vadd.f32 %v1613, %v1617
        %v1619 = vadd.f32 %v1618, %v440
        %v1620 = vsel %vm456, %v1619, 0.0
        %1621 = vadd.xlane.f32.xlu0 %v1620
        %v1622 = vpop.xlane.xlu0 %1621
        %v1623 = vrcp.pop 64.0
        %v1624 = vmul.f32 %v1622, %v1623
        %v1625 = vsub.f32 %v1619, %v1624
        %v1626 = vmul.f32 %v1625, %v1625
        %v1627 = vsel %vm456, %v1626, 0.0
        %1628 = vadd.xlane.f32.xlu0 %v1627
        %v1629 = vpop.xlane.xlu0 %1628
        %v1630 = vmul.f32 %v1629, %v1623
        %v1631 = vadd.f32 %v1630, 1e-05
        %v1632 = vrsqrt.pop %v1631
        %v1633 = vmul.f32 %v1625, %v1632
        %v1634 = vlaneseq
        %v1635 = vshrl.u32 %v1634, 7
        %v1636 = vsub.s32 2, %v1635
        %v1637 = vrot.slane %v443, %v1636
        %v1638 = vmul.f32 %v1633, %v1637
        %v1639 = vlaneseq
        %v1640 = vshrl.u32 %v1639, 7
        %v1641 = vsub.s32 3, %v1640
        %v1642 = vrot.slane %v443, %v1641
        %v1643 = vadd.f32 %v1638, %v1642
        %v1644 = vld [vmem:[%s6] sm:$0xff]
        %v1645 = vld [vmem:[%s6 + $0x8] sm:$0xff]
        %v1646 = vld [vmem:[%s6 + $0x10] sm:$0xff]
        %v1647 = vld [vmem:[%s6 + $0x18] sm:$0xff]
        %v1648 = vld [vmem:[%s6 + $0x20] sm:$0xff]
        %v1649 = vld [vmem:[%s6 + $0x28] sm:$0xff]
        %v1650 = vld [vmem:[%s6 + $0x30] sm:$0xff]
        %v1651 = vld [vmem:[%s6 + $0x38] sm:$0xff]
        %v1652 = vld [vmem:[%s6 + $0x40] sm:$0xff]
        %v1653 = vld [vmem:[%s6 + $0x48] sm:$0xff]
        %v1654 = vld [vmem:[%s6 + $0x50] sm:$0xff]
        %v1655 = vld [vmem:[%s6 + $0x58] sm:$0xff]
        %v1656 = vld [vmem:[%s6 + $0x60] sm:$0xff]
        %v1657 = vld [vmem:[%s6 + $0x68] sm:$0xff]
        %v1658 = vld [vmem:[%s6 + $0x70] sm:$0xff]
        %v1659 = vld [vmem:[%s6 + $0x78] sm:$0xff]
        %v1660 = vld [vmem:[%s6 + $0x80] sm:$0xff]
        %v1661 = vld [vmem:[%s6 + $0x88] sm:$0xff]
        %v1662 = vld [vmem:[%s6 + $0x90] sm:$0xff]
        %v1663 = vld [vmem:[%s6 + $0x98] sm:$0xff]
        %v1664 = vld [vmem:[%s6 + $0xa0] sm:$0xff]
        %v1665 = vld [vmem:[%s6 + $0xa8] sm:$0xff]
        %v1666 = vld [vmem:[%s6 + $0xb0] sm:$0xff]
        %v1667 = vld [vmem:[%s6 + $0xb8] sm:$0xff]
        %v1668 = vld [vmem:[%s6 + $0xc0] sm:$0xff]
        %v1669 = vld [vmem:[%s6 + $0xc8] sm:$0xff]
        %v1670 = vld [vmem:[%s6 + $0xd0] sm:$0xff]
        %v1671 = vld [vmem:[%s6 + $0xd8] sm:$0xff]
        %v1672 = vld [vmem:[%s6 + $0xe0] sm:$0xff]
        %v1673 = vld [vmem:[%s6 + $0xe8] sm:$0xff]
        %v1674 = vld [vmem:[%s6 + $0xf0] sm:$0xff]
        %v1675 = vld [vmem:[%s6 + $0xf8] sm:$0xff]
        %v1676 = vld [vmem:[%s6 + $0x100] sm:$0xff]
        %v1677 = vld [vmem:[%s6 + $0x108] sm:$0xff]
        %v1678 = vld [vmem:[%s6 + $0x110] sm:$0xff]
        %v1679 = vld [vmem:[%s6 + $0x118] sm:$0xff]
        %v1680 = vld [vmem:[%s6 + $0x120] sm:$0xff]
        %v1681 = vld [vmem:[%s6 + $0x128] sm:$0xff]
        %v1682 = vld [vmem:[%s6 + $0x130] sm:$0xff]
        %v1683 = vld [vmem:[%s6 + $0x138] sm:$0xff]
        %v1684 = vld [vmem:[%s6 + $0x140] sm:$0xff]
        %v1685 = vld [vmem:[%s6 + $0x148] sm:$0xff]
        %v1686 = vld [vmem:[%s6 + $0x150] sm:$0xff]
        %v1687 = vld [vmem:[%s6 + $0x158] sm:$0xff]
        %v1688 = vld [vmem:[%s6 + $0x160] sm:$0xff]
        %v1689 = vld [vmem:[%s6 + $0x168] sm:$0xff]
        %v1690 = vld [vmem:[%s6 + $0x170] sm:$0xff]
        %v1691 = vld [vmem:[%s6 + $0x178] sm:$0xff]
        %v1692 = vld [vmem:[%s6 + $0x180] sm:$0xff]
        %v1693 = vld [vmem:[%s6 + $0x188] sm:$0xff]
        %v1694 = vld [vmem:[%s6 + $0x190] sm:$0xff]
        %v1695 = vld [vmem:[%s6 + $0x198] sm:$0xff]
        %v1696 = vld [vmem:[%s6 + $0x1a0] sm:$0xff]
        %v1697 = vld [vmem:[%s6 + $0x1a8] sm:$0xff]
        %v1698 = vld [vmem:[%s6 + $0x1b0] sm:$0xff]
        %v1699 = vld [vmem:[%s6 + $0x1b8] sm:$0xff]
        %v1700 = vld [vmem:[%s6 + $0x1c0] sm:$0xff]
        %v1701 = vld [vmem:[%s6 + $0x1c8] sm:$0xff]
        %v1702 = vld [vmem:[%s6 + $0x1d0] sm:$0xff]
        %v1703 = vld [vmem:[%s6 + $0x1d8] sm:$0xff]
        %v1704 = vld [vmem:[%s6 + $0x1e0] sm:$0xff]
        %v1705 = vld [vmem:[%s6 + $0x1e8] sm:$0xff]
        %v1706 = vld [vmem:[%s6 + $0x1f0] sm:$0xff]
        %v1707 = vld [vmem:[%s6 + $0x1f8] sm:$0xff]
        %v1708 = vld [vmem:[%s6 + $0x200] sm:$0xff]
        %v1709 = vld [vmem:[%s6 + $0x208] sm:$0xff]
        %v1710 = vld [vmem:[%s6 + $0x210] sm:$0xff]
        %v1711 = vld [vmem:[%s6 + $0x218] sm:$0xff]
        %v1712 = vld [vmem:[%s6 + $0x220] sm:$0xff]
        %v1713 = vld [vmem:[%s6 + $0x228] sm:$0xff]
        %v1714 = vld [vmem:[%s6 + $0x230] sm:$0xff]
        %v1715 = vld [vmem:[%s6 + $0x238] sm:$0xff]
        %v1716 = vld [vmem:[%s7] sm:$0xff]
        %v1717 = vld [vmem:[%s7 + $0x8] sm:$0x1]
        %v1720 = vlaneseq
        %v1721 = vshrl.u32 %v1720, 7
        %v1722 = vsub.s32 0, %v1721
        %v1723 = vrot.slane %v1716, %v1722
        %v1724 = vlaneseq
        %v1725 = vshrl.u32 %v1724, 7
        %v1726 = vsub.s32 1, %v1725
        %v1727 = vrot.slane %v1716, %v1726
        %v1728 = vlaneseq
        %v1729 = vshrl.u32 %v1728, 7
        %v1730 = vsub.s32 2, %v1729
        %v1731 = vrot.slane %v1716, %v1730
        %v1732 = vlaneseq
        %v1733 = vshrl.u32 %v1732, 7
        %v1734 = vsub.s32 3, %v1733
        %v1735 = vrot.slane %v1716, %v1734
        %v1736 = vlaneseq
        %v1737 = vshrl.u32 %v1736, 7
        %v1738 = vsub.s32 4, %v1737
        %v1739 = vrot.slane %v1716, %v1738
        %v1740 = vlaneseq
        %v1741 = vshrl.u32 %v1740, 7
        %v1742 = vsub.s32 5, %v1741
        %v1743 = vrot.slane %v1716, %v1742
        %v1744 = vlaneseq
        %v1745 = vshrl.u32 %v1744, 7
        %v1746 = vsub.s32 6, %v1745
        %v1747 = vrot.slane %v1716, %v1746
        %v1748 = vlaneseq
        %v1749 = vshrl.u32 %v1748, 7
        %v1750 = vsub.s32 7, %v1749
        %v1751 = vrot.slane %v1716, %v1750
        %v1752 = vlaneseq
        %v1753 = vshrl.u32 %v1752, 7
        %v1754 = vsub.s32 0, %v1753
        %v1755 = vrot.slane %v1717, %v1754
        %v1766 = vsel %vm456, %v1643, 0
        %1768 = vmatprep.subr.mxu0 %v1645
        %1769 = vmatpush1.msra.mxu0 %v1644
        %1770 = vmatprep.subr.mxu0 %v1654
        %1771 = vmatpush1.msra.mxu0 %v1653
        %1772 = vmatprep.subr.mxu0 %v1663
        %1773 = vmatpush1.msra.mxu0 %v1662
        %1774 = vmatprep.subr.mxu0 %v1672
        %1775 = vmatpush1.msra.mxu0 %v1671
        %1776 = vmatprep.subr.mxu0 %v1681
        %1777 = vmatpush1.msra.mxu0 %v1680
        %1778 = vmatprep.subr.mxu0 %v1690
        %1779 = vmatpush1.msra.mxu0 %v1689
        %1780 = vmatprep.subr.mxu0 %v1699
        %1781 = vmatpush1.msra.mxu0 %v1698
        %1782 = vmatprep.subr.mxu0 %v1708
        %1783 = vmatpush1.msra.mxu0 %v1707
        %1784 = vmatprep.subr.mxu0 0.0
        %1785 = vmatpush1.msra.mxu0 0.0
        %1786 = vmatprep.subr.mxu0 0.0
        %1787 = vmatpush1.msra.mxu0 0.0
        %1788 = vmatprep.subr.mxu0 0.0
        %1789 = vmatpush1.msra.mxu0 0.0
        %1790 = vmatprep.subr.mxu0 0.0
        %1791 = vmatpush1.msra.mxu0 0.0
        %1792 = vmatprep.subr.mxu0 0.0
        %1793 = vmatpush1.msra.mxu0 0.0
        %1794 = vmatprep.subr.mxu0 0.0
        %1795 = vmatpush1.msra.mxu0 0.0
        %1796 = vmatprep.subr.mxu0 0.0
        %1797 = vmatpush1.msra.mxu0 0.0
        %1798 = vmatprep.subr.mxu0 0.0
        %1799 = vmatpush1.msra.mxu0 0.0
        %1800 = vmatprep.subr.mxu0 0.0
        %1801 = vmatpush1.msra.mxu0 0.0
        %1802 = vmatprep.subr.mxu0 0.0
        %1803 = vmatpush1.msra.mxu0 0.0
        %1804 = vmatprep.subr.mxu0 0.0
        %1805 = vmatpush1.msra.mxu0 0.0
        %1806 = vmatprep.subr.mxu0 0.0
        %1807 = vmatpush1.msra.mxu0 0.0
        %1808 = vmatprep.subr.mxu0 0.0
        %1809 = vmatpush1.msra.mxu0 0.0
        %1810 = vmatprep.subr.mxu0 0.0
        %1811 = vmatpush1.msra.mxu0 0.0
        %1812 = vmatprep.subr.mxu0 0.0
        %1813 = vmatpush1.msra.mxu0 0.0
        %1814 = vmatprep.subr.mxu0 0.0
        %1815 = vmatpush1.msra.mxu0 0.0
        %1816 = vmatprep.subr.mxu0 0.0
        %1817 = vmatpush1.msra.mxu0 0.0
        %1818 = vmatprep.subr.mxu0 0.0
        %1819 = vmatpush1.msra.mxu0 0.0
        %1820 = vmatprep.subr.mxu0 0.0
        %1821 = vmatpush1.msra.mxu0 0.0
        %1822 = vmatprep.subr.mxu0 0.0
        %1823 = vmatpush1.msra.mxu0 0.0
        %1824 = vmatprep.subr.mxu0 0.0
        %1825 = vmatpush1.msra.mxu0 0.0
        %1826 = vmatprep.subr.mxu0 0.0
        %1827 = vmatpush1.msra.mxu0 0.0
        %1828 = vmatprep.subr.mxu0 0.0
        %1829 = vmatpush1.msra.mxu0 0.0
        %1830 = vmatprep.subr.mxu0 0.0
        %1831 = vmatpush1.msra.mxu0 0.0
        %1832 = vmatprep.mubr.f32.mxu0 0.0
        %1833 = vmatmul.mubr.f32.gmra.mrb[0].mxu0 %v1766
        %v1834 = vpop.f32.mrb[0].mxu0
        %v1835 = vadd.f32 %v1723, %v1834
        %v1836 = vpop.f32.mrb[0].mxu0
        %v1837 = vadd.f32 %v1727, %v1836
        %1838 = vdwg.mxu0
        %1839 = vmatprep.subr.mxu0 %v1647
        %1840 = vmatpush1.msra.mxu0 %v1646
        %1841 = vmatprep.subr.mxu0 %v1656
        %1842 = vmatpush1.msra.mxu0 %v1655
        %1843 = vmatprep.subr.mxu0 %v1665
        %1844 = vmatpush1.msra.mxu0 %v1664
        %1845 = vmatprep.subr.mxu0 %v1674
        %1846 = vmatpush1.msra.mxu0 %v1673
        %1847 = vmatprep.subr.mxu0 %v1683
        %1848 = vmatpush1.msra.mxu0 %v1682
        %1849 = vmatprep.subr.mxu0 %v1692
        %1850 = vmatpush1.msra.mxu0 %v1691
        %1851 = vmatprep.subr.mxu0 %v1701
        %1852 = vmatpush1.msra.mxu0 %v1700
        %1853 = vmatprep.subr.mxu0 %v1710
        %1854 = vmatpush1.msra.mxu0 %v1709
        %1855 = vmatprep.subr.mxu0 0.0
        %1856 = vmatpush1.msra.mxu0 0.0
        %1857 = vmatprep.subr.mxu0 0.0
        %1858 = vmatpush1.msra.mxu0 0.0
        %1859 = vmatprep.subr.mxu0 0.0
        %1860 = vmatpush1.msra.mxu0 0.0
        %1861 = vmatprep.subr.mxu0 0.0
        %1862 = vmatpush1.msra.mxu0 0.0
        %1863 = vmatprep.subr.mxu0 0.0
        %1864 = vmatpush1.msra.mxu0 0.0
        %1865 = vmatprep.subr.mxu0 0.0
        %1866 = vmatpush1.msra.mxu0 0.0
        %1867 = vmatprep.subr.mxu0 0.0
        %1868 = vmatpush1.msra.mxu0 0.0
        %1869 = vmatprep.subr.mxu0 0.0
        %1870 = vmatpush1.msra.mxu0 0.0
        %1871 = vmatprep.subr.mxu0 0.0
        %1872 = vmatpush1.msra.mxu0 0.0
        %1873 = vmatprep.subr.mxu0 0.0
        %1874 = vmatpush1.msra.mxu0 0.0
        %1875 = vmatprep.subr.mxu0 0.0
        %1876 = vmatpush1.msra.mxu0 0.0
        %1877 = vmatprep.subr.mxu0 0.0
        %1878 = vmatpush1.msra.mxu0 0.0
        %1879 = vmatprep.subr.mxu0 0.0
        %1880 = vmatpush1.msra.mxu0 0.0
        %1881 = vmatprep.subr.mxu0 0.0
        %1882 = vmatpush1.msra.mxu0 0.0
        %1883 = vmatprep.subr.mxu0 0.0
        %1884 = vmatpush1.msra.mxu0 0.0
        %1885 = vmatprep.subr.mxu0 0.0
        %1886 = vmatpush1.msra.mxu0 0.0
        %1887 = vmatprep.subr.mxu0 0.0
        %1888 = vmatpush1.msra.mxu0 0.0
        %1889 = vmatprep.subr.mxu0 0.0
        %1890 = vmatpush1.msra.mxu0 0.0
        %1891 = vmatprep.subr.mxu0 0.0
        %1892 = vmatpush1.msra.mxu0 0.0
        %1893 = vmatprep.subr.mxu0 0.0
        %1894 = vmatpush1.msra.mxu0 0.0
        %1895 = vmatprep.subr.mxu0 0.0
        %1896 = vmatpush1.msra.mxu0 0.0
        %1897 = vmatprep.subr.mxu0 0.0
        %1898 = vmatpush1.msra.mxu0 0.0
        %1899 = vmatprep.subr.mxu0 0.0
        %1900 = vmatpush1.msra.mxu0 0.0
        %1901 = vmatprep.subr.mxu0 0.0
        %1902 = vmatpush1.msra.mxu0 0.0
        %1903 = vmatprep.mubr.f32.mxu0 0.0
        %1904 = vmatmul.mubr.f32.gmra.mrb[0].mxu0 %v1766
        %v1905 = vpop.f32.mrb[0].mxu0
        %v1906 = vadd.f32 %v1731, %v1905
        %v1907 = vpop.f32.mrb[0].mxu0
        %v1908 = vadd.f32 %v1735, %v1907
        %1909 = vdwg.mxu0
        %1910 = vmatprep.subr.mxu0 %v1649
        %1911 = vmatpush1.msra.mxu0 %v1648
        %1912 = vmatprep.subr.mxu0 %v1658
        %1913 = vmatpush1.msra.mxu0 %v1657
        %1914 = vmatprep.subr.mxu0 %v1667
        %1915 = vmatpush1.msra.mxu0 %v1666
        %1916 = vmatprep.subr.mxu0 %v1676
        %1917 = vmatpush1.msra.mxu0 %v1675
        %1918 = vmatprep.subr.mxu0 %v1685
        %1919 = vmatpush1.msra.mxu0 %v1684
        %1920 = vmatprep.subr.mxu0 %v1694
        %1921 = vmatpush1.msra.mxu0 %v1693
        %1922 = vmatprep.subr.mxu0 %v1703
        %1923 = vmatpush1.msra.mxu0 %v1702
        %1924 = vmatprep.subr.mxu0 %v1712
        %1925 = vmatpush1.msra.mxu0 %v1711
        %1926 = vmatprep.subr.mxu0 0.0
        %1927 = vmatpush1.msra.mxu0 0.0
        %1928 = vmatprep.subr.mxu0 0.0
        %1929 = vmatpush1.msra.mxu0 0.0
        %1930 = vmatprep.subr.mxu0 0.0
        %1931 = vmatpush1.msra.mxu0 0.0
        %1932 = vmatprep.subr.mxu0 0.0
        %1933 = vmatpush1.msra.mxu0 0.0
        %1934 = vmatprep.subr.mxu0 0.0
        %1935 = vmatpush1.msra.mxu0 0.0
        %1936 = vmatprep.subr.mxu0 0.0
        %1937 = vmatpush1.msra.mxu0 0.0
        %1938 = vmatprep.subr.mxu0 0.0
        %1939 = vmatpush1.msra.mxu0 0.0
        %1940 = vmatprep.subr.mxu0 0.0
        %1941 = vmatpush1.msra.mxu0 0.0
        %1942 = vmatprep.subr.mxu0 0.0
        %1943 = vmatpush1.msra.mxu0 0.0
        %1944 = vmatprep.subr.mxu0 0.0
        %1945 = vmatpush1.msra.mxu0 0.0
        %1946 = vmatprep.subr.mxu0 0.0
        %1947 = vmatpush1.msra.mxu0 0.0
        %1948 = vmatprep.subr.mxu0 0.0
        %1949 = vmatpush1.msra.mxu0 0.0
        %1950 = vmatprep.subr.mxu0 0.0
        %1951 = vmatpush1.msra.mxu0 0.0
        %1952 = vmatprep.subr.mxu0 0.0
        %1953 = vmatpush1.msra.mxu0 0.0
        %1954 = vmatprep.subr.mxu0 0.0
        %1955 = vmatpush1.msra.mxu0 0.0
        %1956 = vmatprep.subr.mxu0 0.0
        %1957 = vmatpush1.msra.mxu0 0.0
        %1958 = vmatprep.subr.mxu0 0.0
        %1959 = vmatpush1.msra.mxu0 0.0
        %1960 = vmatprep.subr.mxu0 0.0
        %1961 = vmatpush1.msra.mxu0 0.0
        %1962 = vmatprep.subr.mxu0 0.0
        %1963 = vmatpush1.msra.mxu0 0.0
        %1964 = vmatprep.subr.mxu0 0.0
        %1965 = vmatpush1.msra.mxu0 0.0
        %1966 = vmatprep.subr.mxu0 0.0
        %1967 = vmatpush1.msra.mxu0 0.0
        %1968 = vmatprep.subr.mxu0 0.0
        %1969 = vmatpush1.msra.mxu0 0.0
        %1970 = vmatprep.subr.mxu0 0.0
        %1971 = vmatpush1.msra.mxu0 0.0
        %1972 = vmatprep.subr.mxu0 0.0
        %1973 = vmatpush1.msra.mxu0 0.0
        %1974 = vmatprep.mubr.f32.mxu0 0.0
        %1975 = vmatmul.mubr.f32.gmra.mrb[0].mxu0 %v1766
        %v1976 = vpop.f32.mrb[0].mxu0
        %v1977 = vadd.f32 %v1739, %v1976
        %v1978 = vpop.f32.mrb[0].mxu0
        %v1979 = vadd.f32 %v1743, %v1978
        %1980 = vdwg.mxu0
        %1981 = vmatprep.subr.mxu0 %v1651
        %1982 = vmatpush1.msra.mxu0 %v1650
        %1983 = vmatprep.subr.mxu0 %v1660
        %1984 = vmatpush1.msra.mxu0 %v1659
        %1985 = vmatprep.subr.mxu0 %v1669
        %1986 = vmatpush1.msra.mxu0 %v1668
        %1987 = vmatprep.subr.mxu0 %v1678
        %1988 = vmatpush1.msra.mxu0 %v1677
        %1989 = vmatprep.subr.mxu0 %v1687
        %1990 = vmatpush1.msra.mxu0 %v1686
        %1991 = vmatprep.subr.mxu0 %v1696
        %1992 = vmatpush1.msra.mxu0 %v1695
        %1993 = vmatprep.subr.mxu0 %v1705
        %1994 = vmatpush1.msra.mxu0 %v1704
        %1995 = vmatprep.subr.mxu0 %v1714
        %1996 = vmatpush1.msra.mxu0 %v1713
        %1997 = vmatprep.subr.mxu0 0.0
        %1998 = vmatpush1.msra.mxu0 0.0
        %1999 = vmatprep.subr.mxu0 0.0
        %2000 = vmatpush1.msra.mxu0 0.0
        %2001 = vmatprep.subr.mxu0 0.0
        %2002 = vmatpush1.msra.mxu0 0.0
        %2003 = vmatprep.subr.mxu0 0.0
        %2004 = vmatpush1.msra.mxu0 0.0
        %2005 = vmatprep.subr.mxu0 0.0
        %2006 = vmatpush1.msra.mxu0 0.0
        %2007 = vmatprep.subr.mxu0 0.0
        %2008 = vmatpush1.msra.mxu0 0.0
        %2009 = vmatprep.subr.mxu0 0.0
        %2010 = vmatpush1.msra.mxu0 0.0
        %2011 = vmatprep.subr.mxu0 0.0
        %2012 = vmatpush1.msra.mxu0 0.0
        %2013 = vmatprep.subr.mxu0 0.0
        %2014 = vmatpush1.msra.mxu0 0.0
        %2015 = vmatprep.subr.mxu0 0.0
        %2016 = vmatpush1.msra.mxu0 0.0
        %2017 = vmatprep.subr.mxu0 0.0
        %2018 = vmatpush1.msra.mxu0 0.0
        %2019 = vmatprep.subr.mxu0 0.0
        %2020 = vmatpush1.msra.mxu0 0.0
        %2021 = vmatprep.subr.mxu0 0.0
        %2022 = vmatpush1.msra.mxu0 0.0
        %2023 = vmatprep.subr.mxu0 0.0
        %2024 = vmatpush1.msra.mxu0 0.0
        %2025 = vmatprep.subr.mxu0 0.0
        %2026 = vmatpush1.msra.mxu0 0.0
        %2027 = vmatprep.subr.mxu0 0.0
        %2028 = vmatpush1.msra.mxu0 0.0
        %2029 = vmatprep.subr.mxu0 0.0
        %2030 = vmatpush1.msra.mxu0 0.0
        %2031 = vmatprep.subr.mxu0 0.0
        %2032 = vmatpush1.msra.mxu0 0.0
        %2033 = vmatprep.subr.mxu0 0.0
        %2034 = vmatpush1.msra.mxu0 0.0
        %2035 = vmatprep.subr.mxu0 0.0
        %2036 = vmatpush1.msra.mxu0 0.0
        %2037 = vmatprep.subr.mxu0 0.0
        %2038 = vmatpush1.msra.mxu0 0.0
        %2039 = vmatprep.subr.mxu0 0.0
        %2040 = vmatpush1.msra.mxu0 0.0
        %2041 = vmatprep.subr.mxu0 0.0
        %2042 = vmatpush1.msra.mxu0 0.0
        %2043 = vmatprep.subr.mxu0 0.0
        %2044 = vmatpush1.msra.mxu0 0.0
        %2045 = vmatprep.mubr.f32.mxu0 0.0
        %2046 = vmatmul.mubr.f32.gmra.mrb[0].mxu0 %v1766
        %v2047 = vpop.f32.mrb[0].mxu0
        %v2048 = vadd.f32 %v1747, %v2047
        %v2049 = vpop.f32.mrb[0].mxu0
        %v2050 = vadd.f32 %v1751, %v2049
        %2051 = vdwg.mxu0
        %2052 = vmatprep.subr.mxu0 0.0
        %2053 = vmatpush1.msra.mxu0 %v1652
        %2054 = vmatprep.subr.mxu0 0.0
        %2055 = vmatpush1.msra.mxu0 %v1661
        %2056 = vmatprep.subr.mxu0 0.0
        %2057 = vmatpush1.msra.mxu0 %v1670
        %2058 = vmatprep.subr.mxu0 0.0
        %2059 = vmatpush1.msra.mxu0 %v1679
        %2060 = vmatprep.subr.mxu0 0.0
        %2061 = vmatpush1.msra.mxu0 %v1688
        %2062 = vmatprep.subr.mxu0 0.0
        %2063 = vmatpush1.msra.mxu0 %v1697
        %2064 = vmatprep.subr.mxu0 0.0
        %2065 = vmatpush1.msra.mxu0 %v1706
        %2066 = vmatprep.subr.mxu0 0.0
        %2067 = vmatpush1.msra.mxu0 %v1715
        %2068 = vmatprep.subr.mxu0 0.0
        %2069 = vmatpush1.msra.mxu0 0.0
        %2070 = vmatprep.subr.mxu0 0.0
        %2071 = vmatpush1.msra.mxu0 0.0
        %2072 = vmatprep.subr.mxu0 0.0
        %2073 = vmatpush1.msra.mxu0 0.0
        %2074 = vmatprep.subr.mxu0 0.0
        %2075 = vmatpush1.msra.mxu0 0.0
        %2076 = vmatprep.subr.mxu0 0.0
        %2077 = vmatpush1.msra.mxu0 0.0
        %2078 = vmatprep.subr.mxu0 0.0
        %2079 = vmatpush1.msra.mxu0 0.0
        %2080 = vmatprep.subr.mxu0 0.0
        %2081 = vmatpush1.msra.mxu0 0.0
        %2082 = vmatprep.subr.mxu0 0.0
        %2083 = vmatpush1.msra.mxu0 0.0
        %2084 = vmatprep.subr.mxu0 0.0
        %2085 = vmatpush1.msra.mxu0 0.0
        %2086 = vmatprep.subr.mxu0 0.0
        %2087 = vmatpush1.msra.mxu0 0.0
        %2088 = vmatprep.subr.mxu0 0.0
        %2089 = vmatpush1.msra.mxu0 0.0
        %2090 = vmatprep.subr.mxu0 0.0
        %2091 = vmatpush1.msra.mxu0 0.0
        %2092 = vmatprep.subr.mxu0 0.0
        %2093 = vmatpush1.msra.mxu0 0.0
        %2094 = vmatprep.subr.mxu0 0.0
        %2095 = vmatpush1.msra.mxu0 0.0
        %2096 = vmatprep.subr.mxu0 0.0
        %2097 = vmatpush1.msra.mxu0 0.0
        %2098 = vmatprep.subr.mxu0 0.0
        %2099 = vmatpush1.msra.mxu0 0.0
        %2100 = vmatprep.subr.mxu0 0.0
        %2101 = vmatpush1.msra.mxu0 0.0
        %2102 = vmatprep.subr.mxu0 0.0
        %2103 = vmatpush1.msra.mxu0 0.0
        %2104 = vmatprep.subr.mxu0 0.0
        %2105 = vmatpush1.msra.mxu0 0.0
        %2106 = vmatprep.subr.mxu0 0.0
        %2107 = vmatpush1.msra.mxu0 0.0
        %2108 = vmatprep.subr.mxu0 0.0
        %2109 = vmatpush1.msra.mxu0 0.0
        %2110 = vmatprep.subr.mxu0 0.0
        %2111 = vmatpush1.msra.mxu0 0.0
        %2112 = vmatprep.subr.mxu0 0.0
        %2113 = vmatpush1.msra.mxu0 0.0
        %2114 = vmatprep.subr.mxu0 0.0
        %2115 = vmatpush1.msra.mxu0 0.0
        %2116 = vmatprep.mubr.f32.mxu0 0.0
        %2117 = vmatmul.mubr.f32.gmra.mrb[0].mxu0 %v1766
        %v2118 = vpop.f32.mrb[0].mxu0
        %v2119 = vadd.f32 %v1755, %v2118
        %v2120 = vpop.f32.mrb[0].mxu0
        %2121 = vdwg.mxu0
        %v2122 = vmul.f32 %v1835, 0.5
        %v2123 = vmul.f32 %v1837, 0.5
        %v2124 = vmul.f32 %v1906, 0.5
        %v2125 = vmul.f32 %v1908, 0.5
        %v2126 = vmul.f32 %v1977, 0.5
        %v2127 = vmul.f32 %v1979, 0.5
        %v2128 = vmul.f32 %v2048, 0.5
        %v2129 = vmul.f32 %v2050, 0.5
        %v2130 = vmul.f32 %v1835, 0.044715
        %v2131 = vmul.f32 %v1837, 0.044715
        %v2132 = vmul.f32 %v1906, 0.044715
        %v2133 = vmul.f32 %v1908, 0.044715
        %v2134 = vmul.f32 %v1977, 0.044715
        %v2135 = vmul.f32 %v1979, 0.044715
        %v2136 = vmul.f32 %v2048, 0.044715
        %v2137 = vmul.f32 %v2050, 0.044715
        %v2138 = vmul.f32 %v2130, %v1835
        %v2139 = vmul.f32 %v2131, %v1837
        %v2140 = vmul.f32 %v2132, %v1906
        %v2141 = vmul.f32 %v2133, %v1908
        %v2142 = vmul.f32 %v2134, %v1977
        %v2143 = vmul.f32 %v2135, %v1979
        %v2144 = vmul.f32 %v2136, %v2048
        %v2145 = vmul.f32 %v2137, %v2050
        %v2146 = vmul.f32 %v2138, %v1835
        %v2147 = vmul.f32 %v2139, %v1837
        %v2148 = vmul.f32 %v2140, %v1906
        %v2149 = vmul.f32 %v2141, %v1908
        %v2150 = vmul.f32 %v2142, %v1977
        %v2151 = vmul.f32 %v2143, %v1979
        %v2152 = vmul.f32 %v2144, %v2048
        %v2153 = vmul.f32 %v2145, %v2050
        %v2154 = vadd.f32 %v1835, %v2146
        %v2155 = vadd.f32 %v1837, %v2147
        %v2156 = vadd.f32 %v1906, %v2148
        %v2157 = vadd.f32 %v1908, %v2149
        %v2158 = vadd.f32 %v1977, %v2150
        %v2159 = vadd.f32 %v1979, %v2151
        %v2160 = vadd.f32 %v2048, %v2152
        %v2161 = vadd.f32 %v2050, %v2153
        %v2162 = vmul.f32 %v2154, 0.7978846
        %v2163 = vmul.f32 %v2155, 0.7978846
        %v2164 = vmul.f32 %v2156, 0.7978846
        %v2165 = vmul.f32 %v2157, 0.7978846
        %v2166 = vmul.f32 %v2158, 0.7978846
        %v2167 = vmul.f32 %v2159, 0.7978846
        %v2168 = vmul.f32 %v2160, 0.7978846
        %v2169 = vmul.f32 %v2161, 0.7978846
        %v2170 = vtanh.pop %v2162
        %v2171 = vtanh.pop %v2163
        %v2172 = vtanh.pop %v2164
        %v2173 = vtanh.pop %v2165
        %v2174 = vtanh.pop %v2166
        %v2175 = vtanh.pop %v2167
        %v2176 = vtanh.pop %v2168
        %v2177 = vtanh.pop %v2169
        %v2178 = vadd.f32 %v2170, 1.0
        %v2179 = vadd.f32 %v2171, 1.0
        %v2180 = vadd.f32 %v2172, 1.0
        %v2181 = vadd.f32 %v2173, 1.0
        %v2182 = vadd.f32 %v2174, 1.0
        %v2183 = vadd.f32 %v2175, 1.0
        %v2184 = vadd.f32 %v2176, 1.0
        %v2185 = vadd.f32 %v2177, 1.0
        %v2186 = vmul.f32 %v2122, %v2178
        %v2187 = vmul.f32 %v2123, %v2179
        %v2188 = vmul.f32 %v2124, %v2180
        %v2189 = vmul.f32 %v2125, %v2181
        %v2190 = vmul.f32 %v2126, %v2182
        %v2191 = vmul.f32 %v2127, %v2183
        %v2192 = vmul.f32 %v2128, %v2184
        %v2193 = vmul.f32 %v2129, %v2185
        %vm2194 = vcmask 31744
        %v2195 = vsel %vm2194, %v2119, -inf
        %2196 = vmax.xlane.f32.xlu0 %v2195
        %v2197 = vpop.xlane.xlu0 %2196
        %v2198 = vsub.f32 %v2119, %v2197
        %v2199 = vmul.f32 %v2198, 1.442695
        %v2200 = vpow.pop %v2199
        %v2201 = vsel %vm2194, %v2200, 0.0
        %2202 = vadd.xlane.f32.xlu0 %v2201
        %v2203 = vpop.xlane.xlu0 %2202
        %v2204 = vrcp.pop %v2203
        %v2205 = vmul.f32 %v2200, %v2204
        %v2206 = vld [vmem:[%s9] sm:$0xf]
        %v2207 = vld [vmem:[%s8] sm:$0xff]
        %v2208 = vld [vmem:[%s8 + $0x8] sm:$0xff]
        %v2209 = vld [vmem:[%s8 + $0x10] sm:$0xff]
        %v2210 = vld [vmem:[%s8 + $0x18] sm:$0xff]
        %v2211 = vld [vmem:[%s8 + $0x20] sm:$0xff]
        %v2212 = vld [vmem:[%s8 + $0x28] sm:$0xff]
        %v2213 = vld [vmem:[%s8 + $0x30] sm:$0xff]
        %v2214 = vld [vmem:[%s8 + $0x38] sm:$0xff]
        %v2215 = vld [vmem:[%s8 + $0x40] sm:$0xff]
        %v2216 = vld [vmem:[%s8 + $0x48] sm:$0xff]
        %v2217 = vld [vmem:[%s8 + $0x50] sm:$0xff]
        %v2218 = vld [vmem:[%s8 + $0x58] sm:$0xff]
        %v2219 = vld [vmem:[%s8 + $0x60] sm:$0xff]
        %v2220 = vld [vmem:[%s8 + $0x68] sm:$0xff]
        %v2221 = vld [vmem:[%s8 + $0x70] sm:$0xff]
        %v2222 = vld [vmem:[%s8 + $0x78] sm:$0xff]
        %v2223 = vld [vmem:[%s8 + $0x80] sm:$0xff]
        %v2224 = vld [vmem:[%s8 + $0x88] sm:$0xff]
        %v2225 = vld [vmem:[%s8 + $0x90] sm:$0xff]
        %v2226 = vld [vmem:[%s8 + $0x98] sm:$0xff]
        %v2227 = vld [vmem:[%s8 + $0xa0] sm:$0xff]
        %v2228 = vld [vmem:[%s8 + $0xa8] sm:$0xff]
        %v2229 = vld [vmem:[%s8 + $0xb0] sm:$0xff]
        %v2230 = vld [vmem:[%s8 + $0xb8] sm:$0xff]
        %v2231 = vld [vmem:[%s8 + $0xc0] sm:$0xff]
        %v2232 = vld [vmem:[%s8 + $0xc8] sm:$0xff]
        %v2233 = vld [vmem:[%s8 + $0xd0] sm:$0xff]
        %v2234 = vld [vmem:[%s8 + $0xd8] sm:$0xff]
        %v2235 = vld [vmem:[%s8 + $0xe0] sm:$0xff]
        %v2236 = vld [vmem:[%s8 + $0xe8] sm:$0xff]
        %v2237 = vld [vmem:[%s8 + $0xf0] sm:$0xff]
        %v2238 = vld [vmem:[%s8 + $0xf8] sm:$0xff]
        %2239 = vmatprep.subr.mxu0 0.0
        %2240 = vmatpush1.msra.mxu0 %v2207
        %2241 = vmatprep.subr.mxu0 0.0
        %2242 = vmatpush1.msra.mxu0 %v2208
        %2243 = vmatprep.subr.mxu0 0.0
        %2244 = vmatpush1.msra.mxu0 %v2209
        %2245 = vmatprep.subr.mxu0 0.0
        %2246 = vmatpush1.msra.mxu0 %v2210
        %2247 = vmatprep.subr.mxu0 0.0
        %2248 = vmatpush1.msra.mxu0 %v2211
        %2249 = vmatprep.subr.mxu0 0.0
        %2250 = vmatpush1.msra.mxu0 %v2212
        %2251 = vmatprep.subr.mxu0 0.0
        %2252 = vmatpush1.msra.mxu0 %v2213
        %2253 = vmatprep.subr.mxu0 0.0
        %2254 = vmatpush1.msra.mxu0 %v2214
        %2255 = vmatprep.subr.mxu0 0.0
        %2256 = vmatpush1.msra.mxu0 %v2215
        %2257 = vmatprep.subr.mxu0 0.0
        %2258 = vmatpush1.msra.mxu0 %v2216
        %2259 = vmatprep.subr.mxu0 0.0
        %2260 = vmatpush1.msra.mxu0 %v2217
        %2261 = vmatprep.subr.mxu0 0.0
        %2262 = vmatpush1.msra.mxu0 %v2218
        %2263 = vmatprep.subr.mxu0 0.0
        %2264 = vmatpush1.msra.mxu0 %v2219
        %2265 = vmatprep.subr.mxu0 0.0
        %2266 = vmatpush1.msra.mxu0 %v2220
        %2267 = vmatprep.subr.mxu0 0.0
        %2268 = vmatpush1.msra.mxu0 %v2221
        %2269 = vmatprep.subr.mxu0 0.0
        %2270 = vmatpush1.msra.mxu0 %v2222
        %2271 = vmatprep.subr.mxu0 0.0
        %2272 = vmatpush1.msra.mxu0 %v2223
        %2273 = vmatprep.subr.mxu0 0.0
        %2274 = vmatpush1.msra.mxu0 %v2224
        %2275 = vmatprep.subr.mxu0 0.0
        %2276 = vmatpush1.msra.mxu0 %v2225
        %2277 = vmatprep.subr.mxu0 0.0
        %2278 = vmatpush1.msra.mxu0 %v2226
        %2279 = vmatprep.subr.mxu0 0.0
        %2280 = vmatpush1.msra.mxu0 %v2227
        %2281 = vmatprep.subr.mxu0 0.0
        %2282 = vmatpush1.msra.mxu0 %v2228
        %2283 = vmatprep.subr.mxu0 0.0
        %2284 = vmatpush1.msra.mxu0 %v2229
        %2285 = vmatprep.subr.mxu0 0.0
        %2286 = vmatpush1.msra.mxu0 %v2230
        %2287 = vmatprep.subr.mxu0 0.0
        %2288 = vmatpush1.msra.mxu0 %v2231
        %2289 = vmatprep.subr.mxu0 0.0
        %2290 = vmatpush1.msra.mxu0 %v2232
        %2291 = vmatprep.subr.mxu0 0.0
        %2292 = vmatpush1.msra.mxu0 %v2233
        %2293 = vmatprep.subr.mxu0 0.0
        %2294 = vmatpush1.msra.mxu0 %v2234
        %2295 = vmatprep.subr.mxu0 0.0
        %2296 = vmatpush1.msra.mxu0 %v2235
        %2297 = vmatprep.subr.mxu0 0.0
        %2298 = vmatpush1.msra.mxu0 %v2236
        %2299 = vmatprep.subr.mxu0 0.0
        %2300 = vmatpush1.msra.mxu0 %v2237
        %2301 = vmatprep.subr.mxu0 0.0
        %2302 = vmatpush1.msra.mxu0 %v2238
        %2303 = vmatprep.mubr.f32.mxu0 %v2187
        %2304 = vmatmul.mubr.f32.gmra.mrb[0].mxu0 %v2186
        %v2305 = vpop.f32.mrb[0].mxu0
        %v2306 = vadd.f32 0.0, %v2305
        %v2307 = vpop.f32.mrb[0].mxu0
        %2308 = vdwg.mxu0
        %2310 = vset.pattern.permute.xlu0 0
        %2311 = vperm.xlu0 %2310, %v2205
        %v2312 = vpop.permute.xlu0 %2311
        %v2314 = vmul.f32 %v2312, %v2306
        %v2315 = vsel %vm2194, %v2205, 0
        %vm2317 = vcmask 1043456
        %v2319 = vsel %vm2317, %v2206, 0
        %2321 = vmatprep.subr.mxu0 0.0
        %2322 = vmatpush1.msra.mxu0 %v2319
        %2323 = vmatprep.subr.mxu0 0.0
        %2324 = vmatpush1.msra.mxu0 0.0
        %2325 = vmatprep.subr.mxu0 0.0
        %2326 = vmatpush1.msra.mxu0 0.0
        %2327 = vmatprep.subr.mxu0 0.0
        %2328 = vmatpush1.msra.mxu0 0.0
        %2329 = vmatprep.subr.mxu0 0.0
        %2330 = vmatpush1.msra.mxu0 0.0
        %2331 = vmatprep.subr.mxu0 0.0
        %2332 = vmatpush1.msra.mxu0 0.0
        %2333 = vmatprep.subr.mxu0 0.0
        %2334 = vmatpush1.msra.mxu0 0.0
        %2335 = vmatprep.subr.mxu0 0.0
        %2336 = vmatpush1.msra.mxu0 0.0
        %2337 = vmatprep.subr.mxu0 0.0
        %2338 = vmatpush1.msra.mxu0 0.0
        %2339 = vmatprep.subr.mxu0 0.0
        %2340 = vmatpush1.msra.mxu0 0.0
        %2341 = vmatprep.subr.mxu0 0.0
        %2342 = vmatpush1.msra.mxu0 0.0
        %2343 = vmatprep.subr.mxu0 0.0
        %2344 = vmatpush1.msra.mxu0 0.0
        %2345 = vmatprep.subr.mxu0 0.0
        %2346 = vmatpush1.msra.mxu0 0.0
        %2347 = vmatprep.subr.mxu0 0.0
        %2348 = vmatpush1.msra.mxu0 0.0
        %2349 = vmatprep.subr.mxu0 0.0
        %2350 = vmatpush1.msra.mxu0 0.0
        %2351 = vmatprep.subr.mxu0 0.0
        %2352 = vmatpush1.msra.mxu0 0.0
        %2353 = vmatprep.subr.mxu0 0.0
        %2354 = vmatpush1.msra.mxu0 0.0
        %2355 = vmatprep.subr.mxu0 0.0
        %2356 = vmatpush1.msra.mxu0 0.0
        %2357 = vmatprep.subr.mxu0 0.0
        %2358 = vmatpush1.msra.mxu0 0.0
        %2359 = vmatprep.subr.mxu0 0.0
        %2360 = vmatpush1.msra.mxu0 0.0
        %2361 = vmatprep.subr.mxu0 0.0
        %2362 = vmatpush1.msra.mxu0 0.0
        %2363 = vmatprep.subr.mxu0 0.0
        %2364 = vmatpush1.msra.mxu0 0.0
        %2365 = vmatprep.subr.mxu0 0.0
        %2366 = vmatpush1.msra.mxu0 0.0
        %2367 = vmatprep.subr.mxu0 0.0
        %2368 = vmatpush1.msra.mxu0 0.0
        %2369 = vmatprep.subr.mxu0 0.0
        %2370 = vmatpush1.msra.mxu0 0.0
        %2371 = vmatprep.subr.mxu0 0.0
        %2372 = vmatpush1.msra.mxu0 0.0
        %2373 = vmatprep.subr.mxu0 0.0
        %2374 = vmatpush1.msra.mxu0 0.0
        %2375 = vmatprep.subr.mxu0 0.0
        %2376 = vmatpush1.msra.mxu0 0.0
        %2377 = vmatprep.subr.mxu0 0.0
        %2378 = vmatpush1.msra.mxu0 0.0
        %2379 = vmatprep.subr.mxu0 0.0
        %2380 = vmatpush1.msra.mxu0 0.0
        %2381 = vmatprep.subr.mxu0 0.0
        %2382 = vmatpush1.msra.mxu0 0.0
        %2383 = vmatprep.subr.mxu0 0.0
        %2384 = vmatpush1.msra.mxu0 0.0
        %2385 = vmatprep.mubr.f32.mxu0 0.0
        %2386 = vmatmul.mubr.f32.gmra.mrb[0].mxu0 %v2315
        %v2387 = vpop.f32.mrb[0].mxu0
        %v2388 = vadd.f32 %v2314, %v2387
        %v2389 = vpop.f32.mrb[0].mxu0
        %2390 = vdwg.mxu0
        %s2391 = scalar_lea.vmem %s8, 256
        %v2392 = vld [vmem:[%s2391] sm:$0xff]
        %v2393 = vld [vmem:[%s2391 + $0x8] sm:$0xff]
        %v2394 = vld [vmem:[%s2391 + $0x10] sm:$0xff]
        %v2395 = vld [vmem:[%s2391 + $0x18] sm:$0xff]
        %v2396 = vld [vmem:[%s2391 + $0x20] sm:$0xff]
        %v2397 = vld [vmem:[%s2391 + $0x28] sm:$0xff]
        %v2398 = vld [vmem:[%s2391 + $0x30] sm:$0xff]
        %v2399 = vld [vmem:[%s2391 + $0x38] sm:$0xff]
        %v2400 = vld [vmem:[%s2391 + $0x40] sm:$0xff]
        %v2401 = vld [vmem:[%s2391 + $0x48] sm:$0xff]
        %v2402 = vld [vmem:[%s2391 + $0x50] sm:$0xff]
        %v2403 = vld [vmem:[%s2391 + $0x58] sm:$0xff]
        %v2404 = vld [vmem:[%s2391 + $0x60] sm:$0xff]
        %v2405 = vld [vmem:[%s2391 + $0x68] sm:$0xff]
        %v2406 = vld [vmem:[%s2391 + $0x70] sm:$0xff]
        %v2407 = vld [vmem:[%s2391 + $0x78] sm:$0xff]
        %v2408 = vld [vmem:[%s2391 + $0x80] sm:$0xff]
        %v2409 = vld [vmem:[%s2391 + $0x88] sm:$0xff]
        %v2410 = vld [vmem:[%s2391 + $0x90] sm:$0xff]
        %v2411 = vld [vmem:[%s2391 + $0x98] sm:$0xff]
        %v2412 = vld [vmem:[%s2391 + $0xa0] sm:$0xff]
        %v2413 = vld [vmem:[%s2391 + $0xa8] sm:$0xff]
        %v2414 = vld [vmem:[%s2391 + $0xb0] sm:$0xff]
        %v2415 = vld [vmem:[%s2391 + $0xb8] sm:$0xff]
        %v2416 = vld [vmem:[%s2391 + $0xc0] sm:$0xff]
        %v2417 = vld [vmem:[%s2391 + $0xc8] sm:$0xff]
        %v2418 = vld [vmem:[%s2391 + $0xd0] sm:$0xff]
        %v2419 = vld [vmem:[%s2391 + $0xd8] sm:$0xff]
        %v2420 = vld [vmem:[%s2391 + $0xe0] sm:$0xff]
        %v2421 = vld [vmem:[%s2391 + $0xe8] sm:$0xff]
        %v2422 = vld [vmem:[%s2391 + $0xf0] sm:$0xff]
        %v2423 = vld [vmem:[%s2391 + $0xf8] sm:$0xff]
        %2424 = vmatprep.subr.mxu0 0.0
        %2425 = vmatpush1.msra.mxu0 %v2392
        %2426 = vmatprep.subr.mxu0 0.0
        %2427 = vmatpush1.msra.mxu0 %v2393
        %2428 = vmatprep.subr.mxu0 0.0
        %2429 = vmatpush1.msra.mxu0 %v2394
        %2430 = vmatprep.subr.mxu0 0.0
        %2431 = vmatpush1.msra.mxu0 %v2395
        %2432 = vmatprep.subr.mxu0 0.0
        %2433 = vmatpush1.msra.mxu0 %v2396
        %2434 = vmatprep.subr.mxu0 0.0
        %2435 = vmatpush1.msra.mxu0 %v2397
        %2436 = vmatprep.subr.mxu0 0.0
        %2437 = vmatpush1.msra.mxu0 %v2398
        %2438 = vmatprep.subr.mxu0 0.0
        %2439 = vmatpush1.msra.mxu0 %v2399
        %2440 = vmatprep.subr.mxu0 0.0
        %2441 = vmatpush1.msra.mxu0 %v2400
        %2442 = vmatprep.subr.mxu0 0.0
        %2443 = vmatpush1.msra.mxu0 %v2401
        %2444 = vmatprep.subr.mxu0 0.0
        %2445 = vmatpush1.msra.mxu0 %v2402
        %2446 = vmatprep.subr.mxu0 0.0
        %2447 = vmatpush1.msra.mxu0 %v2403
        %2448 = vmatprep.subr.mxu0 0.0
        %2449 = vmatpush1.msra.mxu0 %v2404
        %2450 = vmatprep.subr.mxu0 0.0
        %2451 = vmatpush1.msra.mxu0 %v2405
        %2452 = vmatprep.subr.mxu0 0.0
        %2453 = vmatpush1.msra.mxu0 %v2406
        %2454 = vmatprep.subr.mxu0 0.0
        %2455 = vmatpush1.msra.mxu0 %v2407
        %2456 = vmatprep.subr.mxu0 0.0
        %2457 = vmatpush1.msra.mxu0 %v2408
        %2458 = vmatprep.subr.mxu0 0.0
        %2459 = vmatpush1.msra.mxu0 %v2409
        %2460 = vmatprep.subr.mxu0 0.0
        %2461 = vmatpush1.msra.mxu0 %v2410
        %2462 = vmatprep.subr.mxu0 0.0
        %2463 = vmatpush1.msra.mxu0 %v2411
        %2464 = vmatprep.subr.mxu0 0.0
        %2465 = vmatpush1.msra.mxu0 %v2412
        %2466 = vmatprep.subr.mxu0 0.0
        %2467 = vmatpush1.msra.mxu0 %v2413
        %2468 = vmatprep.subr.mxu0 0.0
        %2469 = vmatpush1.msra.mxu0 %v2414
        %2470 = vmatprep.subr.mxu0 0.0
        %2471 = vmatpush1.msra.mxu0 %v2415
        %2472 = vmatprep.subr.mxu0 0.0
        %2473 = vmatpush1.msra.mxu0 %v2416
        %2474 = vmatprep.subr.mxu0 0.0
        %2475 = vmatpush1.msra.mxu0 %v2417
        %2476 = vmatprep.subr.mxu0 0.0
        %2477 = vmatpush1.msra.mxu0 %v2418
        %2478 = vmatprep.subr.mxu0 0.0
        %2479 = vmatpush1.msra.mxu0 %v2419
        %2480 = vmatprep.subr.mxu0 0.0
        %2481 = vmatpush1.msra.mxu0 %v2420
        %2482 = vmatprep.subr.mxu0 0.0
        %2483 = vmatpush1.msra.mxu0 %v2421
        %2484 = vmatprep.subr.mxu0 0.0
        %2485 = vmatpush1.msra.mxu0 %v2422
        %2486 = vmatprep.subr.mxu0 0.0
        %2487 = vmatpush1.msra.mxu0 %v2423
        %2488 = vmatprep.mubr.f32.mxu0 %v2189
        %2489 = vmatmul.mubr.f32.gmra.mrb[0].mxu0 %v2188
        %v2490 = vpop.f32.mrb[0].mxu0
        %v2491 = vadd.f32 0.0, %v2490
        %v2492 = vpop.f32.mrb[0].mxu0
        %2493 = vdwg.mxu0
        %2494 = vset.pattern.permute.xlu0 1
        %2495 = vperm.xlu0 %2494, %v2205
        %v2496 = vpop.permute.xlu0 %2495
        %v2498 = vmul.f32 %v2496, %v2491
        %v2499 = vadd.f32 %v2388, %v2498
        %s2500 = scalar_lea.vmem %s8, 512
        %v2501 = vld [vmem:[%s2500] sm:$0xff]
        %v2502 = vld [vmem:[%s2500 + $0x8] sm:$0xff]
        %v2503 = vld [vmem:[%s2500 + $0x10] sm:$0xff]
        %v2504 = vld [vmem:[%s2500 + $0x18] sm:$0xff]
        %v2505 = vld [vmem:[%s2500 + $0x20] sm:$0xff]
        %v2506 = vld [vmem:[%s2500 + $0x28] sm:$0xff]
        %v2507 = vld [vmem:[%s2500 + $0x30] sm:$0xff]
        %v2508 = vld [vmem:[%s2500 + $0x38] sm:$0xff]
        %v2509 = vld [vmem:[%s2500 + $0x40] sm:$0xff]
        %v2510 = vld [vmem:[%s2500 + $0x48] sm:$0xff]
        %v2511 = vld [vmem:[%s2500 + $0x50] sm:$0xff]
        %v2512 = vld [vmem:[%s2500 + $0x58] sm:$0xff]
        %v2513 = vld [vmem:[%s2500 + $0x60] sm:$0xff]
        %v2514 = vld [vmem:[%s2500 + $0x68] sm:$0xff]
        %v2515 = vld [vmem:[%s2500 + $0x70] sm:$0xff]
        %v2516 = vld [vmem:[%s2500 + $0x78] sm:$0xff]
        %v2517 = vld [vmem:[%s2500 + $0x80] sm:$0xff]
        %v2518 = vld [vmem:[%s2500 + $0x88] sm:$0xff]
        %v2519 = vld [vmem:[%s2500 + $0x90] sm:$0xff]
        %v2520 = vld [vmem:[%s2500 + $0x98] sm:$0xff]
        %v2521 = vld [vmem:[%s2500 + $0xa0] sm:$0xff]
        %v2522 = vld [vmem:[%s2500 + $0xa8] sm:$0xff]
        %v2523 = vld [vmem:[%s2500 + $0xb0] sm:$0xff]
        %v2524 = vld [vmem:[%s2500 + $0xb8] sm:$0xff]
        %v2525 = vld [vmem:[%s2500 + $0xc0] sm:$0xff]
        %v2526 = vld [vmem:[%s2500 + $0xc8] sm:$0xff]
        %v2527 = vld [vmem:[%s2500 + $0xd0] sm:$0xff]
        %v2528 = vld [vmem:[%s2500 + $0xd8] sm:$0xff]
        %v2529 = vld [vmem:[%s2500 + $0xe0] sm:$0xff]
        %v2530 = vld [vmem:[%s2500 + $0xe8] sm:$0xff]
        %v2531 = vld [vmem:[%s2500 + $0xf0] sm:$0xff]
        %v2532 = vld [vmem:[%s2500 + $0xf8] sm:$0xff]
        %2533 = vmatprep.subr.mxu0 0.0
        %2534 = vmatpush1.msra.mxu0 %v2501
        %2535 = vmatprep.subr.mxu0 0.0
        %2536 = vmatpush1.msra.mxu0 %v2502
        %2537 = vmatprep.subr.mxu0 0.0
        %2538 = vmatpush1.msra.mxu0 %v2503
        %2539 = vmatprep.subr.mxu0 0.0
        %2540 = vmatpush1.msra.mxu0 %v2504
        %2541 = vmatprep.subr.mxu0 0.0
        %2542 = vmatpush1.msra.mxu0 %v2505
        %2543 = vmatprep.subr.mxu0 0.0
        %2544 = vmatpush1.msra.mxu0 %v2506
        %2545 = vmatprep.subr.mxu0 0.0
        %2546 = vmatpush1.msra.mxu0 %v2507
        %2547 = vmatprep.subr.mxu0 0.0
        %2548 = vmatpush1.msra.mxu0 %v2508
        %2549 = vmatprep.subr.mxu0 0.0
        %2550 = vmatpush1.msra.mxu0 %v2509
        %2551 = vmatprep.subr.mxu0 0.0
        %2552 = vmatpush1.msra.mxu0 %v2510
        %2553 = vmatprep.subr.mxu0 0.0
        %2554 = vmatpush1.msra.mxu0 %v2511
        %2555 = vmatprep.subr.mxu0 0.0
        %2556 = vmatpush1.msra.mxu0 %v2512
        %2557 = vmatprep.subr.mxu0 0.0
        %2558 = vmatpush1.msra.mxu0 %v2513
        %2559 = vmatprep.subr.mxu0 0.0
        %2560 = vmatpush1.msra.mxu0 %v2514
        %2561 = vmatprep.subr.mxu0 0.0
        %2562 = vmatpush1.msra.mxu0 %v2515
        %2563 = vmatprep.subr.mxu0 0.0
        %2564 = vmatpush1.msra.mxu0 %v2516
        %2565 = vmatprep.subr.mxu0 0.0
        %2566 = vmatpush1.msra.mxu0 %v2517
        %2567 = vmatprep.subr.mxu0 0.0
        %2568 = vmatpush1.msra.mxu0 %v2518
        %2569 = vmatprep.subr.mxu0 0.0
        %2570 = vmatpush1.msra.mxu0 %v2519
        %2571 = vmatprep.subr.mxu0 0.0
        %2572 = vmatpush1.msra.mxu0 %v2520
        %2573 = vmatprep.subr.mxu0 0.0
        %2574 = vmatpush1.msra.mxu0 %v2521
        %2575 = vmatprep.subr.mxu0 0.0
        %2576 = vmatpush1.msra.mxu0 %v2522
        %2577 = vmatprep.subr.mxu0 0.0
        %2578 = vmatpush1.msra.mxu0 %v2523
        %2579 = vmatprep.subr.mxu0 0.0
        %2580 = vmatpush1.msra.mxu0 %v2524
        %2581 = vmatprep.subr.mxu0 0.0
        %2582 = vmatpush1.msra.mxu0 %v2525
        %2583 = vmatprep.subr.mxu0 0.0
        %2584 = vmatpush1.msra.mxu0 %v2526
        %2585 = vmatprep.subr.mxu0 0.0
        %2586 = vmatpush1.msra.mxu0 %v2527
        %2587 = vmatprep.subr.mxu0 0.0
        %2588 = vmatpush1.msra.mxu0 %v2528
        %2589 = vmatprep.subr.mxu0 0.0
        %2590 = vmatpush1.msra.mxu0 %v2529
        %2591 = vmatprep.subr.mxu0 0.0
        %2592 = vmatpush1.msra.mxu0 %v2530
        %2593 = vmatprep.subr.mxu0 0.0
        %2594 = vmatpush1.msra.mxu0 %v2531
        %2595 = vmatprep.subr.mxu0 0.0
        %2596 = vmatpush1.msra.mxu0 %v2532
        %2597 = vmatprep.mubr.f32.mxu0 %v2191
        %2598 = vmatmul.mubr.f32.gmra.mrb[0].mxu0 %v2190
        %v2599 = vpop.f32.mrb[0].mxu0
        %v2600 = vadd.f32 0.0, %v2599
        %v2601 = vpop.f32.mrb[0].mxu0
        %2602 = vdwg.mxu0
        %2603 = vset.pattern.permute.xlu0 2
        %2604 = vperm.xlu0 %2603, %v2205
        %v2605 = vpop.permute.xlu0 %2604
        %v2607 = vmul.f32 %v2605, %v2600
        %v2608 = vadd.f32 %v2499, %v2607
        %s2609 = scalar_lea.vmem %s8, 768
        %v2610 = vld [vmem:[%s2609] sm:$0xff]
        %v2611 = vld [vmem:[%s2609 + $0x8] sm:$0xff]
        %v2612 = vld [vmem:[%s2609 + $0x10] sm:$0xff]
        %v2613 = vld [vmem:[%s2609 + $0x18] sm:$0xff]
        %v2614 = vld [vmem:[%s2609 + $0x20] sm:$0xff]
        %v2615 = vld [vmem:[%s2609 + $0x28] sm:$0xff]
        %v2616 = vld [vmem:[%s2609 + $0x30] sm:$0xff]
        %v2617 = vld [vmem:[%s2609 + $0x38] sm:$0xff]
        %v2618 = vld [vmem:[%s2609 + $0x40] sm:$0xff]
        %v2619 = vld [vmem:[%s2609 + $0x48] sm:$0xff]
        %v2620 = vld [vmem:[%s2609 + $0x50] sm:$0xff]
        %v2621 = vld [vmem:[%s2609 + $0x58] sm:$0xff]
        %v2622 = vld [vmem:[%s2609 + $0x60] sm:$0xff]
        %v2623 = vld [vmem:[%s2609 + $0x68] sm:$0xff]
        %v2624 = vld [vmem:[%s2609 + $0x70] sm:$0xff]
        %v2625 = vld [vmem:[%s2609 + $0x78] sm:$0xff]
        %v2626 = vld [vmem:[%s2609 + $0x80] sm:$0xff]
        %v2627 = vld [vmem:[%s2609 + $0x88] sm:$0xff]
        %v2628 = vld [vmem:[%s2609 + $0x90] sm:$0xff]
        %v2629 = vld [vmem:[%s2609 + $0x98] sm:$0xff]
        %v2630 = vld [vmem:[%s2609 + $0xa0] sm:$0xff]
        %v2631 = vld [vmem:[%s2609 + $0xa8] sm:$0xff]
        %v2632 = vld [vmem:[%s2609 + $0xb0] sm:$0xff]
        %v2633 = vld [vmem:[%s2609 + $0xb8] sm:$0xff]
        %v2634 = vld [vmem:[%s2609 + $0xc0] sm:$0xff]
        %v2635 = vld [vmem:[%s2609 + $0xc8] sm:$0xff]
        %v2636 = vld [vmem:[%s2609 + $0xd0] sm:$0xff]
        %v2637 = vld [vmem:[%s2609 + $0xd8] sm:$0xff]
        %v2638 = vld [vmem:[%s2609 + $0xe0] sm:$0xff]
        %v2639 = vld [vmem:[%s2609 + $0xe8] sm:$0xff]
        %v2640 = vld [vmem:[%s2609 + $0xf0] sm:$0xff]
        %v2641 = vld [vmem:[%s2609 + $0xf8] sm:$0xff]
        %2642 = vmatprep.subr.mxu0 0.0
        %2643 = vmatpush1.msra.mxu0 %v2610
        %2644 = vmatprep.subr.mxu0 0.0
        %2645 = vmatpush1.msra.mxu0 %v2611
        %2646 = vmatprep.subr.mxu0 0.0
        %2647 = vmatpush1.msra.mxu0 %v2612
        %2648 = vmatprep.subr.mxu0 0.0
        %2649 = vmatpush1.msra.mxu0 %v2613
        %2650 = vmatprep.subr.mxu0 0.0
        %2651 = vmatpush1.msra.mxu0 %v2614
        %2652 = vmatprep.subr.mxu0 0.0
        %2653 = vmatpush1.msra.mxu0 %v2615
        %2654 = vmatprep.subr.mxu0 0.0
        %2655 = vmatpush1.msra.mxu0 %v2616
        %2656 = vmatprep.subr.mxu0 0.0
        %2657 = vmatpush1.msra.mxu0 %v2617
        %2658 = vmatprep.subr.mxu0 0.0
        %2659 = vmatpush1.msra.mxu0 %v2618
        %2660 = vmatprep.subr.mxu0 0.0
        %2661 = vmatpush1.msra.mxu0 %v2619
        %2662 = vmatprep.subr.mxu0 0.0
        %2663 = vmatpush1.msra.mxu0 %v2620
        %2664 = vmatprep.subr.mxu0 0.0
        %2665 = vmatpush1.msra.mxu0 %v2621
        %2666 = vmatprep.subr.mxu0 0.0
        %2667 = vmatpush1.msra.mxu0 %v2622
        %2668 = vmatprep.subr.mxu0 0.0
        %2669 = vmatpush1.msra.mxu0 %v2623
        %2670 = vmatprep.subr.mxu0 0.0
        %2671 = vmatpush1.msra.mxu0 %v2624
        %2672 = vmatprep.subr.mxu0 0.0
        %2673 = vmatpush1.msra.mxu0 %v2625
        %2674 = vmatprep.subr.mxu0 0.0
        %2675 = vmatpush1.msra.mxu0 %v2626
        %2676 = vmatprep.subr.mxu0 0.0
        %2677 = vmatpush1.msra.mxu0 %v2627
        %2678 = vmatprep.subr.mxu0 0.0
        %2679 = vmatpush1.msra.mxu0 %v2628
        %2680 = vmatprep.subr.mxu0 0.0
        %2681 = vmatpush1.msra.mxu0 %v2629
        %2682 = vmatprep.subr.mxu0 0.0
        %2683 = vmatpush1.msra.mxu0 %v2630
        %2684 = vmatprep.subr.mxu0 0.0
        %2685 = vmatpush1.msra.mxu0 %v2631
        %2686 = vmatprep.subr.mxu0 0.0
        %2687 = vmatpush1.msra.mxu0 %v2632
        %2688 = vmatprep.subr.mxu0 0.0
        %2689 = vmatpush1.msra.mxu0 %v2633
        %2690 = vmatprep.subr.mxu0 0.0
        %2691 = vmatpush1.msra.mxu0 %v2634
        %2692 = vmatprep.subr.mxu0 0.0
        %2693 = vmatpush1.msra.mxu0 %v2635
        %2694 = vmatprep.subr.mxu0 0.0
        %2695 = vmatpush1.msra.mxu0 %v2636
        %2696 = vmatprep.subr.mxu0 0.0
        %2697 = vmatpush1.msra.mxu0 %v2637
        %2698 = vmatprep.subr.mxu0 0.0
        %2699 = vmatpush1.msra.mxu0 %v2638
        %2700 = vmatprep.subr.mxu0 0.0
        %2701 = vmatpush1.msra.mxu0 %v2639
        %2702 = vmatprep.subr.mxu0 0.0
        %2703 = vmatpush1.msra.mxu0 %v2640
        %2704 = vmatprep.subr.mxu0 0.0
        %2705 = vmatpush1.msra.mxu0 %v2641
        %2706 = vmatprep.mubr.f32.mxu0 %v2193
        %2707 = vmatmul.mubr.f32.gmra.mrb[0].mxu0 %v2192
        %v2708 = vpop.f32.mrb[0].mxu0
        %v2709 = vadd.f32 0.0, %v2708
        %v2710 = vpop.f32.mrb[0].mxu0
        %2711 = vdwg.mxu0
        %2712 = vset.pattern.permute.xlu0 3
        %2713 = vperm.xlu0 %2712, %v2205
        %v2714 = vpop.permute.xlu0 %2713
        %v2716 = vmul.f32 %v2714, %v2709
        %v2717 = vadd.f32 %v2608, %v2716
        %v2718 = vadd.f32 %v2717, %v1643
        %v2719 = vsel %vm456, %v2718, 0.0
        %2720 = vadd.xlane.f32.xlu0 %v2719
        %v2721 = vpop.xlane.xlu0 %2720
        %v2722 = vmul.f32 %v2721, %v1623
        %v2723 = vsub.f32 %v2718, %v2722
        %v2724 = vmul.f32 %v2723, %v2723
        %v2725 = vsel %vm456, %v2724, 0.0
        %2726 = vadd.xlane.f32.xlu0 %v2725
        %v2727 = vpop.xlane.xlu0 %2726
        %v2728 = vmul.f32 %v2727, %v1623
        %v2729 = vadd.f32 %v2728, 1e-05
        %v2730 = vrsqrt.pop %v2729
        %v2731 = vmul.f32 %v2723, %v2730
        %v2732 = vlaneseq
        %v2733 = vshrl.u32 %v2732, 7
        %v2734 = vsub.s32 4, %v2733
        %v2735 = vrot.slane %v443, %v2734
        %v2736 = vmul.f32 %v2731, %v2735
        %v2737 = vlaneseq
        %v2738 = vshrl.u32 %v2737, 7
        %v2739 = vsub.s32 5, %v2738
        %v2740 = vrot.slane %v443, %v2739
        %v2741 = vadd.f32 %v2736, %v2740
        %2742 = vst.msk [vmem:[%s420] sm:$0xff] %vm456, %v2741
        %2743 = vst.msk [vmem:[%s439] sm:$0xff] %vm2194, %v2205
        %s2744 = sand.u32 %s276, 1
        %s2745 = scalar_lea.sflag [#allocation3], %s2744
        %s2746 = sand.u32 %s276, 1
        %s2747 = smul.addr %s2746, 8
        %s2748 = scalar_lea.vmem [#allocation2], %s2747
        %p2749 = scmp.lt.s32.totalorder %s27, 1
        %s2750 = scalar_select %p2749, %s27, 1
        %s2751 = smul.addr %s2750, 8
        %s2752 = scalar_lea.vmem %s12, %s2751
        // Predicated region
        $region65: #{cross_attention_block.1} parent=63 // pred_check
          %p2753 = pneg %p286
        $region66: #{cross_attention_block.1} parent=63 // pred_check_branch
          %2755 = sbr.rel (%p2753) target = $region68
        $region67: #{cross_attention_block.1} parent=63 // pred_region
          %s2757 = ssub.s32 128, 128
          %2758 = vsyncadd %s2745, %s2757
          %s2759 = smul.addr %s27, 128
          %s2760 = scalar_lea.hbm %s11, %s2759
          %s2762 = sshll.u32 %s2748, 4
          %s2763 = int_to_ptr.vmem [resolvable:$true] %s2762
          %2765 = dma.vmem_to_hbm [thread:$0]  %s2763, 128, %s2760, %s2745
        $region68: #{cross_attention_block.1} parent=63 // pred_fallthru
          _
        // Predicated region
        $region69: #{cross_attention_block.1} parent=63 // pred_check
          %p2766 = pneg %p312
        $region70: #{cross_attention_block.1} parent=63 // pred_check_branch
          %2768 = sbr.rel (%p2766) target = $region72
        $region71: #{cross_attention_block.1} parent=63 // pred_region
          _
        $region72: #{cross_attention_block.1} parent=63 // pred_fallthru
          _
      $region64: #{cross_attention_block.1} parent=5 // pred_fallthru
        _
      %p2769 = scmp.le.s32.totalorder 2, %s22
      // Predicated region
      $region73: #{cross_attention_block.1} parent=5 // pred_check
        %p2770 = pneg %p2769
      $region74: #{cross_attention_block.1} parent=5 // pred_check_branch
        %2772 = sbr.rel (%p2770) target = $region76
      $region75: #{cross_attention_block.1} parent=5 // pred_region
        %s2773 = ssub.s32 %s22, 2
        // Predicated region
        $region77: #{cross_attention_block.1} parent=75 // pred_check
          %p2774 = pneg %p292
        $region78: #{cross_attention_block.1} parent=75 // pred_check_branch
          %2776 = sbr.rel (%p2774) target = $region80
        $region79: #{cross_attention_block.1} parent=75 // pred_region
          %s2777 = sand.u32 %s277, 1
          %s2778 = scalar_lea.sflag [#allocation3], %s2777
          %s2779 = sand.u32 %s277, 1
          %s2780 = smul.addr %s2779, 8
          %s2781 = scalar_lea.vmem [#allocation2], %s2780
          %2782 = dma.done %s2778, 128
        $region80: #{cross_attention_block.1} parent=75 // pred_fallthru
          _
        // Predicated region
        $region81: #{cross_attention_block.1} parent=75 // pred_check
          %p2783 = pneg %p318
        $region82: #{cross_attention_block.1} parent=75 // pred_check_branch
          %2785 = sbr.rel (%p2783) target = $region84
        $region83: #{cross_attention_block.1} parent=75 // pred_region
          %p2786 = scmp.lt.s32.totalorder %s28, 1
          %s2787 = scalar_select %p2786, %s28, 1
          %s2788 = smul.addr %s2787, 8
          %s2789 = scalar_lea.vmem %s12, %s2788
        $region84: #{cross_attention_block.1} parent=75 // pred_fallthru
          _
      $region76: #{cross_attention_block.1} parent=5 // pred_fallthru
        _
    $region6: #{cross_attention_block.1} parent=1 // loop_footer
      %s26 = sadd.s32 1, %s22
    $region7: #{cross_attention_block.1} parent=1 // loop_footer_branch
      %21 = sbr.rel target = $region3
    $region8: #{cross_attention_block.1} parent=1 // loop_exit
      _
    %2790 = vsyncpa [#allocation3], 1
    %s2791 = scalar_lea.sflag [#allocation3], 1
    %2792 = vsyncpa %s2791, 1

</llo_original>
